<compile_context>
chip_gen: v7x
topology: tpu7x:2x2x1
jax: 0.10.0
libtpu: 0.0.40
codegen_flags: <defaults>
</compile_context>

<pallas_src>
import math

import jax
import jax.numpy as jnp
from jax.experimental import pallas as pl
from jax.experimental.pallas import tpu as pltpu

LATENT_DIM = 512
NUM_LAYERS = 4
LR_MUL = 0.01
NEG_SLOPE = 0.2
ACT_SCALE = math.sqrt(2.0)
EQ_SCALE = (1.0 / math.sqrt(LATENT_DIM)) * LR_MUL   # EqualLinear runtime weight scale


def _mapper_kernel(x_ref, w_ref, b_ref, o_ref):
    """Single invocation: PixelNorm + 4 unrolled EqualLinear/fused_lrelu layers.

    x_ref: (B_pad, 512) f32        -- raw latents (zero-padded rows are harmless)
    w_ref: (4, 512, 512) bf16      -- pre-transposed weights, EQ_SCALE folded in,
                                      sqrt(2) of the previous layer folded into
                                      layers 1..3
    b_ref: (4, 1, 512) f32         -- biases, LR_MUL folded in
    o_ref: (B_pad, 512) f32
    """
    x = x_ref[...]
    # PixelNorm over the feature axis (PyTorch dim=1 for 2-D input).
    h = x * jax.lax.rsqrt(jnp.mean(x * x, axis=-1, keepdims=True) + 1e-8)

    for l in range(NUM_LAYERS):                      # static unroll, 4 layers
        y = jnp.dot(h.astype(w_ref.dtype), w_ref[l],
                    preferred_element_type=jnp.float32) + b_ref[l]
        h = jnp.maximum(y, NEG_SLOPE * y)            # leaky_relu(., 0.2)

    # Last layer's sqrt(2) scale (earlier ones were folded into the weights).
    o_ref[...] = h * ACT_SCALE


def prepare_params(weights, biases, weight_dtype=jnp.bfloat16):
    """One-time parameter prep: transpose, fold scales, stack, downcast.

    weights: list of 4 (out, in) f32 arrays (PyTorch EqualLinear layout).
    biases:  list of 4 (out,) f32 arrays.
    Returns (w_stacked (4, in, out) bf16, b_stacked (4, 1, out) f32).
    """
    ws = []
    for l, w in enumerate(weights):
        w_t = jnp.transpose(w).astype(jnp.float32) * EQ_SCALE
        if l > 0:
            # fold the previous layer's post-activation sqrt(2) into this weight
            w_t = w_t * ACT_SCALE
        ws.append(w_t.astype(weight_dtype))
    w_stacked = jnp.stack(ws)
    b_stacked = (jnp.stack([b.astype(jnp.float32) for b in biases]) * LR_MUL)
    b_stacked = b_stacked.reshape(NUM_LAYERS, 1, -1)
    return w_stacked, b_stacked


def single_mapper_forward(x, w_stacked, b_stacked):
    """x: (B, 512) f32. w_stacked: (L, 512, 512) bf16. b_stacked: (L, 1, 512) f32."""
    B, D = x.shape
    L = w_stacked.shape[0]
    assert D == LATENT_DIM and w_stacked.shape == (L, D, D)
    assert b_stacked.shape == (L, 1, D)

    # Pad batch to the f32 sublane multiple so stores are unmasked.
    B_pad = max(8, ((B + 7) // 8) * 8)
    x_pad = x if B_pad == B else jnp.pad(x, ((0, B_pad - B), (0, 0)))

    out = pl.pallas_call(
        _mapper_kernel,
        out_shape=jax.ShapeDtypeStruct((B_pad, D), jnp.float32),
        in_specs=[
            pl.BlockSpec(memory_space=pltpu.MemorySpace.VMEM),   # x (whole array)
            pl.BlockSpec(memory_space=pltpu.MemorySpace.VMEM),   # all 4 weights
            pl.BlockSpec(memory_space=pltpu.MemorySpace.VMEM),   # all 4 biases
        ],
        out_specs=pl.BlockSpec(memory_space=pltpu.MemorySpace.VMEM),
    )(x_pad, w_stacked, b_stacked)

    return out[:B]


# ----------------------------- references ---------------------------------

def single_mapper_reference_f32(x, weights, biases):
    """Pure-f32 reference matching the PyTorch module exactly."""
    h = x * jax.lax.rsqrt(jnp.mean(x * x, axis=-1, keepdims=True) + 1e-8)
    for w, b in zip(weights, biases):
        y = h @ (w * EQ_SCALE).T + b * LR_MUL
        h = jnp.where(y >= 0.0, y, NEG_SLOPE * y) * ACT_SCALE
    return h


def single_mapper_reference_mixed(x, w_stacked, b_stacked):
    """Reference mirroring the kernel's bf16-weight / f32-accum precision & folding."""
    h = x * jax.lax.rsqrt(jnp.mean(x * x, axis=-1, keepdims=True) + 1e-8)
    for l in range(w_stacked.shape[0]):
        y = jnp.dot(h.astype(w_stacked.dtype), w_stacked[l],
                    preferred_element_type=jnp.float32) + b_stacked[l, 0]
        h = jnp.maximum(y, NEG_SLOPE * y)
    return h * ACT_SCALE


if __name__ == "__main__":
    key = jax.random.PRNGKey(0)
    keys = jax.random.split(key, 1 + 2 * NUM_LAYERS)
    kx, kws, kbs = keys[0], keys[1:1 + NUM_LAYERS], keys[1 + NUM_LAYERS:]

    B = 4
    x = jax.random.normal(kx, (B, LATENT_DIM), dtype=jnp.float32)

    # EqualLinear init: weight = randn(out, in) / lr_mul.  Module inits bias to 0,
    # but we use small non-zero biases here so the bias path is actually exercised.
    weights = [jax.random.normal(k, (LATENT_DIM, LATENT_DIM), dtype=jnp.float32) / LR_MUL
               for k in kws]
    biases = [0.5 * jax.random.normal(k, (LATENT_DIM,), dtype=jnp.float32)
              for k in kbs]

    # One-time prep (fold scales, transpose, stack, bf16).
    w_stacked, b_stacked = prepare_params(weights, biases)

    out = jax.block_until_ready(single_mapper_forward(x, w_stacked, b_stacked))
    assert out.shape == (B, LATENT_DIM)

    ref_mixed = single_mapper_reference_mixed(x, w_stacked, b_stacked)
    ref_f32 = single_mapper_reference_f32(x, weights, biases)

    # Tight check vs a reference at the kernel's own (bf16-weight) precision.
    assert jnp.allclose(out, ref_mixed, rtol=1e-2, atol=1e-2), \
        "mismatch vs bf16-precision reference"
    # Looser sanity check vs the full-f32 PyTorch-equivalent reference
    # (bf16 weight storage introduces ~0.3-1% relative error).
    assert jnp.allclose(out, ref_f32, rtol=5e-2, atol=5e-2), \
        "mismatch vs f32 reference beyond bf16 tolerance"

    print("KERNEL_OK")
</pallas_src>

<mosaic_0001>
module attributes {stable_mosaic.version = 11 : i64} {
  func.func @_mapper_kernel(%arg0: memref<8x512xf32, #tpu.memory_space<vmem>>, %arg1: memref<4x512x512xbf16, #tpu.memory_space<vmem>>, %arg2: memref<4x1x512xf32, #tpu.memory_space<vmem>>, %arg3: memref<8x512xf32, #tpu.memory_space<vmem>>) attributes {dimension_semantics = [], scalar_prefetch = 0 : i64, scratch_operands = 0 : i64, tpu.core_type = #tpu.core_type<tc>} {
    %c0 = arith.constant 0 : index
    %c0_0 = arith.constant 0 : index
    %0 = vector.load %arg0[%c0, %c0_0] : memref<8x512xf32, #tpu.memory_space<vmem>>, vector<8x512xf32>
    %1 = arith.mulf %0, %0 : vector<8x512xf32>
    %cst = arith.constant dense<0.000000e+00> : vector<8xf32>
    %2 = vector.multi_reduction <add>, %1, %cst [1] : vector<8x512xf32> to vector<8xf32>
    %3 = vector.shape_cast %2 : vector<8xf32> to vector<8x1xf32>
    %cst_1 = arith.constant 5.120000e+02 : f32
    %4 = vector.broadcast %cst_1 : f32 to vector<8x1xf32>
    %5 = arith.divf %3, %4 : vector<8x1xf32>
    %cst_2 = arith.constant 9.99999993E-9 : f32
    %6 = vector.broadcast %cst_2 : f32 to vector<8x1xf32>
    %7 = arith.addf %5, %6 : vector<8x1xf32>
    %8 = math.rsqrt %7 : vector<8x1xf32>
    %9 = vector.broadcast %8 : vector<8x1xf32> to vector<8x512xf32>
    %10 = arith.mulf %0, %9 : vector<8x512xf32>
    %11 = arith.truncf %10 : vector<8x512xf32> to vector<8x512xbf16>
    %c0_3 = arith.constant 0 : index
    %c0_4 = arith.constant 0 : index
    %c0_5 = arith.constant 0 : index
    %12 = vector.load %arg1[%c0_3, %c0_4, %c0_5] : memref<4x512x512xbf16, #tpu.memory_space<vmem>>, vector<1x512x512xbf16>
    %13 = vector.shape_cast %12 : vector<1x512x512xbf16> to vector<512x512xbf16>
    %cst_6 = arith.constant dense<0.000000e+00> : vector<8x512xf32>
    %14 = tpu.matmul %11, %13, %cst_6 {dimension_numbers = #tpu.dot_dimension_numbers<[1], [0], [0], [1], [0, 0, 1, 1], [], []>} : vector<8x512xbf16>, vector<512x512xbf16>, vector<8x512xf32> -> vector<8x512xf32>
    %c0_7 = arith.constant 0 : index
    %c0_8 = arith.constant 0 : index
    %c0_9 = arith.constant 0 : index
    %15 = vector.load %arg2[%c0_7, %c0_8, %c0_9] : memref<4x1x512xf32, #tpu.memory_space<vmem>>, vector<1x1x512xf32>
    %16 = vector.shape_cast %15 : vector<1x1x512xf32> to vector<1x512xf32>
    %17 = vector.broadcast %16 : vector<1x512xf32> to vector<8x512xf32>
    %18 = arith.addf %14, %17 : vector<8x512xf32>
    %cst_10 = arith.constant 2.000000e-01 : f32
    %19 = vector.broadcast %cst_10 : f32 to vector<8x512xf32>
    %20 = arith.mulf %19, %18 : vector<8x512xf32>
    %21 = arith.maximumf %18, %20 : vector<8x512xf32>
    %22 = arith.truncf %21 : vector<8x512xf32> to vector<8x512xbf16>
    %c1 = arith.constant 1 : index
    %c0_11 = arith.constant 0 : index
    %c0_12 = arith.constant 0 : index
    %23 = vector.load %arg1[%c1, %c0_11, %c0_12] : memref<4x512x512xbf16, #tpu.memory_space<vmem>>, vector<1x512x512xbf16>
    %24 = vector.shape_cast %23 : vector<1x512x512xbf16> to vector<512x512xbf16>
    %cst_13 = arith.constant dense<0.000000e+00> : vector<8x512xf32>
    %25 = tpu.matmul %22, %24, %cst_13 {dimension_numbers = #tpu.dot_dimension_numbers<[1], [0], [0], [1], [0, 0, 1, 1], [], []>} : vector<8x512xbf16>, vector<512x512xbf16>, vector<8x512xf32> -> vector<8x512xf32>
    %c1_14 = arith.constant 1 : index
    %c0_15 = arith.constant 0 : index
    %c0_16 = arith.constant 0 : index
    %26 = vector.load %arg2[%c1_14, %c0_15, %c0_16] : memref<4x1x512xf32, #tpu.memory_space<vmem>>, vector<1x1x512xf32>
    %27 = vector.shape_cast %26 : vector<1x1x512xf32> to vector<1x512xf32>
    %28 = vector.broadcast %27 : vector<1x512xf32> to vector<8x512xf32>
    %29 = arith.addf %25, %28 : vector<8x512xf32>
    %cst_17 = arith.constant 2.000000e-01 : f32
    %30 = vector.broadcast %cst_17 : f32 to vector<8x512xf32>
    %31 = arith.mulf %30, %29 : vector<8x512xf32>
    %32 = arith.maximumf %29, %31 : vector<8x512xf32>
    %33 = arith.truncf %32 : vector<8x512xf32> to vector<8x512xbf16>
    %c2 = arith.constant 2 : index
    %c0_18 = arith.constant 0 : index
    %c0_19 = arith.constant 0 : index
    %34 = vector.load %arg1[%c2, %c0_18, %c0_19] : memref<4x512x512xbf16, #tpu.memory_space<vmem>>, vector<1x512x512xbf16>
    %35 = vector.shape_cast %34 : vector<1x512x512xbf16> to vector<512x512xbf16>
    %cst_20 = arith.constant dense<0.000000e+00> : vector<8x512xf32>
    %36 = tpu.matmul %33, %35, %cst_20 {dimension_numbers = #tpu.dot_dimension_numbers<[1], [0], [0], [1], [0, 0, 1, 1], [], []>} : vector<8x512xbf16>, vector<512x512xbf16>, vector<8x512xf32> -> vector<8x512xf32>
    %c2_21 = arith.constant 2 : index
    %c0_22 = arith.constant 0 : index
    %c0_23 = arith.constant 0 : index
    %37 = vector.load %arg2[%c2_21, %c0_22, %c0_23] : memref<4x1x512xf32, #tpu.memory_space<vmem>>, vector<1x1x512xf32>
    %38 = vector.shape_cast %37 : vector<1x1x512xf32> to vector<1x512xf32>
    %39 = vector.broadcast %38 : vector<1x512xf32> to vector<8x512xf32>
    %40 = arith.addf %36, %39 : vector<8x512xf32>
    %cst_24 = arith.constant 2.000000e-01 : f32
    %41 = vector.broadcast %cst_24 : f32 to vector<8x512xf32>
    %42 = arith.mulf %41, %40 : vector<8x512xf32>
    %43 = arith.maximumf %40, %42 : vector<8x512xf32>
    %44 = arith.truncf %43 : vector<8x512xf32> to vector<8x512xbf16>
    %c3 = arith.constant 3 : index
    %c0_25 = arith.constant 0 : index
    %c0_26 = arith.constant 0 : index
    %45 = vector.load %arg1[%c3, %c0_25, %c0_26] : memref<4x512x512xbf16, #tpu.memory_space<vmem>>, vector<1x512x512xbf16>
    %46 = vector.shape_cast %45 : vector<1x512x512xbf16> to vector<512x512xbf16>
    %cst_27 = arith.constant dense<0.000000e+00> : vector<8x512xf32>
    %47 = tpu.matmul %44, %46, %cst_27 {dimension_numbers = #tpu.dot_dimension_numbers<[1], [0], [0], [1], [0, 0, 1, 1], [], []>} : vector<8x512xbf16>, vector<512x512xbf16>, vector<8x512xf32> -> vector<8x512xf32>
    %c3_28 = arith.constant 3 : index
    %c0_29 = arith.constant 0 : index
    %c0_30 = arith.constant 0 : index
    %48 = vector.load %arg2[%c3_28, %c0_29, %c0_30] : memref<4x1x512xf32, #tpu.memory_space<vmem>>, vector<1x1x512xf32>
    %49 = vector.shape_cast %48 : vector<1x1x512xf32> to vector<1x512xf32>
    %50 = vector.broadcast %49 : vector<1x512xf32> to vector<8x512xf32>
    %51 = arith.addf %47, %50 : vector<8x512xf32>
    %cst_31 = arith.constant 2.000000e-01 : f32
    %52 = vector.broadcast %cst_31 : f32 to vector<8x512xf32>
    %53 = arith.mulf %52, %51 : vector<8x512xf32>
    %54 = arith.maximumf %51, %53 : vector<8x512xf32>
    %cst_32 = arith.constant 1.41421354 : f32
    %55 = vector.broadcast %cst_32 : f32 to vector<8x512xf32>
    %56 = arith.mulf %54, %55 : vector<8x512xf32>
    %c0_33 = arith.constant 0 : index
    %c0_34 = arith.constant 0 : index
    %57 = vector.load %arg3[%c0_33, %c0_34] : memref<8x512xf32, #tpu.memory_space<vmem>>, vector<8x512xf32>
    tpu.vector_store %arg3[%c0_33, %c0_34], %56 {strides = array<i32>} : memref<8x512xf32, #tpu.memory_space<vmem>>, vector<8x512xf32>,
    return
  }
}

</mosaic_0001>

<llo_original>
// kernel: tpu_custom_call.1
$region0: #{tpu_custom_call.1}
  #allocation0 [shape = 'u32[]', space=smem, size = 0x4, offset = 0x4, fixed_abs, tag = 'smem constant byte address 0x4 - core index']
  #allocation1 [shape = 'u32[144,128]{1,0:T(1,128)}', space=vmem, size = 0x12000, scoped, tag = 'internal scratch']
  %s0 = inlined_call_operand.hbm [shape: f32[8,512], index: 0, kind: input, shape index: {}]
  %s1 = inlined_call_operand.hbm [shape: bf16[4,512,512], index: 1, kind: input, shape index: {}]
  %s2 = inlined_call_operand.hbm [shape: f32[4,1,512], index: 2, kind: input, shape index: {}]
  %s3 = inlined_call_operand.hbm [shape: f32[8,512], index: 3, kind: output, shape index: {}]
  %s4 = sld [smem:[#allocation0]]
  $region34: #{tpu_custom_call.1} parent=0
    _
  %s6 = ssub.s32 1, %s4
  %s7 = scalar_select 0, %s6, %s4
  $region1: #{tpu_custom_call.1} parent=0
    #allocation2 [shape = 'u8[16384]{0}', space=vmem, size = 0x4000, scoped, tag = 'input window, operand 0, single buffered']
    #allocation3 [shape = 's32[1]{0}', space=sflag, size = 0x4, scoped, tag = 'scoped memory for tpu_custom_call.1']
    #allocation4 [shape = 's32[1]{0}', space=sflag, size = 0x4, scoped, tag = 'scoped memory for tpu_custom_call.1']
    #allocation5 [shape = 'u8[2097152]{0}', space=vmem, size = 0x200000, scoped, tag = 'input window, operand 1, single buffered']
    #allocation6 [shape = 's32[1]{0}', space=sflag, size = 0x4, scoped, tag = 'scoped memory for tpu_custom_call.1']
    #allocation7 [shape = 'u8[8192]{0}', space=vmem, size = 0x2000, scoped, tag = 'input window, operand 2, single buffered']
    #allocation8 [shape = 'u8[16384]{0}', space=vmem, size = 0x4000, scoped, tag = 'output window, operand 0, single buffered']
    %8 = vsyncpa [#allocation3], 0
    %9 = vsyncpa [#allocation6], 0
    %10 = vsyncpa [#allocation4], 0
    // Predicated region
    $region2: #{tpu_custom_call.1} parent=1 // pred_check
      _
    $region3: #{tpu_custom_call.1} parent=1 // pred_check_branch
      %12 = sbr.rel (0) target = $region5
    $region4: #{tpu_custom_call.1} parent=1 // pred_region
      %s14 = ssub.s32 512, 512
      %15 = vsyncadd [#allocation3], %s14
      %s17 = sshll.u32 [#allocation2], 4
      %s18 = int_to_ptr.vmem [resolvable:$true] %s17
      %20 = dma.hbm_to_vmem [thread:$0]  %s0, 512, %s18, [#allocation3]
    $region5: #{tpu_custom_call.1} parent=1 // pred_fallthru
      _
    // Predicated region
    $region6: #{tpu_custom_call.1} parent=1 // pred_check
      _
    $region7: #{tpu_custom_call.1} parent=1 // pred_check_branch
      %22 = sbr.rel (0) target = $region9
    $region8: #{tpu_custom_call.1} parent=1 // pred_region
      %s24 = ssub.s32 65536, 65536
      %25 = vsyncadd [#allocation6], %s24
      %s26 = sshll.u32 [#allocation5], 4
      %s27 = int_to_ptr.vmem [resolvable:$true] %s26
      %32 = dma.hbm_to_vmem [thread:$0]  %s1, 65536, %s27, [#allocation6], 256, 256, 16
    $region9: #{tpu_custom_call.1} parent=1 // pred_fallthru
      _
    // Predicated region
    $region10: #{tpu_custom_call.1} parent=1 // pred_check
      _
    $region11: #{tpu_custom_call.1} parent=1 // pred_check_branch
      %34 = sbr.rel (0) target = $region13
    $region12: #{tpu_custom_call.1} parent=1 // pred_region
      %s36 = ssub.s32 256, 256
      %37 = vsyncadd [#allocation6], %s36
      %s38 = sshll.u32 [#allocation7], 4
      %s39 = int_to_ptr.vmem [resolvable:$true] %s38
      %44 = dma.hbm_to_vmem [thread:$0]  %s2, 256, %s39, [#allocation6], 64, 64, 4
    $region13: #{tpu_custom_call.1} parent=1 // pred_fallthru
      _
    // Predicated region
    $region14: #{tpu_custom_call.1} parent=1 // pred_check
      _
    $region15: #{tpu_custom_call.1} parent=1 // pred_check_branch
      %46 = sbr.rel (0) target = $region17
    $region16: #{tpu_custom_call.1} parent=1 // pred_region
      %47 = dma.done [#allocation3], 512
    $region17: #{tpu_custom_call.1} parent=1 // pred_fallthru
      _
    // Predicated region
    $region18: #{tpu_custom_call.1} parent=1 // pred_check
      _
    $region19: #{tpu_custom_call.1} parent=1 // pred_check_branch
      %49 = sbr.rel (0) target = $region21
    $region20: #{tpu_custom_call.1} parent=1 // pred_region
      %50 = dma.done [#allocation6], 65536
    $region21: #{tpu_custom_call.1} parent=1 // pred_fallthru
      _
    // Predicated region
    $region22: #{tpu_custom_call.1} parent=1 // pred_check
      _
    $region23: #{tpu_custom_call.1} parent=1 // pred_check_branch
      %52 = sbr.rel (0) target = $region25
    $region24: #{tpu_custom_call.1} parent=1 // pred_region
      %53 = dma.done [#allocation6], 256
    $region25: #{tpu_custom_call.1} parent=1 // pred_fallthru
      _
    %v54 = vld [vmem:[#allocation2] sm:$0xff]
    %v55 = vld [vmem:[#allocation2 + $0x8] sm:$0xff]
    %v56 = vld [vmem:[#allocation2 + $0x10] sm:$0xff]
    %v57 = vld [vmem:[#allocation2 + $0x18] sm:$0xff]
    %v58 = vmul.f32 %v54, %v54
    %v59 = vmul.f32 %v55, %v55
    %v60 = vmul.f32 %v56, %v56
    %v61 = vmul.f32 %v57, %v57
    %v62 = vadd.f32 %v58, %v59
    %v63 = vadd.f32 %v62, %v60
    %v64 = vadd.f32 %v63, %v61
    %65 = vadd.xlane.f32.xlu0 %v64
    %v66 = vpop.xlane.xlu0 %65
    %v67 = vrcp.pop 512.0
    %v68 = vmul.f32 %v66, %v67
    %v69 = vadd.f32 %v68, 1e-08
    %v70 = vrsqrt.pop %v69
    %v71 = vmul.f32 %v54, %v70
    %v72 = vmul.f32 %v55, %v70
    %v73 = vmul.f32 %v56, %v70
    %v74 = vmul.f32 %v57, %v70
    %v75 = vpack.c.bf16 %v71, %v71
    %v76 = vpack.c.bf16 %v72, %v72
    %v77 = vpack.c.bf16 %v73, %v73
    %v78 = vpack.c.bf16 %v74, %v74
    %v79 = vld [vmem:[#allocation5] sm:$0xff]
    %v80 = vld [vmem:[#allocation5 + $0x8] sm:$0xff]
    %v81 = vld [vmem:[#allocation5 + $0x10] sm:$0xff]
    %v82 = vld [vmem:[#allocation5 + $0x18] sm:$0xff]
    %v83 = vld [vmem:[#allocation5 + $0x20] sm:$0xff]
    %v84 = vld [vmem:[#allocation5 + $0x28] sm:$0xff]
    %v85 = vld [vmem:[#allocation5 + $0x30] sm:$0xff]
    %v86 = vld [vmem:[#allocation5 + $0x38] sm:$0xff]
    %v87 = vld [vmem:[#allocation5 + $0x40] sm:$0xff]
    %v88 = vld [vmem:[#allocation5 + $0x48] sm:$0xff]
    %v89 = vld [vmem:[#allocation5 + $0x50] sm:$0xff]
    %v90 = vld [vmem:[#allocation5 + $0x58] sm:$0xff]
    %v91 = vld [vmem:[#allocation5 + $0x60] sm:$0xff]
    %v92 = vld [vmem:[#allocation5 + $0x68] sm:$0xff]
    %v93 = vld [vmem:[#allocation5 + $0x70] sm:$0xff]
    %v94 = vld [vmem:[#allocation5 + $0x78] sm:$0xff]
    %v95 = vld [vmem:[#allocation5 + $0x80] sm:$0xff]
    %v96 = vld [vmem:[#allocation5 + $0x88] sm:$0xff]
    %v97 = vld [vmem:[#allocation5 + $0x90] sm:$0xff]
    %v98 = vld [vmem:[#allocation5 + $0x98] sm:$0xff]
    %v99 = vld [vmem:[#allocation5 + $0xa0] sm:$0xff]
    %v100 = vld [vmem:[#allocation5 + $0xa8] sm:$0xff]
    %v101 = vld [vmem:[#allocation5 + $0xb0] sm:$0xff]
    %v102 = vld [vmem:[#allocation5 + $0xb8] sm:$0xff]
    %v103 = vld [vmem:[#allocation5 + $0xc0] sm:$0xff]
    %v104 = vld [vmem:[#allocation5 + $0xc8] sm:$0xff]
    %v105 = vld [vmem:[#allocation5 + $0xd0] sm:$0xff]
    %v106 = vld [vmem:[#allocation5 + $0xd8] sm:$0xff]
    %v107 = vld [vmem:[#allocation5 + $0xe0] sm:$0xff]
    %v108 = vld [vmem:[#allocation5 + $0xe8] sm:$0xff]
    %v109 = vld [vmem:[#allocation5 + $0xf0] sm:$0xff]
    %v110 = vld [vmem:[#allocation5 + $0xf8] sm:$0xff]
    %v111 = vld [vmem:[#allocation5 + $0x100] sm:$0xff]
    %v112 = vld [vmem:[#allocation5 + $0x108] sm:$0xff]
    %v113 = vld [vmem:[#allocation5 + $0x110] sm:$0xff]
    %v114 = vld [vmem:[#allocation5 + $0x118] sm:$0xff]
    %v115 = vld [vmem:[#allocation5 + $0x120] sm:$0xff]
    %v116 = vld [vmem:[#allocation5 + $0x128] sm:$0xff]
    %v117 = vld [vmem:[#allocation5 + $0x130] sm:$0xff]
    %v118 = vld [vmem:[#allocation5 + $0x138] sm:$0xff]
    %v119 = vld [vmem:[#allocation5 + $0x140] sm:$0xff]
    %v120 = vld [vmem:[#allocation5 + $0x148] sm:$0xff]
    %v121 = vld [vmem:[#allocation5 + $0x150] sm:$0xff]
    %v122 = vld [vmem:[#allocation5 + $0x158] sm:$0xff]
    %v123 = vld [vmem:[#allocation5 + $0x160] sm:$0xff]
    %v124 = vld [vmem:[#allocation5 + $0x168] sm:$0xff]
    %v125 = vld [vmem:[#allocation5 + $0x170] sm:$0xff]
    %v126 = vld [vmem:[#allocation5 + $0x178] sm:$0xff]
    %v127 = vld [vmem:[#allocation5 + $0x180] sm:$0xff]
    %v128 = vld [vmem:[#allocation5 + $0x188] sm:$0xff]
    %v129 = vld [vmem:[#allocation5 + $0x190] sm:$0xff]
    %v130 = vld [vmem:[#allocation5 + $0x198] sm:$0xff]
    %v131 = vld [vmem:[#allocation5 + $0x1a0] sm:$0xff]
    %v132 = vld [vmem:[#allocation5 + $0x1a8] sm:$0xff]
    %v133 = vld [vmem:[#allocation5 + $0x1b0] sm:$0xff]
    %v134 = vld [vmem:[#allocation5 + $0x1b8] sm:$0xff]
    %v135 = vld [vmem:[#allocation5 + $0x1c0] sm:$0xff]
    %v136 = vld [vmem:[#allocation5 + $0x1c8] sm:$0xff]
    %v137 = vld [vmem:[#allocation5 + $0x1d0] sm:$0xff]
    %v138 = vld [vmem:[#allocation5 + $0x1d8] sm:$0xff]
    %v139 = vld [vmem:[#allocation5 + $0x1e0] sm:$0xff]
    %v140 = vld [vmem:[#allocation5 + $0x1e8] sm:$0xff]
    %v141 = vld [vmem:[#allocation5 + $0x1f0] sm:$0xff]
    %v142 = vld [vmem:[#allocation5 + $0x1f8] sm:$0xff]
    %v143 = vld [vmem:[#allocation5 + $0x200] sm:$0xff]
    %v144 = vld [vmem:[#allocation5 + $0x208] sm:$0xff]
    %v145 = vld [vmem:[#allocation5 + $0x210] sm:$0xff]
    %v146 = vld [vmem:[#allocation5 + $0x218] sm:$0xff]
    %v147 = vld [vmem:[#allocation5 + $0x220] sm:$0xff]
    %v148 = vld [vmem:[#allocation5 + $0x228] sm:$0xff]
    %v149 = vld [vmem:[#allocation5 + $0x230] sm:$0xff]
    %v150 = vld [vmem:[#allocation5 + $0x238] sm:$0xff]
    %v151 = vld [vmem:[#allocation5 + $0x240] sm:$0xff]
    %v152 = vld [vmem:[#allocation5 + $0x248] sm:$0xff]
    %v153 = vld [vmem:[#allocation5 + $0x250] sm:$0xff]
    %v154 = vld [vmem:[#allocation5 + $0x258] sm:$0xff]
    %v155 = vld [vmem:[#allocation5 + $0x260] sm:$0xff]
    %v156 = vld [vmem:[#allocation5 + $0x268] sm:$0xff]
    %v157 = vld [vmem:[#allocation5 + $0x270] sm:$0xff]
    %v158 = vld [vmem:[#allocation5 + $0x278] sm:$0xff]
    %v159 = vld [vmem:[#allocation5 + $0x280] sm:$0xff]
    %v160 = vld [vmem:[#allocation5 + $0x288] sm:$0xff]
    %v161 = vld [vmem:[#allocation5 + $0x290] sm:$0xff]
    %v162 = vld [vmem:[#allocation5 + $0x298] sm:$0xff]
    %v163 = vld [vmem:[#allocation5 + $0x2a0] sm:$0xff]
    %v164 = vld [vmem:[#allocation5 + $0x2a8] sm:$0xff]
    %v165 = vld [vmem:[#allocation5 + $0x2b0] sm:$0xff]
    %v166 = vld [vmem:[#allocation5 + $0x2b8] sm:$0xff]
    %v167 = vld [vmem:[#allocation5 + $0x2c0] sm:$0xff]
    %v168 = vld [vmem:[#allocation5 + $0x2c8] sm:$0xff]
    %v169 = vld [vmem:[#allocation5 + $0x2d0] sm:$0xff]
    %v170 = vld [vmem:[#allocation5 + $0x2d8] sm:$0xff]
    %v171 = vld [vmem:[#allocation5 + $0x2e0] sm:$0xff]
    %v172 = vld [vmem:[#allocation5 + $0x2e8] sm:$0xff]
    %v173 = vld [vmem:[#allocation5 + $0x2f0] sm:$0xff]
    %v174 = vld [vmem:[#allocation5 + $0x2f8] sm:$0xff]
    %v175 = vld [vmem:[#allocation5 + $0x300] sm:$0xff]
    %v176 = vld [vmem:[#allocation5 + $0x308] sm:$0xff]
    %v177 = vld [vmem:[#allocation5 + $0x310] sm:$0xff]
    %v178 = vld [vmem:[#allocation5 + $0x318] sm:$0xff]
    %v179 = vld [vmem:[#allocation5 + $0x320] sm:$0xff]
    %v180 = vld [vmem:[#allocation5 + $0x328] sm:$0xff]
    %v181 = vld [vmem:[#allocation5 + $0x330] sm:$0xff]
    %v182 = vld [vmem:[#allocation5 + $0x338] sm:$0xff]
    %v183 = vld [vmem:[#allocation5 + $0x340] sm:$0xff]
    %v184 = vld [vmem:[#allocation5 + $0x348] sm:$0xff]
    %v185 = vld [vmem:[#allocation5 + $0x350] sm:$0xff]
    %v186 = vld [vmem:[#allocation5 + $0x358] sm:$0xff]
    %v187 = vld [vmem:[#allocation5 + $0x360] sm:$0xff]
    %v188 = vld [vmem:[#allocation5 + $0x368] sm:$0xff]
    %v189 = vld [vmem:[#allocation5 + $0x370] sm:$0xff]
    %v190 = vld [vmem:[#allocation5 + $0x378] sm:$0xff]
    %v191 = vld [vmem:[#allocation5 + $0x380] sm:$0xff]
    %v192 = vld [vmem:[#allocation5 + $0x388] sm:$0xff]
    %v193 = vld [vmem:[#allocation5 + $0x390] sm:$0xff]
    %v194 = vld [vmem:[#allocation5 + $0x398] sm:$0xff]
    %v195 = vld [vmem:[#allocation5 + $0x3a0] sm:$0xff]
    %v196 = vld [vmem:[#allocation5 + $0x3a8] sm:$0xff]
    %v197 = vld [vmem:[#allocation5 + $0x3b0] sm:$0xff]
    %v198 = vld [vmem:[#allocation5 + $0x3b8] sm:$0xff]
    %v199 = vld [vmem:[#allocation5 + $0x3c0] sm:$0xff]
    %v200 = vld [vmem:[#allocation5 + $0x3c8] sm:$0xff]
    %v201 = vld [vmem:[#allocation5 + $0x3d0] sm:$0xff]
    %v202 = vld [vmem:[#allocation5 + $0x3d8] sm:$0xff]
    %v203 = vld [vmem:[#allocation5 + $0x3e0] sm:$0xff]
    %v204 = vld [vmem:[#allocation5 + $0x3e8] sm:$0xff]
    %v205 = vld [vmem:[#allocation5 + $0x3f0] sm:$0xff]
    %v206 = vld [vmem:[#allocation5 + $0x3f8] sm:$0xff]
    %v207 = vld [vmem:[#allocation7] sm:$0xf]
    %v209 = vlaneseq
    %v210 = vshrl.u32 %v209, 7
    %v211 = vsub.s32 0, %v210
    %v212 = vrot.slane %v207, %v211
    %v213 = vlaneseq
    %v214 = vshrl.u32 %v213, 7
    %v215 = vsub.s32 1, %v214
    %v216 = vrot.slane %v207, %v215
    %v217 = vlaneseq
    %v218 = vshrl.u32 %v217, 7
    %v219 = vsub.s32 2, %v218
    %v220 = vrot.slane %v207, %v219
    %v221 = vlaneseq
    %v222 = vshrl.u32 %v221, 7
    %v223 = vsub.s32 3, %v222
    %v224 = vrot.slane %v207, %v223
    %v357 = vunpack.c.l.b16 %v79
    %v358 = vunpack.c.h.b16 %v79
    %v359 = vunpack.c.l.b16 %v80
    %v360 = vunpack.c.h.b16 %v80
    %v361 = vunpack.c.l.b16 %v81
    %v362 = vunpack.c.h.b16 %v81
    %v363 = vunpack.c.l.b16 %v82
    %v364 = vunpack.c.h.b16 %v82
    %v365 = vunpack.c.l.b16 %v83
    %v366 = vunpack.c.h.b16 %v83
    %v367 = vunpack.c.l.b16 %v84
    %v368 = vunpack.c.h.b16 %v84
    %v369 = vunpack.c.l.b16 %v85
    %v370 = vunpack.c.h.b16 %v85
    %v371 = vunpack.c.l.b16 %v86
    %v372 = vunpack.c.h.b16 %v86
    %v373 = vunpack.c.l.b16 %v87
    %v374 = vunpack.c.h.b16 %v87
    %v375 = vunpack.c.l.b16 %v88
    %v376 = vunpack.c.h.b16 %v88
    %v377 = vunpack.c.l.b16 %v89
    %v378 = vunpack.c.h.b16 %v89
    %v379 = vunpack.c.l.b16 %v90
    %v380 = vunpack.c.h.b16 %v90
    %v381 = vunpack.c.l.b16 %v91
    %v382 = vunpack.c.h.b16 %v91
    %v383 = vunpack.c.l.b16 %v92
    %v384 = vunpack.c.h.b16 %v92
    %v385 = vunpack.c.l.b16 %v93
    %v386 = vunpack.c.h.b16 %v93
    %v387 = vunpack.c.l.b16 %v94
    %v388 = vunpack.c.h.b16 %v94
    %v389 = vunpack.c.l.b16 %v95
    %v390 = vunpack.c.h.b16 %v95
    %v391 = vunpack.c.l.b16 %v96
    %v392 = vunpack.c.h.b16 %v96
    %v393 = vunpack.c.l.b16 %v97
    %v394 = vunpack.c.h.b16 %v97
    %v395 = vunpack.c.l.b16 %v98
    %v396 = vunpack.c.h.b16 %v98
    %v397 = vunpack.c.l.b16 %v99
    %v398 = vunpack.c.h.b16 %v99
    %v399 = vunpack.c.l.b16 %v100
    %v400 = vunpack.c.h.b16 %v100
    %v401 = vunpack.c.l.b16 %v101
    %v402 = vunpack.c.h.b16 %v101
    %v403 = vunpack.c.l.b16 %v102
    %v404 = vunpack.c.h.b16 %v102
    %v405 = vunpack.c.l.b16 %v103
    %v406 = vunpack.c.h.b16 %v103
    %v407 = vunpack.c.l.b16 %v104
    %v408 = vunpack.c.h.b16 %v104
    %v409 = vunpack.c.l.b16 %v105
    %v410 = vunpack.c.h.b16 %v105
    %v411 = vunpack.c.l.b16 %v106
    %v412 = vunpack.c.h.b16 %v106
    %v413 = vunpack.c.l.b16 %v107
    %v414 = vunpack.c.h.b16 %v107
    %v415 = vunpack.c.l.b16 %v108
    %v416 = vunpack.c.h.b16 %v108
    %v417 = vunpack.c.l.b16 %v109
    %v418 = vunpack.c.h.b16 %v109
    %v419 = vunpack.c.l.b16 %v110
    %v420 = vunpack.c.h.b16 %v110
    %v421 = vunpack.c.l.b16 %v111
    %v422 = vunpack.c.h.b16 %v111
    %v423 = vunpack.c.l.b16 %v112
    %v424 = vunpack.c.h.b16 %v112
    %v425 = vunpack.c.l.b16 %v113
    %v426 = vunpack.c.h.b16 %v113
    %v427 = vunpack.c.l.b16 %v114
    %v428 = vunpack.c.h.b16 %v114
    %v429 = vunpack.c.l.b16 %v115
    %v430 = vunpack.c.h.b16 %v115
    %v431 = vunpack.c.l.b16 %v116
    %v432 = vunpack.c.h.b16 %v116
    %v433 = vunpack.c.l.b16 %v117
    %v434 = vunpack.c.h.b16 %v117
    %v435 = vunpack.c.l.b16 %v118
    %v436 = vunpack.c.h.b16 %v118
    %v437 = vunpack.c.l.b16 %v119
    %v438 = vunpack.c.h.b16 %v119
    %v439 = vunpack.c.l.b16 %v120
    %v440 = vunpack.c.h.b16 %v120
    %v441 = vunpack.c.l.b16 %v121
    %v442 = vunpack.c.h.b16 %v121
    %v443 = vunpack.c.l.b16 %v122
    %v444 = vunpack.c.h.b16 %v122
    %v445 = vunpack.c.l.b16 %v123
    %v446 = vunpack.c.h.b16 %v123
    %v447 = vunpack.c.l.b16 %v124
    %v448 = vunpack.c.h.b16 %v124
    %v449 = vunpack.c.l.b16 %v125
    %v450 = vunpack.c.h.b16 %v125
    %v451 = vunpack.c.l.b16 %v126
    %v452 = vunpack.c.h.b16 %v126
    %v453 = vunpack.c.l.b16 %v127
    %v454 = vunpack.c.h.b16 %v127
    %v455 = vunpack.c.l.b16 %v128
    %v456 = vunpack.c.h.b16 %v128
    %v457 = vunpack.c.l.b16 %v129
    %v458 = vunpack.c.h.b16 %v129
    %v459 = vunpack.c.l.b16 %v130
    %v460 = vunpack.c.h.b16 %v130
    %v461 = vunpack.c.l.b16 %v131
    %v462 = vunpack.c.h.b16 %v131
    %v463 = vunpack.c.l.b16 %v132
    %v464 = vunpack.c.h.b16 %v132
    %v465 = vunpack.c.l.b16 %v133
    %v466 = vunpack.c.h.b16 %v133
    %v467 = vunpack.c.l.b16 %v134
    %v468 = vunpack.c.h.b16 %v134
    %v469 = vunpack.c.l.b16 %v135
    %v470 = vunpack.c.h.b16 %v135
    %v471 = vunpack.c.l.b16 %v136
    %v472 = vunpack.c.h.b16 %v136
    %v473 = vunpack.c.l.b16 %v137
    %v474 = vunpack.c.h.b16 %v137
    %v475 = vunpack.c.l.b16 %v138
    %v476 = vunpack.c.h.b16 %v138
    %v477 = vunpack.c.l.b16 %v139
    %v478 = vunpack.c.h.b16 %v139
    %v479 = vunpack.c.l.b16 %v140
    %v480 = vunpack.c.h.b16 %v140
    %v481 = vunpack.c.l.b16 %v141
    %v482 = vunpack.c.h.b16 %v141
    %v483 = vunpack.c.l.b16 %v142
    %v484 = vunpack.c.h.b16 %v142
    %v485 = vunpack.c.l.b16 %v143
    %v486 = vunpack.c.h.b16 %v143
    %v487 = vunpack.c.l.b16 %v144
    %v488 = vunpack.c.h.b16 %v144
    %v489 = vunpack.c.l.b16 %v145
    %v490 = vunpack.c.h.b16 %v145
    %v491 = vunpack.c.l.b16 %v146
    %v492 = vunpack.c.h.b16 %v146
    %v493 = vunpack.c.l.b16 %v147
    %v494 = vunpack.c.h.b16 %v147
    %v495 = vunpack.c.l.b16 %v148
    %v496 = vunpack.c.h.b16 %v148
    %v497 = vunpack.c.l.b16 %v149
    %v498 = vunpack.c.h.b16 %v149
    %v499 = vunpack.c.l.b16 %v150
    %v500 = vunpack.c.h.b16 %v150
    %v501 = vunpack.c.l.b16 %v151
    %v502 = vunpack.c.h.b16 %v151
    %v503 = vunpack.c.l.b16 %v152
    %v504 = vunpack.c.h.b16 %v152
    %v505 = vunpack.c.l.b16 %v153
    %v506 = vunpack.c.h.b16 %v153
    %v507 = vunpack.c.l.b16 %v154
    %v508 = vunpack.c.h.b16 %v154
    %v509 = vunpack.c.l.b16 %v155
    %v510 = vunpack.c.h.b16 %v155
    %v511 = vunpack.c.l.b16 %v156
    %v512 = vunpack.c.h.b16 %v156
    %v513 = vunpack.c.l.b16 %v157
    %v514 = vunpack.c.h.b16 %v157
    %v515 = vunpack.c.l.b16 %v158
    %v516 = vunpack.c.h.b16 %v158
    %v517 = vunpack.c.l.b16 %v159
    %v518 = vunpack.c.h.b16 %v159
    %v519 = vunpack.c.l.b16 %v160
    %v520 = vunpack.c.h.b16 %v160
    %v521 = vunpack.c.l.b16 %v161
    %v522 = vunpack.c.h.b16 %v161
    %v523 = vunpack.c.l.b16 %v162
    %v524 = vunpack.c.h.b16 %v162
    %v525 = vunpack.c.l.b16 %v163
    %v526 = vunpack.c.h.b16 %v163
    %v527 = vunpack.c.l.b16 %v164
    %v528 = vunpack.c.h.b16 %v164
    %v529 = vunpack.c.l.b16 %v165
    %v530 = vunpack.c.h.b16 %v165
    %v531 = vunpack.c.l.b16 %v166
    %v532 = vunpack.c.h.b16 %v166
    %v533 = vunpack.c.l.b16 %v167
    %v534 = vunpack.c.h.b16 %v167
    %v535 = vunpack.c.l.b16 %v168
    %v536 = vunpack.c.h.b16 %v168
    %v537 = vunpack.c.l.b16 %v169
    %v538 = vunpack.c.h.b16 %v169
    %v539 = vunpack.c.l.b16 %v170
    %v540 = vunpack.c.h.b16 %v170
    %v541 = vunpack.c.l.b16 %v171
    %v542 = vunpack.c.h.b16 %v171
    %v543 = vunpack.c.l.b16 %v172
    %v544 = vunpack.c.h.b16 %v172
    %v545 = vunpack.c.l.b16 %v173
    %v546 = vunpack.c.h.b16 %v173
    %v547 = vunpack.c.l.b16 %v174
    %v548 = vunpack.c.h.b16 %v174
    %v549 = vunpack.c.l.b16 %v175
    %v550 = vunpack.c.h.b16 %v175
    %v551 = vunpack.c.l.b16 %v176
    %v552 = vunpack.c.h.b16 %v176
    %v553 = vunpack.c.l.b16 %v177
    %v554 = vunpack.c.h.b16 %v177
    %v555 = vunpack.c.l.b16 %v178
    %v556 = vunpack.c.h.b16 %v178
    %v557 = vunpack.c.l.b16 %v179
    %v558 = vunpack.c.h.b16 %v179
    %v559 = vunpack.c.l.b16 %v180
    %v560 = vunpack.c.h.b16 %v180
    %v561 = vunpack.c.l.b16 %v181
    %v562 = vunpack.c.h.b16 %v181
    %v563 = vunpack.c.l.b16 %v182
    %v564 = vunpack.c.h.b16 %v182
    %v565 = vunpack.c.l.b16 %v183
    %v566 = vunpack.c.h.b16 %v183
    %v567 = vunpack.c.l.b16 %v184
    %v568 = vunpack.c.h.b16 %v184
    %v569 = vunpack.c.l.b16 %v185
    %v570 = vunpack.c.h.b16 %v185
    %v571 = vunpack.c.l.b16 %v186
    %v572 = vunpack.c.h.b16 %v186
    %v573 = vunpack.c.l.b16 %v187
    %v574 = vunpack.c.h.b16 %v187
    %v575 = vunpack.c.l.b16 %v188
    %v576 = vunpack.c.h.b16 %v188
    %v577 = vunpack.c.l.b16 %v189
    %v578 = vunpack.c.h.b16 %v189
    %v579 = vunpack.c.l.b16 %v190
    %v580 = vunpack.c.h.b16 %v190
    %v581 = vunpack.c.l.b16 %v191
    %v582 = vunpack.c.h.b16 %v191
    %v583 = vunpack.c.l.b16 %v192
    %v584 = vunpack.c.h.b16 %v192
    %v585 = vunpack.c.l.b16 %v193
    %v586 = vunpack.c.h.b16 %v193
    %v587 = vunpack.c.l.b16 %v194
    %v588 = vunpack.c.h.b16 %v194
    %v589 = vunpack.c.l.b16 %v195
    %v590 = vunpack.c.h.b16 %v195
    %v591 = vunpack.c.l.b16 %v196
    %v592 = vunpack.c.h.b16 %v196
    %v593 = vunpack.c.l.b16 %v197
    %v594 = vunpack.c.h.b16 %v197
    %v595 = vunpack.c.l.b16 %v198
    %v596 = vunpack.c.h.b16 %v198
    %v597 = vunpack.c.l.b16 %v199
    %v598 = vunpack.c.h.b16 %v199
    %v599 = vunpack.c.l.b16 %v200
    %v600 = vunpack.c.h.b16 %v200
    %v601 = vunpack.c.l.b16 %v201
    %v602 = vunpack.c.h.b16 %v201
    %v603 = vunpack.c.l.b16 %v202
    %v604 = vunpack.c.h.b16 %v202
    %v605 = vunpack.c.l.b16 %v203
    %v606 = vunpack.c.h.b16 %v203
    %v607 = vunpack.c.l.b16 %v204
    %v608 = vunpack.c.h.b16 %v204
    %v609 = vunpack.c.l.b16 %v205
    %v610 = vunpack.c.h.b16 %v205
    %v611 = vunpack.c.l.b16 %v206
    %v612 = vunpack.c.h.b16 %v206
    %v613 = vpack.c.b16 %v361, %v357
    %v614 = vpack.c.b16 %v362, %v358
    %v615 = vpack.c.b16 %v363, %v359
    %v616 = vpack.c.b16 %v364, %v360
    %v617 = vpack.c.b16 %v369, %v365
    %v618 = vpack.c.b16 %v370, %v366
    %v619 = vpack.c.b16 %v371, %v367
    %v620 = vpack.c.b16 %v372, %v368
    %v621 = vpack.c.b16 %v377, %v373
    %v622 = vpack.c.b16 %v378, %v374
    %v623 = vpack.c.b16 %v379, %v375
    %v624 = vpack.c.b16 %v380, %v376
    %v625 = vpack.c.b16 %v385, %v381
    %v626 = vpack.c.b16 %v386, %v382
    %v627 = vpack.c.b16 %v387, %v383
    %v628 = vpack.c.b16 %v388, %v384
    %v629 = vpack.c.b16 %v393, %v389
    %v630 = vpack.c.b16 %v394, %v390
    %v631 = vpack.c.b16 %v395, %v391
    %v632 = vpack.c.b16 %v396, %v392
    %v633 = vpack.c.b16 %v401, %v397
    %v634 = vpack.c.b16 %v402, %v398
    %v635 = vpack.c.b16 %v403, %v399
    %v636 = vpack.c.b16 %v404, %v400
    %v637 = vpack.c.b16 %v409, %v405
    %v638 = vpack.c.b16 %v410, %v406
    %v639 = vpack.c.b16 %v411, %v407
    %v640 = vpack.c.b16 %v412, %v408
    %v641 = vpack.c.b16 %v417, %v413
    %v642 = vpack.c.b16 %v418, %v414
    %v643 = vpack.c.b16 %v419, %v415
    %v644 = vpack.c.b16 %v420, %v416
    %v645 = vpack.c.b16 %v425, %v421
    %v646 = vpack.c.b16 %v426, %v422
    %v647 = vpack.c.b16 %v427, %v423
    %v648 = vpack.c.b16 %v428, %v424
    %v649 = vpack.c.b16 %v433, %v429
    %v650 = vpack.c.b16 %v434, %v430
    %v651 = vpack.c.b16 %v435, %v431
    %v652 = vpack.c.b16 %v436, %v432
    %v653 = vpack.c.b16 %v441, %v437
    %v654 = vpack.c.b16 %v442, %v438
    %v655 = vpack.c.b16 %v443, %v439
    %v656 = vpack.c.b16 %v444, %v440
    %v657 = vpack.c.b16 %v449, %v445
    %v658 = vpack.c.b16 %v450, %v446
    %v659 = vpack.c.b16 %v451, %v447
    %v660 = vpack.c.b16 %v452, %v448
    %v661 = vpack.c.b16 %v457, %v453
    %v662 = vpack.c.b16 %v458, %v454
    %v663 = vpack.c.b16 %v459, %v455
    %v664 = vpack.c.b16 %v460, %v456
    %v665 = vpack.c.b16 %v465, %v461
    %v666 = vpack.c.b16 %v466, %v462
    %v667 = vpack.c.b16 %v467, %v463
    %v668 = vpack.c.b16 %v468, %v464
    %v669 = vpack.c.b16 %v473, %v469
    %v670 = vpack.c.b16 %v474, %v470
    %v671 = vpack.c.b16 %v475, %v471
    %v672 = vpack.c.b16 %v476, %v472
    %v673 = vpack.c.b16 %v481, %v477
    %v674 = vpack.c.b16 %v482, %v478
    %v675 = vpack.c.b16 %v483, %v479
    %v676 = vpack.c.b16 %v484, %v480
    %v677 = vpack.c.b16 %v489, %v485
    %v678 = vpack.c.b16 %v490, %v486
    %v679 = vpack.c.b16 %v491, %v487
    %v680 = vpack.c.b16 %v492, %v488
    %v681 = vpack.c.b16 %v497, %v493
    %v682 = vpack.c.b16 %v498, %v494
    %v683 = vpack.c.b16 %v499, %v495
    %v684 = vpack.c.b16 %v500, %v496
    %v685 = vpack.c.b16 %v505, %v501
    %v686 = vpack.c.b16 %v506, %v502
    %v687 = vpack.c.b16 %v507, %v503
    %v688 = vpack.c.b16 %v508, %v504
    %v689 = vpack.c.b16 %v513, %v509
    %v690 = vpack.c.b16 %v514, %v510
    %v691 = vpack.c.b16 %v515, %v511
    %v692 = vpack.c.b16 %v516, %v512
    %v693 = vpack.c.b16 %v521, %v517
    %v694 = vpack.c.b16 %v522, %v518
    %v695 = vpack.c.b16 %v523, %v519
    %v696 = vpack.c.b16 %v524, %v520
    %v697 = vpack.c.b16 %v529, %v525
    %v698 = vpack.c.b16 %v530, %v526
    %v699 = vpack.c.b16 %v531, %v527
    %v700 = vpack.c.b16 %v532, %v528
    %v701 = vpack.c.b16 %v537, %v533
    %v702 = vpack.c.b16 %v538, %v534
    %v703 = vpack.c.b16 %v539, %v535
    %v704 = vpack.c.b16 %v540, %v536
    %v705 = vpack.c.b16 %v545, %v541
    %v706 = vpack.c.b16 %v546, %v542
    %v707 = vpack.c.b16 %v547, %v543
    %v708 = vpack.c.b16 %v548, %v544
    %v709 = vpack.c.b16 %v553, %v549
    %v710 = vpack.c.b16 %v554, %v550
    %v711 = vpack.c.b16 %v555, %v551
    %v712 = vpack.c.b16 %v556, %v552
    %v713 = vpack.c.b16 %v561, %v557
    %v714 = vpack.c.b16 %v562, %v558
    %v715 = vpack.c.b16 %v563, %v559
    %v716 = vpack.c.b16 %v564, %v560
    %v717 = vpack.c.b16 %v569, %v565
    %v718 = vpack.c.b16 %v570, %v566
    %v719 = vpack.c.b16 %v571, %v567
    %v720 = vpack.c.b16 %v572, %v568
    %v721 = vpack.c.b16 %v577, %v573
    %v722 = vpack.c.b16 %v578, %v574
    %v723 = vpack.c.b16 %v579, %v575
    %v724 = vpack.c.b16 %v580, %v576
    %v725 = vpack.c.b16 %v585, %v581
    %v726 = vpack.c.b16 %v586, %v582
    %v727 = vpack.c.b16 %v587, %v583
    %v728 = vpack.c.b16 %v588, %v584
    %v729 = vpack.c.b16 %v593, %v589
    %v730 = vpack.c.b16 %v594, %v590
    %v731 = vpack.c.b16 %v595, %v591
    %v732 = vpack.c.b16 %v596, %v592
    %v733 = vpack.c.b16 %v601, %v597
    %v734 = vpack.c.b16 %v602, %v598
    %v735 = vpack.c.b16 %v603, %v599
    %v736 = vpack.c.b16 %v604, %v600
    %v737 = vpack.c.b16 %v609, %v605
    %v738 = vpack.c.b16 %v610, %v606
    %v739 = vpack.c.b16 %v611, %v607
    %v740 = vpack.c.b16 %v612, %v608
    %869 = vmatprep.subr.bf16.mxu0 %v614
    %870 = vmatpush1.bf16.msra.mxu0 %v613
    %871 = vmatprep.subr.bf16.mxu0 %v618
    %872 = vmatpush1.bf16.msra.mxu0 %v617
    %873 = vmatprep.subr.bf16.mxu0 %v622
    %874 = vmatpush1.bf16.msra.mxu0 %v621
    %875 = vmatprep.subr.bf16.mxu0 %v626
    %876 = vmatpush1.bf16.msra.mxu0 %v625
    %877 = vmatprep.subr.bf16.mxu0 %v630
    %878 = vmatpush1.bf16.msra.mxu0 %v629
    %879 = vmatprep.subr.bf16.mxu0 %v634
    %880 = vmatpush1.bf16.msra.mxu0 %v633
    %881 = vmatprep.subr.bf16.mxu0 %v638
    %882 = vmatpush1.bf16.msra.mxu0 %v637
    %883 = vmatprep.subr.bf16.mxu0 %v642
    %884 = vmatpush1.bf16.msra.mxu0 %v641
    %885 = vmatprep.subr.bf16.mxu0 %v646
    %886 = vmatpush1.bf16.msra.mxu0 %v645
    %887 = vmatprep.subr.bf16.mxu0 %v650
    %888 = vmatpush1.bf16.msra.mxu0 %v649
    %889 = vmatprep.subr.bf16.mxu0 %v654
    %890 = vmatpush1.bf16.msra.mxu0 %v653
    %891 = vmatprep.subr.bf16.mxu0 %v658
    %892 = vmatpush1.bf16.msra.mxu0 %v657
    %893 = vmatprep.subr.bf16.mxu0 %v662
    %894 = vmatpush1.bf16.msra.mxu0 %v661
    %895 = vmatprep.subr.bf16.mxu0 %v666
    %896 = vmatpush1.bf16.msra.mxu0 %v665
    %897 = vmatprep.subr.bf16.mxu0 %v670
    %898 = vmatpush1.bf16.msra.mxu0 %v669
    %899 = vmatprep.subr.bf16.mxu0 %v674
    %900 = vmatpush1.bf16.msra.mxu0 %v673
    %901 = vmatprep.mubr.bf16.mxu0 %v76
    %902 = vmatmul.mubr.bf16.gmra.mrb[0].mxu0 %v75
    %v903 = vpop.f32.mrb[0].mxu0
    %v904 = vadd.f32 %v212, %v903
    %v905 = vpop.f32.mrb[0].mxu0
    %v906 = vadd.f32 %v216, %v905
    %v907 = vpop.f32.mrb[0].mxu0
    %v908 = vpop.f32.mrb[0].mxu0
    %909 = vdwg.mxu0
    %910 = vmatprep.subr.bf16.mxu0 %v678
    %911 = vmatpush1.bf16.msra.mxu0 %v677
    %912 = vmatprep.subr.bf16.mxu0 %v682
    %913 = vmatpush1.bf16.msra.mxu0 %v681
    %914 = vmatprep.subr.bf16.mxu0 %v686
    %915 = vmatpush1.bf16.msra.mxu0 %v685
    %916 = vmatprep.subr.bf16.mxu0 %v690
    %917 = vmatpush1.bf16.msra.mxu0 %v689
    %918 = vmatprep.subr.bf16.mxu0 %v694
    %919 = vmatpush1.bf16.msra.mxu0 %v693
    %920 = vmatprep.subr.bf16.mxu0 %v698
    %921 = vmatpush1.bf16.msra.mxu0 %v697
    %922 = vmatprep.subr.bf16.mxu0 %v702
    %923 = vmatpush1.bf16.msra.mxu0 %v701
    %924 = vmatprep.subr.bf16.mxu0 %v706
    %925 = vmatpush1.bf16.msra.mxu0 %v705
    %926 = vmatprep.subr.bf16.mxu0 %v710
    %927 = vmatpush1.bf16.msra.mxu0 %v709
    %928 = vmatprep.subr.bf16.mxu0 %v714
    %929 = vmatpush1.bf16.msra.mxu0 %v713
    %930 = vmatprep.subr.bf16.mxu0 %v718
    %931 = vmatpush1.bf16.msra.mxu0 %v717
    %932 = vmatprep.subr.bf16.mxu0 %v722
    %933 = vmatpush1.bf16.msra.mxu0 %v721
    %934 = vmatprep.subr.bf16.mxu0 %v726
    %935 = vmatpush1.bf16.msra.mxu0 %v725
    %936 = vmatprep.subr.bf16.mxu0 %v730
    %937 = vmatpush1.bf16.msra.mxu0 %v729
    %938 = vmatprep.subr.bf16.mxu0 %v734
    %939 = vmatpush1.bf16.msra.mxu0 %v733
    %940 = vmatprep.subr.bf16.mxu0 %v738
    %941 = vmatpush1.bf16.msra.mxu0 %v737
    %942 = vmatprep.mubr.bf16.mxu0 %v78
    %943 = vmatmul.mubr.bf16.gmra.mrb[0].mxu0 %v77
    %v944 = vpop.f32.mrb[0].mxu0
    %v945 = vadd.f32 %v904, %v944
    %v946 = vpop.f32.mrb[0].mxu0
    %v947 = vadd.f32 %v906, %v946
    %v948 = vpop.f32.mrb[0].mxu0
    %v949 = vpop.f32.mrb[0].mxu0
    %950 = vdwg.mxu0
    %951 = vmatprep.subr.bf16.mxu0 %v616
    %952 = vmatpush1.bf16.msra.mxu0 %v615
    %953 = vmatprep.subr.bf16.mxu0 %v620
    %954 = vmatpush1.bf16.msra.mxu0 %v619
    %955 = vmatprep.subr.bf16.mxu0 %v624
    %956 = vmatpush1.bf16.msra.mxu0 %v623
    %957 = vmatprep.subr.bf16.mxu0 %v628
    %958 = vmatpush1.bf16.msra.mxu0 %v627
    %959 = vmatprep.subr.bf16.mxu0 %v632
    %960 = vmatpush1.bf16.msra.mxu0 %v631
    %961 = vmatprep.subr.bf16.mxu0 %v636
    %962 = vmatpush1.bf16.msra.mxu0 %v635
    %963 = vmatprep.subr.bf16.mxu0 %v640
    %964 = vmatpush1.bf16.msra.mxu0 %v639
    %965 = vmatprep.subr.bf16.mxu0 %v644
    %966 = vmatpush1.bf16.msra.mxu0 %v643
    %967 = vmatprep.subr.bf16.mxu0 %v648
    %968 = vmatpush1.bf16.msra.mxu0 %v647
    %969 = vmatprep.subr.bf16.mxu0 %v652
    %970 = vmatpush1.bf16.msra.mxu0 %v651
    %971 = vmatprep.subr.bf16.mxu0 %v656
    %972 = vmatpush1.bf16.msra.mxu0 %v655
    %973 = vmatprep.subr.bf16.mxu0 %v660
    %974 = vmatpush1.bf16.msra.mxu0 %v659
    %975 = vmatprep.subr.bf16.mxu0 %v664
    %976 = vmatpush1.bf16.msra.mxu0 %v663
    %977 = vmatprep.subr.bf16.mxu0 %v668
    %978 = vmatpush1.bf16.msra.mxu0 %v667
    %979 = vmatprep.subr.bf16.mxu0 %v672
    %980 = vmatpush1.bf16.msra.mxu0 %v671
    %981 = vmatprep.subr.bf16.mxu0 %v676
    %982 = vmatpush1.bf16.msra.mxu0 %v675
    %983 = vmatprep.mubr.bf16.mxu0 %v76
    %984 = vmatmul.mubr.bf16.gmra.mrb[0].mxu0 %v75
    %v985 = vpop.f32.mrb[0].mxu0
    %v986 = vadd.f32 %v220, %v985
    %v987 = vpop.f32.mrb[0].mxu0
    %v988 = vadd.f32 %v224, %v987
    %v989 = vpop.f32.mrb[0].mxu0
    %v990 = vpop.f32.mrb[0].mxu0
    %991 = vdwg.mxu0
    %992 = vmatprep.subr.bf16.mxu0 %v680
    %993 = vmatpush1.bf16.msra.mxu0 %v679
    %994 = vmatprep.subr.bf16.mxu0 %v684
    %995 = vmatpush1.bf16.msra.mxu0 %v683
    %996 = vmatprep.subr.bf16.mxu0 %v688
    %997 = vmatpush1.bf16.msra.mxu0 %v687
    %998 = vmatprep.subr.bf16.mxu0 %v692
    %999 = vmatpush1.bf16.msra.mxu0 %v691
    %1000 = vmatprep.subr.bf16.mxu0 %v696
    %1001 = vmatpush1.bf16.msra.mxu0 %v695
    %1002 = vmatprep.subr.bf16.mxu0 %v700
    %1003 = vmatpush1.bf16.msra.mxu0 %v699
    %1004 = vmatprep.subr.bf16.mxu0 %v704
    %1005 = vmatpush1.bf16.msra.mxu0 %v703
    %1006 = vmatprep.subr.bf16.mxu0 %v708
    %1007 = vmatpush1.bf16.msra.mxu0 %v707
    %1008 = vmatprep.subr.bf16.mxu0 %v712
    %1009 = vmatpush1.bf16.msra.mxu0 %v711
    %1010 = vmatprep.subr.bf16.mxu0 %v716
    %1011 = vmatpush1.bf16.msra.mxu0 %v715
    %1012 = vmatprep.subr.bf16.mxu0 %v720
    %1013 = vmatpush1.bf16.msra.mxu0 %v719
    %1014 = vmatprep.subr.bf16.mxu0 %v724
    %1015 = vmatpush1.bf16.msra.mxu0 %v723
    %1016 = vmatprep.subr.bf16.mxu0 %v728
    %1017 = vmatpush1.bf16.msra.mxu0 %v727
    %1018 = vmatprep.subr.bf16.mxu0 %v732
    %1019 = vmatpush1.bf16.msra.mxu0 %v731
    %1020 = vmatprep.subr.bf16.mxu0 %v736
    %1021 = vmatpush1.bf16.msra.mxu0 %v735
    %1022 = vmatprep.subr.bf16.mxu0 %v740
    %1023 = vmatpush1.bf16.msra.mxu0 %v739
    %1024 = vmatprep.mubr.bf16.mxu0 %v78
    %1025 = vmatmul.mubr.bf16.gmra.mrb[0].mxu0 %v77
    %v1026 = vpop.f32.mrb[0].mxu0
    %v1027 = vadd.f32 %v986, %v1026
    %v1028 = vpop.f32.mrb[0].mxu0
    %v1029 = vadd.f32 %v988, %v1028
    %v1030 = vpop.f32.mrb[0].mxu0
    %v1031 = vpop.f32.mrb[0].mxu0
    %1032 = vdwg.mxu0
    %v1033 = vmul.f32 %v945, 0.2
    %v1034 = vmul.f32 %v947, 0.2
    %v1035 = vmul.f32 %v1027, 0.2
    %v1036 = vmul.f32 %v1029, 0.2
    %v1037 = vmax.f32 %v945, %v1033
    %v1038 = vmax.f32 %v947, %v1034
    %v1039 = vmax.f32 %v1027, %v1035
    %v1040 = vmax.f32 %v1029, %v1036
    %v1041 = vpack.c.bf16 %v1037, %v1037
    %v1042 = vpack.c.bf16 %v1038, %v1038
    %v1043 = vpack.c.bf16 %v1039, %v1039
    %v1044 = vpack.c.bf16 %v1040, %v1040
    %s1045 = scalar_lea.vmem [#allocation5], 1024
    %v1046 = vld [vmem:[%s1045] sm:$0xff]
    %v1047 = vld [vmem:[%s1045 + $0x8] sm:$0xff]
    %v1048 = vld [vmem:[%s1045 + $0x10] sm:$0xff]
    %v1049 = vld [vmem:[%s1045 + $0x18] sm:$0xff]
    %v1050 = vld [vmem:[%s1045 + $0x20] sm:$0xff]
    %v1051 = vld [vmem:[%s1045 + $0x28] sm:$0xff]
    %v1052 = vld [vmem:[%s1045 + $0x30] sm:$0xff]
    %v1053 = vld [vmem:[%s1045 + $0x38] sm:$0xff]
    %v1054 = vld [vmem:[%s1045 + $0x40] sm:$0xff]
    %v1055 = vld [vmem:[%s1045 + $0x48] sm:$0xff]
    %v1056 = vld [vmem:[%s1045 + $0x50] sm:$0xff]
    %v1057 = vld [vmem:[%s1045 + $0x58] sm:$0xff]
    %v1058 = vld [vmem:[%s1045 + $0x60] sm:$0xff]
    %v1059 = vld [vmem:[%s1045 + $0x68] sm:$0xff]
    %v1060 = vld [vmem:[%s1045 + $0x70] sm:$0xff]
    %v1061 = vld [vmem:[%s1045 + $0x78] sm:$0xff]
    %v1062 = vld [vmem:[%s1045 + $0x80] sm:$0xff]
    %v1063 = vld [vmem:[%s1045 + $0x88] sm:$0xff]
    %v1064 = vld [vmem:[%s1045 + $0x90] sm:$0xff]
    %v1065 = vld [vmem:[%s1045 + $0x98] sm:$0xff]
    %v1066 = vld [vmem:[%s1045 + $0xa0] sm:$0xff]
    %v1067 = vld [vmem:[%s1045 + $0xa8] sm:$0xff]
    %v1068 = vld [vmem:[%s1045 + $0xb0] sm:$0xff]
    %v1069 = vld [vmem:[%s1045 + $0xb8] sm:$0xff]
    %v1070 = vld [vmem:[%s1045 + $0xc0] sm:$0xff]
    %v1071 = vld [vmem:[%s1045 + $0xc8] sm:$0xff]
    %v1072 = vld [vmem:[%s1045 + $0xd0] sm:$0xff]
    %v1073 = vld [vmem:[%s1045 + $0xd8] sm:$0xff]
    %v1074 = vld [vmem:[%s1045 + $0xe0] sm:$0xff]
    %v1075 = vld [vmem:[%s1045 + $0xe8] sm:$0xff]
    %v1076 = vld [vmem:[%s1045 + $0xf0] sm:$0xff]
    %v1077 = vld [vmem:[%s1045 + $0xf8] sm:$0xff]
    %v1078 = vld [vmem:[%s1045 + $0x100] sm:$0xff]
    %v1079 = vld [vmem:[%s1045 + $0x108] sm:$0xff]
    %v1080 = vld [vmem:[%s1045 + $0x110] sm:$0xff]
    %v1081 = vld [vmem:[%s1045 + $0x118] sm:$0xff]
    %v1082 = vld [vmem:[%s1045 + $0x120] sm:$0xff]
    %v1083 = vld [vmem:[%s1045 + $0x128] sm:$0xff]
    %v1084 = vld [vmem:[%s1045 + $0x130] sm:$0xff]
    %v1085 = vld [vmem:[%s1045 + $0x138] sm:$0xff]
    %v1086 = vld [vmem:[%s1045 + $0x140] sm:$0xff]
    %v1087 = vld [vmem:[%s1045 + $0x148] sm:$0xff]
    %v1088 = vld [vmem:[%s1045 + $0x150] sm:$0xff]
    %v1089 = vld [vmem:[%s1045 + $0x158] sm:$0xff]
    %v1090 = vld [vmem:[%s1045 + $0x160] sm:$0xff]
    %v1091 = vld [vmem:[%s1045 + $0x168] sm:$0xff]
    %v1092 = vld [vmem:[%s1045 + $0x170] sm:$0xff]
    %v1093 = vld [vmem:[%s1045 + $0x178] sm:$0xff]
    %v1094 = vld [vmem:[%s1045 + $0x180] sm:$0xff]
    %v1095 = vld [vmem:[%s1045 + $0x188] sm:$0xff]
    %v1096 = vld [vmem:[%s1045 + $0x190] sm:$0xff]
    %v1097 = vld [vmem:[%s1045 + $0x198] sm:$0xff]
    %v1098 = vld [vmem:[%s1045 + $0x1a0] sm:$0xff]
    %v1099 = vld [vmem:[%s1045 + $0x1a8] sm:$0xff]
    %v1100 = vld [vmem:[%s1045 + $0x1b0] sm:$0xff]
    %v1101 = vld [vmem:[%s1045 + $0x1b8] sm:$0xff]
    %v1102 = vld [vmem:[%s1045 + $0x1c0] sm:$0xff]
    %v1103 = vld [vmem:[%s1045 + $0x1c8] sm:$0xff]
    %v1104 = vld [vmem:[%s1045 + $0x1d0] sm:$0xff]
    %v1105 = vld [vmem:[%s1045 + $0x1d8] sm:$0xff]
    %v1106 = vld [vmem:[%s1045 + $0x1e0] sm:$0xff]
    %v1107 = vld [vmem:[%s1045 + $0x1e8] sm:$0xff]
    %v1108 = vld [vmem:[%s1045 + $0x1f0] sm:$0xff]
    %v1109 = vld [vmem:[%s1045 + $0x1f8] sm:$0xff]
    %v1110 = vld [vmem:[%s1045 + $0x200] sm:$0xff]
    %v1111 = vld [vmem:[%s1045 + $0x208] sm:$0xff]
    %v1112 = vld [vmem:[%s1045 + $0x210] sm:$0xff]
    %v1113 = vld [vmem:[%s1045 + $0x218] sm:$0xff]
    %v1114 = vld [vmem:[%s1045 + $0x220] sm:$0xff]
    %v1115 = vld [vmem:[%s1045 + $0x228] sm:$0xff]
    %v1116 = vld [vmem:[%s1045 + $0x230] sm:$0xff]
    %v1117 = vld [vmem:[%s1045 + $0x238] sm:$0xff]
    %v1118 = vld [vmem:[%s1045 + $0x240] sm:$0xff]
    %v1119 = vld [vmem:[%s1045 + $0x248] sm:$0xff]
    %v1120 = vld [vmem:[%s1045 + $0x250] sm:$0xff]
    %v1121 = vld [vmem:[%s1045 + $0x258] sm:$0xff]
    %v1122 = vld [vmem:[%s1045 + $0x260] sm:$0xff]
    %v1123 = vld [vmem:[%s1045 + $0x268] sm:$0xff]
    %v1124 = vld [vmem:[%s1045 + $0x270] sm:$0xff]
    %v1125 = vld [vmem:[%s1045 + $0x278] sm:$0xff]
    %v1126 = vld [vmem:[%s1045 + $0x280] sm:$0xff]
    %v1127 = vld [vmem:[%s1045 + $0x288] sm:$0xff]
    %v1128 = vld [vmem:[%s1045 + $0x290] sm:$0xff]
    %v1129 = vld [vmem:[%s1045 + $0x298] sm:$0xff]
    %v1130 = vld [vmem:[%s1045 + $0x2a0] sm:$0xff]
    %v1131 = vld [vmem:[%s1045 + $0x2a8] sm:$0xff]
    %v1132 = vld [vmem:[%s1045 + $0x2b0] sm:$0xff]
    %v1133 = vld [vmem:[%s1045 + $0x2b8] sm:$0xff]
    %v1134 = vld [vmem:[%s1045 + $0x2c0] sm:$0xff]
    %v1135 = vld [vmem:[%s1045 + $0x2c8] sm:$0xff]
    %v1136 = vld [vmem:[%s1045 + $0x2d0] sm:$0xff]
    %v1137 = vld [vmem:[%s1045 + $0x2d8] sm:$0xff]
    %v1138 = vld [vmem:[%s1045 + $0x2e0] sm:$0xff]
    %v1139 = vld [vmem:[%s1045 + $0x2e8] sm:$0xff]
    %v1140 = vld [vmem:[%s1045 + $0x2f0] sm:$0xff]
    %v1141 = vld [vmem:[%s1045 + $0x2f8] sm:$0xff]
    %v1142 = vld [vmem:[%s1045 + $0x300] sm:$0xff]
    %v1143 = vld [vmem:[%s1045 + $0x308] sm:$0xff]
    %v1144 = vld [vmem:[%s1045 + $0x310] sm:$0xff]
    %v1145 = vld [vmem:[%s1045 + $0x318] sm:$0xff]
    %v1146 = vld [vmem:[%s1045 + $0x320] sm:$0xff]
    %v1147 = vld [vmem:[%s1045 + $0x328] sm:$0xff]
    %v1148 = vld [vmem:[%s1045 + $0x330] sm:$0xff]
    %v1149 = vld [vmem:[%s1045 + $0x338] sm:$0xff]
    %v1150 = vld [vmem:[%s1045 + $0x340] sm:$0xff]
    %v1151 = vld [vmem:[%s1045 + $0x348] sm:$0xff]
    %v1152 = vld [vmem:[%s1045 + $0x350] sm:$0xff]
    %v1153 = vld [vmem:[%s1045 + $0x358] sm:$0xff]
    %v1154 = vld [vmem:[%s1045 + $0x360] sm:$0xff]
    %v1155 = vld [vmem:[%s1045 + $0x368] sm:$0xff]
    %v1156 = vld [vmem:[%s1045 + $0x370] sm:$0xff]
    %v1157 = vld [vmem:[%s1045 + $0x378] sm:$0xff]
    %v1158 = vld [vmem:[%s1045 + $0x380] sm:$0xff]
    %v1159 = vld [vmem:[%s1045 + $0x388] sm:$0xff]
    %v1160 = vld [vmem:[%s1045 + $0x390] sm:$0xff]
    %v1161 = vld [vmem:[%s1045 + $0x398] sm:$0xff]
    %v1162 = vld [vmem:[%s1045 + $0x3a0] sm:$0xff]
    %v1163 = vld [vmem:[%s1045 + $0x3a8] sm:$0xff]
    %v1164 = vld [vmem:[%s1045 + $0x3b0] sm:$0xff]
    %v1165 = vld [vmem:[%s1045 + $0x3b8] sm:$0xff]
    %v1166 = vld [vmem:[%s1045 + $0x3c0] sm:$0xff]
    %v1167 = vld [vmem:[%s1045 + $0x3c8] sm:$0xff]
    %v1168 = vld [vmem:[%s1045 + $0x3d0] sm:$0xff]
    %v1169 = vld [vmem:[%s1045 + $0x3d8] sm:$0xff]
    %v1170 = vld [vmem:[%s1045 + $0x3e0] sm:$0xff]
    %v1171 = vld [vmem:[%s1045 + $0x3e8] sm:$0xff]
    %v1172 = vld [vmem:[%s1045 + $0x3f0] sm:$0xff]
    %v1173 = vld [vmem:[%s1045 + $0x3f8] sm:$0xff]
    %s1174 = scalar_lea.vmem [#allocation7], 4
    %v1175 = vld [vmem:[%s1174] sm:$0xf]
    %v1177 = vlaneseq
    %v1178 = vshrl.u32 %v1177, 7
    %v1179 = vsub.s32 0, %v1178
    %v1180 = vrot.slane %v1175, %v1179
    %v1181 = vlaneseq
    %v1182 = vshrl.u32 %v1181, 7
    %v1183 = vsub.s32 1, %v1182
    %v1184 = vrot.slane %v1175, %v1183
    %v1185 = vlaneseq
    %v1186 = vshrl.u32 %v1185, 7
    %v1187 = vsub.s32 2, %v1186
    %v1188 = vrot.slane %v1175, %v1187
    %v1189 = vlaneseq
    %v1190 = vshrl.u32 %v1189, 7
    %v1191 = vsub.s32 3, %v1190
    %v1192 = vrot.slane %v1175, %v1191
    %v1325 = vunpack.c.l.b16 %v1046
    %v1326 = vunpack.c.h.b16 %v1046
    %v1327 = vunpack.c.l.b16 %v1047
    %v1328 = vunpack.c.h.b16 %v1047
    %v1329 = vunpack.c.l.b16 %v1048
    %v1330 = vunpack.c.h.b16 %v1048
    %v1331 = vunpack.c.l.b16 %v1049
    %v1332 = vunpack.c.h.b16 %v1049
    %v1333 = vunpack.c.l.b16 %v1050
    %v1334 = vunpack.c.h.b16 %v1050
    %v1335 = vunpack.c.l.b16 %v1051
    %v1336 = vunpack.c.h.b16 %v1051
    %v1337 = vunpack.c.l.b16 %v1052
    %v1338 = vunpack.c.h.b16 %v1052
    %v1339 = vunpack.c.l.b16 %v1053
    %v1340 = vunpack.c.h.b16 %v1053
    %v1341 = vunpack.c.l.b16 %v1054
    %v1342 = vunpack.c.h.b16 %v1054
    %v1343 = vunpack.c.l.b16 %v1055
    %v1344 = vunpack.c.h.b16 %v1055
    %v1345 = vunpack.c.l.b16 %v1056
    %v1346 = vunpack.c.h.b16 %v1056
    %v1347 = vunpack.c.l.b16 %v1057
    %v1348 = vunpack.c.h.b16 %v1057
    %v1349 = vunpack.c.l.b16 %v1058
    %v1350 = vunpack.c.h.b16 %v1058
    %v1351 = vunpack.c.l.b16 %v1059
    %v1352 = vunpack.c.h.b16 %v1059
    %v1353 = vunpack.c.l.b16 %v1060
    %v1354 = vunpack.c.h.b16 %v1060
    %v1355 = vunpack.c.l.b16 %v1061
    %v1356 = vunpack.c.h.b16 %v1061
    %v1357 = vunpack.c.l.b16 %v1062
    %v1358 = vunpack.c.h.b16 %v1062
    %v1359 = vunpack.c.l.b16 %v1063
    %v1360 = vunpack.c.h.b16 %v1063
    %v1361 = vunpack.c.l.b16 %v1064
    %v1362 = vunpack.c.h.b16 %v1064
    %v1363 = vunpack.c.l.b16 %v1065
    %v1364 = vunpack.c.h.b16 %v1065
    %v1365 = vunpack.c.l.b16 %v1066
    %v1366 = vunpack.c.h.b16 %v1066
    %v1367 = vunpack.c.l.b16 %v1067
    %v1368 = vunpack.c.h.b16 %v1067
    %v1369 = vunpack.c.l.b16 %v1068
    %v1370 = vunpack.c.h.b16 %v1068
    %v1371 = vunpack.c.l.b16 %v1069
    %v1372 = vunpack.c.h.b16 %v1069
    %v1373 = vunpack.c.l.b16 %v1070
    %v1374 = vunpack.c.h.b16 %v1070
    %v1375 = vunpack.c.l.b16 %v1071
    %v1376 = vunpack.c.h.b16 %v1071
    %v1377 = vunpack.c.l.b16 %v1072
    %v1378 = vunpack.c.h.b16 %v1072
    %v1379 = vunpack.c.l.b16 %v1073
    %v1380 = vunpack.c.h.b16 %v1073
    %v1381 = vunpack.c.l.b16 %v1074
    %v1382 = vunpack.c.h.b16 %v1074
    %v1383 = vunpack.c.l.b16 %v1075
    %v1384 = vunpack.c.h.b16 %v1075
    %v1385 = vunpack.c.l.b16 %v1076
    %v1386 = vunpack.c.h.b16 %v1076
    %v1387 = vunpack.c.l.b16 %v1077
    %v1388 = vunpack.c.h.b16 %v1077
    %v1389 = vunpack.c.l.b16 %v1078
    %v1390 = vunpack.c.h.b16 %v1078
    %v1391 = vunpack.c.l.b16 %v1079
    %v1392 = vunpack.c.h.b16 %v1079
    %v1393 = vunpack.c.l.b16 %v1080
    %v1394 = vunpack.c.h.b16 %v1080
    %v1395 = vunpack.c.l.b16 %v1081
    %v1396 = vunpack.c.h.b16 %v1081
    %v1397 = vunpack.c.l.b16 %v1082
    %v1398 = vunpack.c.h.b16 %v1082
    %v1399 = vunpack.c.l.b16 %v1083
    %v1400 = vunpack.c.h.b16 %v1083
    %v1401 = vunpack.c.l.b16 %v1084
    %v1402 = vunpack.c.h.b16 %v1084
    %v1403 = vunpack.c.l.b16 %v1085
    %v1404 = vunpack.c.h.b16 %v1085
    %v1405 = vunpack.c.l.b16 %v1086
    %v1406 = vunpack.c.h.b16 %v1086
    %v1407 = vunpack.c.l.b16 %v1087
    %v1408 = vunpack.c.h.b16 %v1087
    %v1409 = vunpack.c.l.b16 %v1088
    %v1410 = vunpack.c.h.b16 %v1088
    %v1411 = vunpack.c.l.b16 %v1089
    %v1412 = vunpack.c.h.b16 %v1089
    %v1413 = vunpack.c.l.b16 %v1090
    %v1414 = vunpack.c.h.b16 %v1090
    %v1415 = vunpack.c.l.b16 %v1091
    %v1416 = vunpack.c.h.b16 %v1091
    %v1417 = vunpack.c.l.b16 %v1092
    %v1418 = vunpack.c.h.b16 %v1092
    %v1419 = vunpack.c.l.b16 %v1093
    %v1420 = vunpack.c.h.b16 %v1093
    %v1421 = vunpack.c.l.b16 %v1094
    %v1422 = vunpack.c.h.b16 %v1094
    %v1423 = vunpack.c.l.b16 %v1095
    %v1424 = vunpack.c.h.b16 %v1095
    %v1425 = vunpack.c.l.b16 %v1096
    %v1426 = vunpack.c.h.b16 %v1096
    %v1427 = vunpack.c.l.b16 %v1097
    %v1428 = vunpack.c.h.b16 %v1097
    %v1429 = vunpack.c.l.b16 %v1098
    %v1430 = vunpack.c.h.b16 %v1098
    %v1431 = vunpack.c.l.b16 %v1099
    %v1432 = vunpack.c.h.b16 %v1099
    %v1433 = vunpack.c.l.b16 %v1100
    %v1434 = vunpack.c.h.b16 %v1100
    %v1435 = vunpack.c.l.b16 %v1101
    %v1436 = vunpack.c.h.b16 %v1101
    %v1437 = vunpack.c.l.b16 %v1102
    %v1438 = vunpack.c.h.b16 %v1102
    %v1439 = vunpack.c.l.b16 %v1103
    %v1440 = vunpack.c.h.b16 %v1103
    %v1441 = vunpack.c.l.b16 %v1104
    %v1442 = vunpack.c.h.b16 %v1104
    %v1443 = vunpack.c.l.b16 %v1105
    %v1444 = vunpack.c.h.b16 %v1105
    %v1445 = vunpack.c.l.b16 %v1106
    %v1446 = vunpack.c.h.b16 %v1106
    %v1447 = vunpack.c.l.b16 %v1107
    %v1448 = vunpack.c.h.b16 %v1107
    %v1449 = vunpack.c.l.b16 %v1108
    %v1450 = vunpack.c.h.b16 %v1108
    %v1451 = vunpack.c.l.b16 %v1109
    %v1452 = vunpack.c.h.b16 %v1109
    %v1453 = vunpack.c.l.b16 %v1110
    %v1454 = vunpack.c.h.b16 %v1110
    %v1455 = vunpack.c.l.b16 %v1111
    %v1456 = vunpack.c.h.b16 %v1111
    %v1457 = vunpack.c.l.b16 %v1112
    %v1458 = vunpack.c.h.b16 %v1112
    %v1459 = vunpack.c.l.b16 %v1113
    %v1460 = vunpack.c.h.b16 %v1113
    %v1461 = vunpack.c.l.b16 %v1114
    %v1462 = vunpack.c.h.b16 %v1114
    %v1463 = vunpack.c.l.b16 %v1115
    %v1464 = vunpack.c.h.b16 %v1115
    %v1465 = vunpack.c.l.b16 %v1116
    %v1466 = vunpack.c.h.b16 %v1116
    %v1467 = vunpack.c.l.b16 %v1117
    %v1468 = vunpack.c.h.b16 %v1117
    %v1469 = vunpack.c.l.b16 %v1118
    %v1470 = vunpack.c.h.b16 %v1118
    %v1471 = vunpack.c.l.b16 %v1119
    %v1472 = vunpack.c.h.b16 %v1119
    %v1473 = vunpack.c.l.b16 %v1120
    %v1474 = vunpack.c.h.b16 %v1120
    %v1475 = vunpack.c.l.b16 %v1121
    %v1476 = vunpack.c.h.b16 %v1121
    %v1477 = vunpack.c.l.b16 %v1122
    %v1478 = vunpack.c.h.b16 %v1122
    %v1479 = vunpack.c.l.b16 %v1123
    %v1480 = vunpack.c.h.b16 %v1123
    %v1481 = vunpack.c.l.b16 %v1124
    %v1482 = vunpack.c.h.b16 %v1124
    %v1483 = vunpack.c.l.b16 %v1125
    %v1484 = vunpack.c.h.b16 %v1125
    %v1485 = vunpack.c.l.b16 %v1126
    %v1486 = vunpack.c.h.b16 %v1126
    %v1487 = vunpack.c.l.b16 %v1127
    %v1488 = vunpack.c.h.b16 %v1127
    %v1489 = vunpack.c.l.b16 %v1128
    %v1490 = vunpack.c.h.b16 %v1128
    %v1491 = vunpack.c.l.b16 %v1129
    %v1492 = vunpack.c.h.b16 %v1129
    %v1493 = vunpack.c.l.b16 %v1130
    %v1494 = vunpack.c.h.b16 %v1130
    %v1495 = vunpack.c.l.b16 %v1131
    %v1496 = vunpack.c.h.b16 %v1131
    %v1497 = vunpack.c.l.b16 %v1132
    %v1498 = vunpack.c.h.b16 %v1132
    %v1499 = vunpack.c.l.b16 %v1133
    %v1500 = vunpack.c.h.b16 %v1133
    %v1501 = vunpack.c.l.b16 %v1134
    %v1502 = vunpack.c.h.b16 %v1134
    %v1503 = vunpack.c.l.b16 %v1135
    %v1504 = vunpack.c.h.b16 %v1135
    %v1505 = vunpack.c.l.b16 %v1136
    %v1506 = vunpack.c.h.b16 %v1136
    %v1507 = vunpack.c.l.b16 %v1137
    %v1508 = vunpack.c.h.b16 %v1137
    %v1509 = vunpack.c.l.b16 %v1138
    %v1510 = vunpack.c.h.b16 %v1138
    %v1511 = vunpack.c.l.b16 %v1139
    %v1512 = vunpack.c.h.b16 %v1139
    %v1513 = vunpack.c.l.b16 %v1140
    %v1514 = vunpack.c.h.b16 %v1140
    %v1515 = vunpack.c.l.b16 %v1141
    %v1516 = vunpack.c.h.b16 %v1141
    %v1517 = vunpack.c.l.b16 %v1142
    %v1518 = vunpack.c.h.b16 %v1142
    %v1519 = vunpack.c.l.b16 %v1143
    %v1520 = vunpack.c.h.b16 %v1143
    %v1521 = vunpack.c.l.b16 %v1144
    %v1522 = vunpack.c.h.b16 %v1144
    %v1523 = vunpack.c.l.b16 %v1145
    %v1524 = vunpack.c.h.b16 %v1145
    %v1525 = vunpack.c.l.b16 %v1146
    %v1526 = vunpack.c.h.b16 %v1146
    %v1527 = vunpack.c.l.b16 %v1147
    %v1528 = vunpack.c.h.b16 %v1147
    %v1529 = vunpack.c.l.b16 %v1148
    %v1530 = vunpack.c.h.b16 %v1148
    %v1531 = vunpack.c.l.b16 %v1149
    %v1532 = vunpack.c.h.b16 %v1149
    %v1533 = vunpack.c.l.b16 %v1150
    %v1534 = vunpack.c.h.b16 %v1150
    %v1535 = vunpack.c.l.b16 %v1151
    %v1536 = vunpack.c.h.b16 %v1151
    %v1537 = vunpack.c.l.b16 %v1152
    %v1538 = vunpack.c.h.b16 %v1152
    %v1539 = vunpack.c.l.b16 %v1153
    %v1540 = vunpack.c.h.b16 %v1153
    %v1541 = vunpack.c.l.b16 %v1154
    %v1542 = vunpack.c.h.b16 %v1154
    %v1543 = vunpack.c.l.b16 %v1155
    %v1544 = vunpack.c.h.b16 %v1155
    %v1545 = vunpack.c.l.b16 %v1156
    %v1546 = vunpack.c.h.b16 %v1156
    %v1547 = vunpack.c.l.b16 %v1157
    %v1548 = vunpack.c.h.b16 %v1157
    %v1549 = vunpack.c.l.b16 %v1158
    %v1550 = vunpack.c.h.b16 %v1158
    %v1551 = vunpack.c.l.b16 %v1159
    %v1552 = vunpack.c.h.b16 %v1159
    %v1553 = vunpack.c.l.b16 %v1160
    %v1554 = vunpack.c.h.b16 %v1160
    %v1555 = vunpack.c.l.b16 %v1161
    %v1556 = vunpack.c.h.b16 %v1161
    %v1557 = vunpack.c.l.b16 %v1162
    %v1558 = vunpack.c.h.b16 %v1162
    %v1559 = vunpack.c.l.b16 %v1163
    %v1560 = vunpack.c.h.b16 %v1163
    %v1561 = vunpack.c.l.b16 %v1164
    %v1562 = vunpack.c.h.b16 %v1164
    %v1563 = vunpack.c.l.b16 %v1165
    %v1564 = vunpack.c.h.b16 %v1165
    %v1565 = vunpack.c.l.b16 %v1166
    %v1566 = vunpack.c.h.b16 %v1166
    %v1567 = vunpack.c.l.b16 %v1167
    %v1568 = vunpack.c.h.b16 %v1167
    %v1569 = vunpack.c.l.b16 %v1168
    %v1570 = vunpack.c.h.b16 %v1168
    %v1571 = vunpack.c.l.b16 %v1169
    %v1572 = vunpack.c.h.b16 %v1169
    %v1573 = vunpack.c.l.b16 %v1170
    %v1574 = vunpack.c.h.b16 %v1170
    %v1575 = vunpack.c.l.b16 %v1171
    %v1576 = vunpack.c.h.b16 %v1171
    %v1577 = vunpack.c.l.b16 %v1172
    %v1578 = vunpack.c.h.b16 %v1172
    %v1579 = vunpack.c.l.b16 %v1173
    %v1580 = vunpack.c.h.b16 %v1173
    %v1581 = vpack.c.b16 %v1329, %v1325
    %v1582 = vpack.c.b16 %v1330, %v1326
    %v1583 = vpack.c.b16 %v1331, %v1327
    %v1584 = vpack.c.b16 %v1332, %v1328
    %v1585 = vpack.c.b16 %v1337, %v1333
    %v1586 = vpack.c.b16 %v1338, %v1334
    %v1587 = vpack.c.b16 %v1339, %v1335
    %v1588 = vpack.c.b16 %v1340, %v1336
    %v1589 = vpack.c.b16 %v1345, %v1341
    %v1590 = vpack.c.b16 %v1346, %v1342
    %v1591 = vpack.c.b16 %v1347, %v1343
    %v1592 = vpack.c.b16 %v1348, %v1344
    %v1593 = vpack.c.b16 %v1353, %v1349
    %v1594 = vpack.c.b16 %v1354, %v1350
    %v1595 = vpack.c.b16 %v1355, %v1351
    %v1596 = vpack.c.b16 %v1356, %v1352
    %v1597 = vpack.c.b16 %v1361, %v1357
    %v1598 = vpack.c.b16 %v1362, %v1358
    %v1599 = vpack.c.b16 %v1363, %v1359
    %v1600 = vpack.c.b16 %v1364, %v1360
    %v1601 = vpack.c.b16 %v1369, %v1365
    %v1602 = vpack.c.b16 %v1370, %v1366
    %v1603 = vpack.c.b16 %v1371, %v1367
    %v1604 = vpack.c.b16 %v1372, %v1368
    %v1605 = vpack.c.b16 %v1377, %v1373
    %v1606 = vpack.c.b16 %v1378, %v1374
    %v1607 = vpack.c.b16 %v1379, %v1375
    %v1608 = vpack.c.b16 %v1380, %v1376
    %v1609 = vpack.c.b16 %v1385, %v1381
    %v1610 = vpack.c.b16 %v1386, %v1382
    %v1611 = vpack.c.b16 %v1387, %v1383
    %v1612 = vpack.c.b16 %v1388, %v1384
    %v1613 = vpack.c.b16 %v1393, %v1389
    %v1614 = vpack.c.b16 %v1394, %v1390
    %v1615 = vpack.c.b16 %v1395, %v1391
    %v1616 = vpack.c.b16 %v1396, %v1392
    %v1617 = vpack.c.b16 %v1401, %v1397
    %v1618 = vpack.c.b16 %v1402, %v1398
    %v1619 = vpack.c.b16 %v1403, %v1399
    %v1620 = vpack.c.b16 %v1404, %v1400
    %v1621 = vpack.c.b16 %v1409, %v1405
    %v1622 = vpack.c.b16 %v1410, %v1406
    %v1623 = vpack.c.b16 %v1411, %v1407
    %v1624 = vpack.c.b16 %v1412, %v1408
    %v1625 = vpack.c.b16 %v1417, %v1413
    %v1626 = vpack.c.b16 %v1418, %v1414
    %v1627 = vpack.c.b16 %v1419, %v1415
    %v1628 = vpack.c.b16 %v1420, %v1416
    %v1629 = vpack.c.b16 %v1425, %v1421
    %v1630 = vpack.c.b16 %v1426, %v1422
    %v1631 = vpack.c.b16 %v1427, %v1423
    %v1632 = vpack.c.b16 %v1428, %v1424
    %v1633 = vpack.c.b16 %v1433, %v1429
    %v1634 = vpack.c.b16 %v1434, %v1430
    %v1635 = vpack.c.b16 %v1435, %v1431
    %v1636 = vpack.c.b16 %v1436, %v1432
    %v1637 = vpack.c.b16 %v1441, %v1437
    %v1638 = vpack.c.b16 %v1442, %v1438
    %v1639 = vpack.c.b16 %v1443, %v1439
    %v1640 = vpack.c.b16 %v1444, %v1440
    %v1641 = vpack.c.b16 %v1449, %v1445
    %v1642 = vpack.c.b16 %v1450, %v1446
    %v1643 = vpack.c.b16 %v1451, %v1447
    %v1644 = vpack.c.b16 %v1452, %v1448
    %v1645 = vpack.c.b16 %v1457, %v1453
    %v1646 = vpack.c.b16 %v1458, %v1454
    %v1647 = vpack.c.b16 %v1459, %v1455
    %v1648 = vpack.c.b16 %v1460, %v1456
    %v1649 = vpack.c.b16 %v1465, %v1461
    %v1650 = vpack.c.b16 %v1466, %v1462
    %v1651 = vpack.c.b16 %v1467, %v1463
    %v1652 = vpack.c.b16 %v1468, %v1464
    %v1653 = vpack.c.b16 %v1473, %v1469
    %v1654 = vpack.c.b16 %v1474, %v1470
    %v1655 = vpack.c.b16 %v1475, %v1471
    %v1656 = vpack.c.b16 %v1476, %v1472
    %v1657 = vpack.c.b16 %v1481, %v1477
    %v1658 = vpack.c.b16 %v1482, %v1478
    %v1659 = vpack.c.b16 %v1483, %v1479
    %v1660 = vpack.c.b16 %v1484, %v1480
    %v1661 = vpack.c.b16 %v1489, %v1485
    %v1662 = vpack.c.b16 %v1490, %v1486
    %v1663 = vpack.c.b16 %v1491, %v1487
    %v1664 = vpack.c.b16 %v1492, %v1488
    %v1665 = vpack.c.b16 %v1497, %v1493
    %v1666 = vpack.c.b16 %v1498, %v1494
    %v1667 = vpack.c.b16 %v1499, %v1495
    %v1668 = vpack.c.b16 %v1500, %v1496
    %v1669 = vpack.c.b16 %v1505, %v1501
    %v1670 = vpack.c.b16 %v1506, %v1502
    %v1671 = vpack.c.b16 %v1507, %v1503
    %v1672 = vpack.c.b16 %v1508, %v1504
    %v1673 = vpack.c.b16 %v1513, %v1509
    %v1674 = vpack.c.b16 %v1514, %v1510
    %v1675 = vpack.c.b16 %v1515, %v1511
    %v1676 = vpack.c.b16 %v1516, %v1512
    %v1677 = vpack.c.b16 %v1521, %v1517
    %v1678 = vpack.c.b16 %v1522, %v1518
    %v1679 = vpack.c.b16 %v1523, %v1519
    %v1680 = vpack.c.b16 %v1524, %v1520
    %v1681 = vpack.c.b16 %v1529, %v1525
    %v1682 = vpack.c.b16 %v1530, %v1526
    %v1683 = vpack.c.b16 %v1531, %v1527
    %v1684 = vpack.c.b16 %v1532, %v1528
    %v1685 = vpack.c.b16 %v1537, %v1533
    %v1686 = vpack.c.b16 %v1538, %v1534
    %v1687 = vpack.c.b16 %v1539, %v1535
    %v1688 = vpack.c.b16 %v1540, %v1536
    %v1689 = vpack.c.b16 %v1545, %v1541
    %v1690 = vpack.c.b16 %v1546, %v1542
    %v1691 = vpack.c.b16 %v1547, %v1543
    %v1692 = vpack.c.b16 %v1548, %v1544
    %v1693 = vpack.c.b16 %v1553, %v1549
    %v1694 = vpack.c.b16 %v1554, %v1550
    %v1695 = vpack.c.b16 %v1555, %v1551
    %v1696 = vpack.c.b16 %v1556, %v1552
    %v1697 = vpack.c.b16 %v1561, %v1557
    %v1698 = vpack.c.b16 %v1562, %v1558
    %v1699 = vpack.c.b16 %v1563, %v1559
    %v1700 = vpack.c.b16 %v1564, %v1560
    %v1701 = vpack.c.b16 %v1569, %v1565
    %v1702 = vpack.c.b16 %v1570, %v1566
    %v1703 = vpack.c.b16 %v1571, %v1567
    %v1704 = vpack.c.b16 %v1572, %v1568
    %v1705 = vpack.c.b16 %v1577, %v1573
    %v1706 = vpack.c.b16 %v1578, %v1574
    %v1707 = vpack.c.b16 %v1579, %v1575
    %v1708 = vpack.c.b16 %v1580, %v1576
    %1837 = vmatprep.subr.bf16.mxu0 %v1582
    %1838 = vmatpush1.bf16.msra.mxu0 %v1581
    %1839 = vmatprep.subr.bf16.mxu0 %v1586
    %1840 = vmatpush1.bf16.msra.mxu0 %v1585
    %1841 = vmatprep.subr.bf16.mxu0 %v1590
    %1842 = vmatpush1.bf16.msra.mxu0 %v1589
    %1843 = vmatprep.subr.bf16.mxu0 %v1594
    %1844 = vmatpush1.bf16.msra.mxu0 %v1593
    %1845 = vmatprep.subr.bf16.mxu0 %v1598
    %1846 = vmatpush1.bf16.msra.mxu0 %v1597
    %1847 = vmatprep.subr.bf16.mxu0 %v1602
    %1848 = vmatpush1.bf16.msra.mxu0 %v1601
    %1849 = vmatprep.subr.bf16.mxu0 %v1606
    %1850 = vmatpush1.bf16.msra.mxu0 %v1605
    %1851 = vmatprep.subr.bf16.mxu0 %v1610
    %1852 = vmatpush1.bf16.msra.mxu0 %v1609
    %1853 = vmatprep.subr.bf16.mxu0 %v1614
    %1854 = vmatpush1.bf16.msra.mxu0 %v1613
    %1855 = vmatprep.subr.bf16.mxu0 %v1618
    %1856 = vmatpush1.bf16.msra.mxu0 %v1617
    %1857 = vmatprep.subr.bf16.mxu0 %v1622
    %1858 = vmatpush1.bf16.msra.mxu0 %v1621
    %1859 = vmatprep.subr.bf16.mxu0 %v1626
    %1860 = vmatpush1.bf16.msra.mxu0 %v1625
    %1861 = vmatprep.subr.bf16.mxu0 %v1630
    %1862 = vmatpush1.bf16.msra.mxu0 %v1629
    %1863 = vmatprep.subr.bf16.mxu0 %v1634
    %1864 = vmatpush1.bf16.msra.mxu0 %v1633
    %1865 = vmatprep.subr.bf16.mxu0 %v1638
    %1866 = vmatpush1.bf16.msra.mxu0 %v1637
    %1867 = vmatprep.subr.bf16.mxu0 %v1642
    %1868 = vmatpush1.bf16.msra.mxu0 %v1641
    %1869 = vmatprep.mubr.bf16.mxu0 %v1042
    %1870 = vmatmul.mubr.bf16.gmra.mrb[0].mxu0 %v1041
    %v1871 = vpop.f32.mrb[0].mxu0
    %v1872 = vadd.f32 %v1180, %v1871
    %v1873 = vpop.f32.mrb[0].mxu0
    %v1874 = vadd.f32 %v1184, %v1873
    %v1875 = vpop.f32.mrb[0].mxu0
    %v1876 = vpop.f32.mrb[0].mxu0
    %1877 = vdwg.mxu0
    %1878 = vmatprep.subr.bf16.mxu0 %v1646
    %1879 = vmatpush1.bf16.msra.mxu0 %v1645
    %1880 = vmatprep.subr.bf16.mxu0 %v1650
    %1881 = vmatpush1.bf16.msra.mxu0 %v1649
    %1882 = vmatprep.subr.bf16.mxu0 %v1654
    %1883 = vmatpush1.bf16.msra.mxu0 %v1653
    %1884 = vmatprep.subr.bf16.mxu0 %v1658
    %1885 = vmatpush1.bf16.msra.mxu0 %v1657
    %1886 = vmatprep.subr.bf16.mxu0 %v1662
    %1887 = vmatpush1.bf16.msra.mxu0 %v1661
    %1888 = vmatprep.subr.bf16.mxu0 %v1666
    %1889 = vmatpush1.bf16.msra.mxu0 %v1665
    %1890 = vmatprep.subr.bf16.mxu0 %v1670
    %1891 = vmatpush1.bf16.msra.mxu0 %v1669
    %1892 = vmatprep.subr.bf16.mxu0 %v1674
    %1893 = vmatpush1.bf16.msra.mxu0 %v1673
    %1894 = vmatprep.subr.bf16.mxu0 %v1678
    %1895 = vmatpush1.bf16.msra.mxu0 %v1677
    %1896 = vmatprep.subr.bf16.mxu0 %v1682
    %1897 = vmatpush1.bf16.msra.mxu0 %v1681
    %1898 = vmatprep.subr.bf16.mxu0 %v1686
    %1899 = vmatpush1.bf16.msra.mxu0 %v1685
    %1900 = vmatprep.subr.bf16.mxu0 %v1690
    %1901 = vmatpush1.bf16.msra.mxu0 %v1689
    %1902 = vmatprep.subr.bf16.mxu0 %v1694
    %1903 = vmatpush1.bf16.msra.mxu0 %v1693
    %1904 = vmatprep.subr.bf16.mxu0 %v1698
    %1905 = vmatpush1.bf16.msra.mxu0 %v1697
    %1906 = vmatprep.subr.bf16.mxu0 %v1702
    %1907 = vmatpush1.bf16.msra.mxu0 %v1701
    %1908 = vmatprep.subr.bf16.mxu0 %v1706
    %1909 = vmatpush1.bf16.msra.mxu0 %v1705
    %1910 = vmatprep.mubr.bf16.mxu0 %v1044
    %1911 = vmatmul.mubr.bf16.gmra.mrb[0].mxu0 %v1043
    %v1912 = vpop.f32.mrb[0].mxu0
    %v1913 = vadd.f32 %v1872, %v1912
    %v1914 = vpop.f32.mrb[0].mxu0
    %v1915 = vadd.f32 %v1874, %v1914
    %v1916 = vpop.f32.mrb[0].mxu0
    %v1917 = vpop.f32.mrb[0].mxu0
    %1918 = vdwg.mxu0
    %1919 = vmatprep.subr.bf16.mxu0 %v1584
    %1920 = vmatpush1.bf16.msra.mxu0 %v1583
    %1921 = vmatprep.subr.bf16.mxu0 %v1588
    %1922 = vmatpush1.bf16.msra.mxu0 %v1587
    %1923 = vmatprep.subr.bf16.mxu0 %v1592
    %1924 = vmatpush1.bf16.msra.mxu0 %v1591
    %1925 = vmatprep.subr.bf16.mxu0 %v1596
    %1926 = vmatpush1.bf16.msra.mxu0 %v1595
    %1927 = vmatprep.subr.bf16.mxu0 %v1600
    %1928 = vmatpush1.bf16.msra.mxu0 %v1599
    %1929 = vmatprep.subr.bf16.mxu0 %v1604
    %1930 = vmatpush1.bf16.msra.mxu0 %v1603
    %1931 = vmatprep.subr.bf16.mxu0 %v1608
    %1932 = vmatpush1.bf16.msra.mxu0 %v1607
    %1933 = vmatprep.subr.bf16.mxu0 %v1612
    %1934 = vmatpush1.bf16.msra.mxu0 %v1611
    %1935 = vmatprep.subr.bf16.mxu0 %v1616
    %1936 = vmatpush1.bf16.msra.mxu0 %v1615
    %1937 = vmatprep.subr.bf16.mxu0 %v1620
    %1938 = vmatpush1.bf16.msra.mxu0 %v1619
    %1939 = vmatprep.subr.bf16.mxu0 %v1624
    %1940 = vmatpush1.bf16.msra.mxu0 %v1623
    %1941 = vmatprep.subr.bf16.mxu0 %v1628
    %1942 = vmatpush1.bf16.msra.mxu0 %v1627
    %1943 = vmatprep.subr.bf16.mxu0 %v1632
    %1944 = vmatpush1.bf16.msra.mxu0 %v1631
    %1945 = vmatprep.subr.bf16.mxu0 %v1636
    %1946 = vmatpush1.bf16.msra.mxu0 %v1635
    %1947 = vmatprep.subr.bf16.mxu0 %v1640
    %1948 = vmatpush1.bf16.msra.mxu0 %v1639
    %1949 = vmatprep.subr.bf16.mxu0 %v1644
    %1950 = vmatpush1.bf16.msra.mxu0 %v1643
    %1951 = vmatprep.mubr.bf16.mxu0 %v1042
    %1952 = vmatmul.mubr.bf16.gmra.mrb[0].mxu0 %v1041
    %v1953 = vpop.f32.mrb[0].mxu0
    %v1954 = vadd.f32 %v1188, %v1953
    %v1955 = vpop.f32.mrb[0].mxu0
    %v1956 = vadd.f32 %v1192, %v1955
    %v1957 = vpop.f32.mrb[0].mxu0
    %v1958 = vpop.f32.mrb[0].mxu0
    %1959 = vdwg.mxu0
    %1960 = vmatprep.subr.bf16.mxu0 %v1648
    %1961 = vmatpush1.bf16.msra.mxu0 %v1647
    %1962 = vmatprep.subr.bf16.mxu0 %v1652
    %1963 = vmatpush1.bf16.msra.mxu0 %v1651
    %1964 = vmatprep.subr.bf16.mxu0 %v1656
    %1965 = vmatpush1.bf16.msra.mxu0 %v1655
    %1966 = vmatprep.subr.bf16.mxu0 %v1660
    %1967 = vmatpush1.bf16.msra.mxu0 %v1659
    %1968 = vmatprep.subr.bf16.mxu0 %v1664
    %1969 = vmatpush1.bf16.msra.mxu0 %v1663
    %1970 = vmatprep.subr.bf16.mxu0 %v1668
    %1971 = vmatpush1.bf16.msra.mxu0 %v1667
    %1972 = vmatprep.subr.bf16.mxu0 %v1672
    %1973 = vmatpush1.bf16.msra.mxu0 %v1671
    %1974 = vmatprep.subr.bf16.mxu0 %v1676
    %1975 = vmatpush1.bf16.msra.mxu0 %v1675
    %1976 = vmatprep.subr.bf16.mxu0 %v1680
    %1977 = vmatpush1.bf16.msra.mxu0 %v1679
    %1978 = vmatprep.subr.bf16.mxu0 %v1684
    %1979 = vmatpush1.bf16.msra.mxu0 %v1683
    %1980 = vmatprep.subr.bf16.mxu0 %v1688
    %1981 = vmatpush1.bf16.msra.mxu0 %v1687
    %1982 = vmatprep.subr.bf16.mxu0 %v1692
    %1983 = vmatpush1.bf16.msra.mxu0 %v1691
    %1984 = vmatprep.subr.bf16.mxu0 %v1696
    %1985 = vmatpush1.bf16.msra.mxu0 %v1695
    %1986 = vmatprep.subr.bf16.mxu0 %v1700
    %1987 = vmatpush1.bf16.msra.mxu0 %v1699
    %1988 = vmatprep.subr.bf16.mxu0 %v1704
    %1989 = vmatpush1.bf16.msra.mxu0 %v1703
    %1990 = vmatprep.subr.bf16.mxu0 %v1708
    %1991 = vmatpush1.bf16.msra.mxu0 %v1707
    %1992 = vmatprep.mubr.bf16.mxu0 %v1044
    %1993 = vmatmul.mubr.bf16.gmra.mrb[0].mxu0 %v1043
    %v1994 = vpop.f32.mrb[0].mxu0
    %v1995 = vadd.f32 %v1954, %v1994
    %v1996 = vpop.f32.mrb[0].mxu0
    %v1997 = vadd.f32 %v1956, %v1996
    %v1998 = vpop.f32.mrb[0].mxu0
    %v1999 = vpop.f32.mrb[0].mxu0
    %2000 = vdwg.mxu0
    %v2001 = vmul.f32 %v1913, 0.2
    %v2002 = vmul.f32 %v1915, 0.2
    %v2003 = vmul.f32 %v1995, 0.2
    %v2004 = vmul.f32 %v1997, 0.2
    %v2005 = vmax.f32 %v1913, %v2001
    %v2006 = vmax.f32 %v1915, %v2002
    %v2007 = vmax.f32 %v1995, %v2003
    %v2008 = vmax.f32 %v1997, %v2004
    %v2009 = vpack.c.bf16 %v2005, %v2005
    %v2010 = vpack.c.bf16 %v2006, %v2006
    %v2011 = vpack.c.bf16 %v2007, %v2007
    %v2012 = vpack.c.bf16 %v2008, %v2008
    %s2013 = scalar_lea.vmem [#allocation5], 2048
    %v2014 = vld [vmem:[%s2013] sm:$0xff]
    %v2015 = vld [vmem:[%s2013 + $0x8] sm:$0xff]
    %v2016 = vld [vmem:[%s2013 + $0x10] sm:$0xff]
    %v2017 = vld [vmem:[%s2013 + $0x18] sm:$0xff]
    %v2018 = vld [vmem:[%s2013 + $0x20] sm:$0xff]
    %v2019 = vld [vmem:[%s2013 + $0x28] sm:$0xff]
    %v2020 = vld [vmem:[%s2013 + $0x30] sm:$0xff]
    %v2021 = vld [vmem:[%s2013 + $0x38] sm:$0xff]
    %v2022 = vld [vmem:[%s2013 + $0x40] sm:$0xff]
    %v2023 = vld [vmem:[%s2013 + $0x48] sm:$0xff]
    %v2024 = vld [vmem:[%s2013 + $0x50] sm:$0xff]
    %v2025 = vld [vmem:[%s2013 + $0x58] sm:$0xff]
    %v2026 = vld [vmem:[%s2013 + $0x60] sm:$0xff]
    %v2027 = vld [vmem:[%s2013 + $0x68] sm:$0xff]
    %v2028 = vld [vmem:[%s2013 + $0x70] sm:$0xff]
    %v2029 = vld [vmem:[%s2013 + $0x78] sm:$0xff]
    %v2030 = vld [vmem:[%s2013 + $0x80] sm:$0xff]
    %v2031 = vld [vmem:[%s2013 + $0x88] sm:$0xff]
    %v2032 = vld [vmem:[%s2013 + $0x90] sm:$0xff]
    %v2033 = vld [vmem:[%s2013 + $0x98] sm:$0xff]
    %v2034 = vld [vmem:[%s2013 + $0xa0] sm:$0xff]
    %v2035 = vld [vmem:[%s2013 + $0xa8] sm:$0xff]
    %v2036 = vld [vmem:[%s2013 + $0xb0] sm:$0xff]
    %v2037 = vld [vmem:[%s2013 + $0xb8] sm:$0xff]
    %v2038 = vld [vmem:[%s2013 + $0xc0] sm:$0xff]
    %v2039 = vld [vmem:[%s2013 + $0xc8] sm:$0xff]
    %v2040 = vld [vmem:[%s2013 + $0xd0] sm:$0xff]
    %v2041 = vld [vmem:[%s2013 + $0xd8] sm:$0xff]
    %v2042 = vld [vmem:[%s2013 + $0xe0] sm:$0xff]
    %v2043 = vld [vmem:[%s2013 + $0xe8] sm:$0xff]
    %v2044 = vld [vmem:[%s2013 + $0xf0] sm:$0xff]
    %v2045 = vld [vmem:[%s2013 + $0xf8] sm:$0xff]
    %v2046 = vld [vmem:[%s2013 + $0x100] sm:$0xff]
    %v2047 = vld [vmem:[%s2013 + $0x108] sm:$0xff]
    %v2048 = vld [vmem:[%s2013 + $0x110] sm:$0xff]
    %v2049 = vld [vmem:[%s2013 + $0x118] sm:$0xff]
    %v2050 = vld [vmem:[%s2013 + $0x120] sm:$0xff]
    %v2051 = vld [vmem:[%s2013 + $0x128] sm:$0xff]
    %v2052 = vld [vmem:[%s2013 + $0x130] sm:$0xff]
    %v2053 = vld [vmem:[%s2013 + $0x138] sm:$0xff]
    %v2054 = vld [vmem:[%s2013 + $0x140] sm:$0xff]
    %v2055 = vld [vmem:[%s2013 + $0x148] sm:$0xff]
    %v2056 = vld [vmem:[%s2013 + $0x150] sm:$0xff]
    %v2057 = vld [vmem:[%s2013 + $0x158] sm:$0xff]
    %v2058 = vld [vmem:[%s2013 + $0x160] sm:$0xff]
    %v2059 = vld [vmem:[%s2013 + $0x168] sm:$0xff]
    %v2060 = vld [vmem:[%s2013 + $0x170] sm:$0xff]
    %v2061 = vld [vmem:[%s2013 + $0x178] sm:$0xff]
    %v2062 = vld [vmem:[%s2013 + $0x180] sm:$0xff]
    %v2063 = vld [vmem:[%s2013 + $0x188] sm:$0xff]
    %v2064 = vld [vmem:[%s2013 + $0x190] sm:$0xff]
    %v2065 = vld [vmem:[%s2013 + $0x198] sm:$0xff]
    %v2066 = vld [vmem:[%s2013 + $0x1a0] sm:$0xff]
    %v2067 = vld [vmem:[%s2013 + $0x1a8] sm:$0xff]
    %v2068 = vld [vmem:[%s2013 + $0x1b0] sm:$0xff]
    %v2069 = vld [vmem:[%s2013 + $0x1b8] sm:$0xff]
    %v2070 = vld [vmem:[%s2013 + $0x1c0] sm:$0xff]
    %v2071 = vld [vmem:[%s2013 + $0x1c8] sm:$0xff]
    %v2072 = vld [vmem:[%s2013 + $0x1d0] sm:$0xff]
    %v2073 = vld [vmem:[%s2013 + $0x1d8] sm:$0xff]
    %v2074 = vld [vmem:[%s2013 + $0x1e0] sm:$0xff]
    %v2075 = vld [vmem:[%s2013 + $0x1e8] sm:$0xff]
    %v2076 = vld [vmem:[%s2013 + $0x1f0] sm:$0xff]
    %v2077 = vld [vmem:[%s2013 + $0x1f8] sm:$0xff]
    %v2078 = vld [vmem:[%s2013 + $0x200] sm:$0xff]
    %v2079 = vld [vmem:[%s2013 + $0x208] sm:$0xff]
    %v2080 = vld [vmem:[%s2013 + $0x210] sm:$0xff]
    %v2081 = vld [vmem:[%s2013 + $0x218] sm:$0xff]
    %v2082 = vld [vmem:[%s2013 + $0x220] sm:$0xff]
    %v2083 = vld [vmem:[%s2013 + $0x228] sm:$0xff]
    %v2084 = vld [vmem:[%s2013 + $0x230] sm:$0xff]
    %v2085 = vld [vmem:[%s2013 + $0x238] sm:$0xff]
    %v2086 = vld [vmem:[%s2013 + $0x240] sm:$0xff]
    %v2087 = vld [vmem:[%s2013 + $0x248] sm:$0xff]
    %v2088 = vld [vmem:[%s2013 + $0x250] sm:$0xff]
    %v2089 = vld [vmem:[%s2013 + $0x258] sm:$0xff]
    %v2090 = vld [vmem:[%s2013 + $0x260] sm:$0xff]
    %v2091 = vld [vmem:[%s2013 + $0x268] sm:$0xff]
    %v2092 = vld [vmem:[%s2013 + $0x270] sm:$0xff]
    %v2093 = vld [vmem:[%s2013 + $0x278] sm:$0xff]
    %v2094 = vld [vmem:[%s2013 + $0x280] sm:$0xff]
    %v2095 = vld [vmem:[%s2013 + $0x288] sm:$0xff]
    %v2096 = vld [vmem:[%s2013 + $0x290] sm:$0xff]
    %v2097 = vld [vmem:[%s2013 + $0x298] sm:$0xff]
    %v2098 = vld [vmem:[%s2013 + $0x2a0] sm:$0xff]
    %v2099 = vld [vmem:[%s2013 + $0x2a8] sm:$0xff]
    %v2100 = vld [vmem:[%s2013 + $0x2b0] sm:$0xff]
    %v2101 = vld [vmem:[%s2013 + $0x2b8] sm:$0xff]
    %v2102 = vld [vmem:[%s2013 + $0x2c0] sm:$0xff]
    %v2103 = vld [vmem:[%s2013 + $0x2c8] sm:$0xff]
    %v2104 = vld [vmem:[%s2013 + $0x2d0] sm:$0xff]
    %v2105 = vld [vmem:[%s2013 + $0x2d8] sm:$0xff]
    %v2106 = vld [vmem:[%s2013 + $0x2e0] sm:$0xff]
    %v2107 = vld [vmem:[%s2013 + $0x2e8] sm:$0xff]
    %v2108 = vld [vmem:[%s2013 + $0x2f0] sm:$0xff]
    %v2109 = vld [vmem:[%s2013 + $0x2f8] sm:$0xff]
    %v2110 = vld [vmem:[%s2013 + $0x300] sm:$0xff]
    %v2111 = vld [vmem:[%s2013 + $0x308] sm:$0xff]
    %v2112 = vld [vmem:[%s2013 + $0x310] sm:$0xff]
    %v2113 = vld [vmem:[%s2013 + $0x318] sm:$0xff]
    %v2114 = vld [vmem:[%s2013 + $0x320] sm:$0xff]
    %v2115 = vld [vmem:[%s2013 + $0x328] sm:$0xff]
    %v2116 = vld [vmem:[%s2013 + $0x330] sm:$0xff]
    %v2117 = vld [vmem:[%s2013 + $0x338] sm:$0xff]
    %v2118 = vld [vmem:[%s2013 + $0x340] sm:$0xff]
    %v2119 = vld [vmem:[%s2013 + $0x348] sm:$0xff]
    %v2120 = vld [vmem:[%s2013 + $0x350] sm:$0xff]
    %v2121 = vld [vmem:[%s2013 + $0x358] sm:$0xff]
    %v2122 = vld [vmem:[%s2013 + $0x360] sm:$0xff]
    %v2123 = vld [vmem:[%s2013 + $0x368] sm:$0xff]
    %v2124 = vld [vmem:[%s2013 + $0x370] sm:$0xff]
    %v2125 = vld [vmem:[%s2013 + $0x378] sm:$0xff]
    %v2126 = vld [vmem:[%s2013 + $0x380] sm:$0xff]
    %v2127 = vld [vmem:[%s2013 + $0x388] sm:$0xff]
    %v2128 = vld [vmem:[%s2013 + $0x390] sm:$0xff]
    %v2129 = vld [vmem:[%s2013 + $0x398] sm:$0xff]
    %v2130 = vld [vmem:[%s2013 + $0x3a0] sm:$0xff]
    %v2131 = vld [vmem:[%s2013 + $0x3a8] sm:$0xff]
    %v2132 = vld [vmem:[%s2013 + $0x3b0] sm:$0xff]
    %v2133 = vld [vmem:[%s2013 + $0x3b8] sm:$0xff]
    %v2134 = vld [vmem:[%s2013 + $0x3c0] sm:$0xff]
    %v2135 = vld [vmem:[%s2013 + $0x3c8] sm:$0xff]
    %v2136 = vld [vmem:[%s2013 + $0x3d0] sm:$0xff]
    %v2137 = vld [vmem:[%s2013 + $0x3d8] sm:$0xff]
    %v2138 = vld [vmem:[%s2013 + $0x3e0] sm:$0xff]
    %v2139 = vld [vmem:[%s2013 + $0x3e8] sm:$0xff]
    %v2140 = vld [vmem:[%s2013 + $0x3f0] sm:$0xff]
    %v2141 = vld [vmem:[%s2013 + $0x3f8] sm:$0xff]
    %s2142 = scalar_lea.vmem [#allocation7], 8
    %v2143 = vld [vmem:[%s2142] sm:$0xf]
    %v2145 = vlaneseq
    %v2146 = vshrl.u32 %v2145, 7
    %v2147 = vsub.s32 0, %v2146
    %v2148 = vrot.slane %v2143, %v2147
    %v2149 = vlaneseq
    %v2150 = vshrl.u32 %v2149, 7
    %v2151 = vsub.s32 1, %v2150
    %v2152 = vrot.slane %v2143, %v2151
    %v2153 = vlaneseq
    %v2154 = vshrl.u32 %v2153, 7
    %v2155 = vsub.s32 2, %v2154
    %v2156 = vrot.slane %v2143, %v2155
    %v2157 = vlaneseq
    %v2158 = vshrl.u32 %v2157, 7
    %v2159 = vsub.s32 3, %v2158
    %v2160 = vrot.slane %v2143, %v2159
    %v2293 = vunpack.c.l.b16 %v2014
    %v2294 = vunpack.c.h.b16 %v2014
    %v2295 = vunpack.c.l.b16 %v2015
    %v2296 = vunpack.c.h.b16 %v2015
    %v2297 = vunpack.c.l.b16 %v2016
    %v2298 = vunpack.c.h.b16 %v2016
    %v2299 = vunpack.c.l.b16 %v2017
    %v2300 = vunpack.c.h.b16 %v2017
    %v2301 = vunpack.c.l.b16 %v2018
    %v2302 = vunpack.c.h.b16 %v2018
    %v2303 = vunpack.c.l.b16 %v2019
    %v2304 = vunpack.c.h.b16 %v2019
    %v2305 = vunpack.c.l.b16 %v2020
    %v2306 = vunpack.c.h.b16 %v2020
    %v2307 = vunpack.c.l.b16 %v2021
    %v2308 = vunpack.c.h.b16 %v2021
    %v2309 = vunpack.c.l.b16 %v2022
    %v2310 = vunpack.c.h.b16 %v2022
    %v2311 = vunpack.c.l.b16 %v2023
    %v2312 = vunpack.c.h.b16 %v2023
    %v2313 = vunpack.c.l.b16 %v2024
    %v2314 = vunpack.c.h.b16 %v2024
    %v2315 = vunpack.c.l.b16 %v2025
    %v2316 = vunpack.c.h.b16 %v2025
    %v2317 = vunpack.c.l.b16 %v2026
    %v2318 = vunpack.c.h.b16 %v2026
    %v2319 = vunpack.c.l.b16 %v2027
    %v2320 = vunpack.c.h.b16 %v2027
    %v2321 = vunpack.c.l.b16 %v2028
    %v2322 = vunpack.c.h.b16 %v2028
    %v2323 = vunpack.c.l.b16 %v2029
    %v2324 = vunpack.c.h.b16 %v2029
    %v2325 = vunpack.c.l.b16 %v2030
    %v2326 = vunpack.c.h.b16 %v2030
    %v2327 = vunpack.c.l.b16 %v2031
    %v2328 = vunpack.c.h.b16 %v2031
    %v2329 = vunpack.c.l.b16 %v2032
    %v2330 = vunpack.c.h.b16 %v2032
    %v2331 = vunpack.c.l.b16 %v2033
    %v2332 = vunpack.c.h.b16 %v2033
    %v2333 = vunpack.c.l.b16 %v2034
    %v2334 = vunpack.c.h.b16 %v2034
    %v2335 = vunpack.c.l.b16 %v2035
    %v2336 = vunpack.c.h.b16 %v2035
    %v2337 = vunpack.c.l.b16 %v2036
    %v2338 = vunpack.c.h.b16 %v2036
    %v2339 = vunpack.c.l.b16 %v2037
    %v2340 = vunpack.c.h.b16 %v2037
    %v2341 = vunpack.c.l.b16 %v2038
    %v2342 = vunpack.c.h.b16 %v2038
    %v2343 = vunpack.c.l.b16 %v2039
    %v2344 = vunpack.c.h.b16 %v2039
    %v2345 = vunpack.c.l.b16 %v2040
    %v2346 = vunpack.c.h.b16 %v2040
    %v2347 = vunpack.c.l.b16 %v2041
    %v2348 = vunpack.c.h.b16 %v2041
    %v2349 = vunpack.c.l.b16 %v2042
    %v2350 = vunpack.c.h.b16 %v2042
    %v2351 = vunpack.c.l.b16 %v2043
    %v2352 = vunpack.c.h.b16 %v2043
    %v2353 = vunpack.c.l.b16 %v2044
    %v2354 = vunpack.c.h.b16 %v2044
    %v2355 = vunpack.c.l.b16 %v2045
    %v2356 = vunpack.c.h.b16 %v2045
    %v2357 = vunpack.c.l.b16 %v2046
    %v2358 = vunpack.c.h.b16 %v2046
    %v2359 = vunpack.c.l.b16 %v2047
    %v2360 = vunpack.c.h.b16 %v2047
    %v2361 = vunpack.c.l.b16 %v2048
    %v2362 = vunpack.c.h.b16 %v2048
    %v2363 = vunpack.c.l.b16 %v2049
    %v2364 = vunpack.c.h.b16 %v2049
    %v2365 = vunpack.c.l.b16 %v2050
    %v2366 = vunpack.c.h.b16 %v2050
    %v2367 = vunpack.c.l.b16 %v2051
    %v2368 = vunpack.c.h.b16 %v2051
    %v2369 = vunpack.c.l.b16 %v2052
    %v2370 = vunpack.c.h.b16 %v2052
    %v2371 = vunpack.c.l.b16 %v2053
    %v2372 = vunpack.c.h.b16 %v2053
    %v2373 = vunpack.c.l.b16 %v2054
    %v2374 = vunpack.c.h.b16 %v2054
    %v2375 = vunpack.c.l.b16 %v2055
    %v2376 = vunpack.c.h.b16 %v2055
    %v2377 = vunpack.c.l.b16 %v2056
    %v2378 = vunpack.c.h.b16 %v2056
    %v2379 = vunpack.c.l.b16 %v2057
    %v2380 = vunpack.c.h.b16 %v2057
    %v2381 = vunpack.c.l.b16 %v2058
    %v2382 = vunpack.c.h.b16 %v2058
    %v2383 = vunpack.c.l.b16 %v2059
    %v2384 = vunpack.c.h.b16 %v2059
    %v2385 = vunpack.c.l.b16 %v2060
    %v2386 = vunpack.c.h.b16 %v2060
    %v2387 = vunpack.c.l.b16 %v2061
    %v2388 = vunpack.c.h.b16 %v2061
    %v2389 = vunpack.c.l.b16 %v2062
    %v2390 = vunpack.c.h.b16 %v2062
    %v2391 = vunpack.c.l.b16 %v2063
    %v2392 = vunpack.c.h.b16 %v2063
    %v2393 = vunpack.c.l.b16 %v2064
    %v2394 = vunpack.c.h.b16 %v2064
    %v2395 = vunpack.c.l.b16 %v2065
    %v2396 = vunpack.c.h.b16 %v2065
    %v2397 = vunpack.c.l.b16 %v2066
    %v2398 = vunpack.c.h.b16 %v2066
    %v2399 = vunpack.c.l.b16 %v2067
    %v2400 = vunpack.c.h.b16 %v2067
    %v2401 = vunpack.c.l.b16 %v2068
    %v2402 = vunpack.c.h.b16 %v2068
    %v2403 = vunpack.c.l.b16 %v2069
    %v2404 = vunpack.c.h.b16 %v2069
    %v2405 = vunpack.c.l.b16 %v2070
    %v2406 = vunpack.c.h.b16 %v2070
    %v2407 = vunpack.c.l.b16 %v2071
    %v2408 = vunpack.c.h.b16 %v2071
    %v2409 = vunpack.c.l.b16 %v2072
    %v2410 = vunpack.c.h.b16 %v2072
    %v2411 = vunpack.c.l.b16 %v2073
    %v2412 = vunpack.c.h.b16 %v2073
    %v2413 = vunpack.c.l.b16 %v2074
    %v2414 = vunpack.c.h.b16 %v2074
    %v2415 = vunpack.c.l.b16 %v2075
    %v2416 = vunpack.c.h.b16 %v2075
    %v2417 = vunpack.c.l.b16 %v2076
    %v2418 = vunpack.c.h.b16 %v2076
    %v2419 = vunpack.c.l.b16 %v2077
    %v2420 = vunpack.c.h.b16 %v2077
    %v2421 = vunpack.c.l.b16 %v2078
    %v2422 = vunpack.c.h.b16 %v2078
    %v2423 = vunpack.c.l.b16 %v2079
    %v2424 = vunpack.c.h.b16 %v2079
    %v2425 = vunpack.c.l.b16 %v2080
    %v2426 = vunpack.c.h.b16 %v2080
    %v2427 = vunpack.c.l.b16 %v2081
    %v2428 = vunpack.c.h.b16 %v2081
    %v2429 = vunpack.c.l.b16 %v2082
    %v2430 = vunpack.c.h.b16 %v2082
    %v2431 = vunpack.c.l.b16 %v2083
    %v2432 = vunpack.c.h.b16 %v2083
    %v2433 = vunpack.c.l.b16 %v2084
    %v2434 = vunpack.c.h.b16 %v2084
    %v2435 = vunpack.c.l.b16 %v2085
    %v2436 = vunpack.c.h.b16 %v2085
    %v2437 = vunpack.c.l.b16 %v2086
    %v2438 = vunpack.c.h.b16 %v2086
    %v2439 = vunpack.c.l.b16 %v2087
    %v2440 = vunpack.c.h.b16 %v2087
    %v2441 = vunpack.c.l.b16 %v2088
    %v2442 = vunpack.c.h.b16 %v2088
    %v2443 = vunpack.c.l.b16 %v2089
    %v2444 = vunpack.c.h.b16 %v2089
    %v2445 = vunpack.c.l.b16 %v2090
    %v2446 = vunpack.c.h.b16 %v2090
    %v2447 = vunpack.c.l.b16 %v2091
    %v2448 = vunpack.c.h.b16 %v2091
    %v2449 = vunpack.c.l.b16 %v2092
    %v2450 = vunpack.c.h.b16 %v2092
    %v2451 = vunpack.c.l.b16 %v2093
    %v2452 = vunpack.c.h.b16 %v2093
    %v2453 = vunpack.c.l.b16 %v2094
    %v2454 = vunpack.c.h.b16 %v2094
    %v2455 = vunpack.c.l.b16 %v2095
    %v2456 = vunpack.c.h.b16 %v2095
    %v2457 = vunpack.c.l.b16 %v2096
    %v2458 = vunpack.c.h.b16 %v2096
    %v2459 = vunpack.c.l.b16 %v2097
    %v2460 = vunpack.c.h.b16 %v2097
    %v2461 = vunpack.c.l.b16 %v2098
    %v2462 = vunpack.c.h.b16 %v2098
    %v2463 = vunpack.c.l.b16 %v2099
    %v2464 = vunpack.c.h.b16 %v2099
    %v2465 = vunpack.c.l.b16 %v2100
    %v2466 = vunpack.c.h.b16 %v2100
    %v2467 = vunpack.c.l.b16 %v2101
    %v2468 = vunpack.c.h.b16 %v2101
    %v2469 = vunpack.c.l.b16 %v2102
    %v2470 = vunpack.c.h.b16 %v2102
    %v2471 = vunpack.c.l.b16 %v2103
    %v2472 = vunpack.c.h.b16 %v2103
    %v2473 = vunpack.c.l.b16 %v2104
    %v2474 = vunpack.c.h.b16 %v2104
    %v2475 = vunpack.c.l.b16 %v2105
    %v2476 = vunpack.c.h.b16 %v2105
    %v2477 = vunpack.c.l.b16 %v2106
    %v2478 = vunpack.c.h.b16 %v2106
    %v2479 = vunpack.c.l.b16 %v2107
    %v2480 = vunpack.c.h.b16 %v2107
    %v2481 = vunpack.c.l.b16 %v2108
    %v2482 = vunpack.c.h.b16 %v2108
    %v2483 = vunpack.c.l.b16 %v2109
    %v2484 = vunpack.c.h.b16 %v2109
    %v2485 = vunpack.c.l.b16 %v2110
    %v2486 = vunpack.c.h.b16 %v2110
    %v2487 = vunpack.c.l.b16 %v2111
    %v2488 = vunpack.c.h.b16 %v2111
    %v2489 = vunpack.c.l.b16 %v2112
    %v2490 = vunpack.c.h.b16 %v2112
    %v2491 = vunpack.c.l.b16 %v2113
    %v2492 = vunpack.c.h.b16 %v2113
    %v2493 = vunpack.c.l.b16 %v2114
    %v2494 = vunpack.c.h.b16 %v2114
    %v2495 = vunpack.c.l.b16 %v2115
    %v2496 = vunpack.c.h.b16 %v2115
    %v2497 = vunpack.c.l.b16 %v2116
    %v2498 = vunpack.c.h.b16 %v2116
    %v2499 = vunpack.c.l.b16 %v2117
    %v2500 = vunpack.c.h.b16 %v2117
    %v2501 = vunpack.c.l.b16 %v2118
    %v2502 = vunpack.c.h.b16 %v2118
    %v2503 = vunpack.c.l.b16 %v2119
    %v2504 = vunpack.c.h.b16 %v2119
    %v2505 = vunpack.c.l.b16 %v2120
    %v2506 = vunpack.c.h.b16 %v2120
    %v2507 = vunpack.c.l.b16 %v2121
    %v2508 = vunpack.c.h.b16 %v2121
    %v2509 = vunpack.c.l.b16 %v2122
    %v2510 = vunpack.c.h.b16 %v2122
    %v2511 = vunpack.c.l.b16 %v2123
    %v2512 = vunpack.c.h.b16 %v2123
    %v2513 = vunpack.c.l.b16 %v2124
    %v2514 = vunpack.c.h.b16 %v2124
    %v2515 = vunpack.c.l.b16 %v2125
    %v2516 = vunpack.c.h.b16 %v2125
    %v2517 = vunpack.c.l.b16 %v2126
    %v2518 = vunpack.c.h.b16 %v2126
    %v2519 = vunpack.c.l.b16 %v2127
    %v2520 = vunpack.c.h.b16 %v2127
    %v2521 = vunpack.c.l.b16 %v2128
    %v2522 = vunpack.c.h.b16 %v2128
    %v2523 = vunpack.c.l.b16 %v2129
    %v2524 = vunpack.c.h.b16 %v2129
    %v2525 = vunpack.c.l.b16 %v2130
    %v2526 = vunpack.c.h.b16 %v2130
    %v2527 = vunpack.c.l.b16 %v2131
    %v2528 = vunpack.c.h.b16 %v2131
    %v2529 = vunpack.c.l.b16 %v2132
    %v2530 = vunpack.c.h.b16 %v2132
    %v2531 = vunpack.c.l.b16 %v2133
    %v2532 = vunpack.c.h.b16 %v2133
    %v2533 = vunpack.c.l.b16 %v2134
    %v2534 = vunpack.c.h.b16 %v2134
    %v2535 = vunpack.c.l.b16 %v2135
    %v2536 = vunpack.c.h.b16 %v2135
    %v2537 = vunpack.c.l.b16 %v2136
    %v2538 = vunpack.c.h.b16 %v2136
    %v2539 = vunpack.c.l.b16 %v2137
    %v2540 = vunpack.c.h.b16 %v2137
    %v2541 = vunpack.c.l.b16 %v2138
    %v2542 = vunpack.c.h.b16 %v2138
    %v2543 = vunpack.c.l.b16 %v2139
    %v2544 = vunpack.c.h.b16 %v2139
    %v2545 = vunpack.c.l.b16 %v2140
    %v2546 = vunpack.c.h.b16 %v2140
    %v2547 = vunpack.c.l.b16 %v2141
    %v2548 = vunpack.c.h.b16 %v2141
    %v2549 = vpack.c.b16 %v2297, %v2293
    %v2550 = vpack.c.b16 %v2298, %v2294
    %v2551 = vpack.c.b16 %v2299, %v2295
    %v2552 = vpack.c.b16 %v2300, %v2296
    %v2553 = vpack.c.b16 %v2305, %v2301
    %v2554 = vpack.c.b16 %v2306, %v2302
    %v2555 = vpack.c.b16 %v2307, %v2303
    %v2556 = vpack.c.b16 %v2308, %v2304
    %v2557 = vpack.c.b16 %v2313, %v2309
    %v2558 = vpack.c.b16 %v2314, %v2310
    %v2559 = vpack.c.b16 %v2315, %v2311
    %v2560 = vpack.c.b16 %v2316, %v2312
    %v2561 = vpack.c.b16 %v2321, %v2317
    %v2562 = vpack.c.b16 %v2322, %v2318
    %v2563 = vpack.c.b16 %v2323, %v2319
    %v2564 = vpack.c.b16 %v2324, %v2320
    %v2565 = vpack.c.b16 %v2329, %v2325
    %v2566 = vpack.c.b16 %v2330, %v2326
    %v2567 = vpack.c.b16 %v2331, %v2327
    %v2568 = vpack.c.b16 %v2332, %v2328
    %v2569 = vpack.c.b16 %v2337, %v2333
    %v2570 = vpack.c.b16 %v2338, %v2334
    %v2571 = vpack.c.b16 %v2339, %v2335
    %v2572 = vpack.c.b16 %v2340, %v2336
    %v2573 = vpack.c.b16 %v2345, %v2341
    %v2574 = vpack.c.b16 %v2346, %v2342
    %v2575 = vpack.c.b16 %v2347, %v2343
    %v2576 = vpack.c.b16 %v2348, %v2344
    %v2577 = vpack.c.b16 %v2353, %v2349
    %v2578 = vpack.c.b16 %v2354, %v2350
    %v2579 = vpack.c.b16 %v2355, %v2351
    %v2580 = vpack.c.b16 %v2356, %v2352
    %v2581 = vpack.c.b16 %v2361, %v2357
    %v2582 = vpack.c.b16 %v2362, %v2358
    %v2583 = vpack.c.b16 %v2363, %v2359
    %v2584 = vpack.c.b16 %v2364, %v2360
    %v2585 = vpack.c.b16 %v2369, %v2365
    %v2586 = vpack.c.b16 %v2370, %v2366
    %v2587 = vpack.c.b16 %v2371, %v2367
    %v2588 = vpack.c.b16 %v2372, %v2368
    %v2589 = vpack.c.b16 %v2377, %v2373
    %v2590 = vpack.c.b16 %v2378, %v2374
    %v2591 = vpack.c.b16 %v2379, %v2375
    %v2592 = vpack.c.b16 %v2380, %v2376
    %v2593 = vpack.c.b16 %v2385, %v2381
    %v2594 = vpack.c.b16 %v2386, %v2382
    %v2595 = vpack.c.b16 %v2387, %v2383
    %v2596 = vpack.c.b16 %v2388, %v2384
    %v2597 = vpack.c.b16 %v2393, %v2389
    %v2598 = vpack.c.b16 %v2394, %v2390
    %v2599 = vpack.c.b16 %v2395, %v2391
    %v2600 = vpack.c.b16 %v2396, %v2392
    %v2601 = vpack.c.b16 %v2401, %v2397
    %v2602 = vpack.c.b16 %v2402, %v2398
    %v2603 = vpack.c.b16 %v2403, %v2399
    %v2604 = vpack.c.b16 %v2404, %v2400
    %v2605 = vpack.c.b16 %v2409, %v2405
    %v2606 = vpack.c.b16 %v2410, %v2406
    %v2607 = vpack.c.b16 %v2411, %v2407
    %v2608 = vpack.c.b16 %v2412, %v2408
    %v2609 = vpack.c.b16 %v2417, %v2413
    %v2610 = vpack.c.b16 %v2418, %v2414
    %v2611 = vpack.c.b16 %v2419, %v2415
    %v2612 = vpack.c.b16 %v2420, %v2416
    %v2613 = vpack.c.b16 %v2425, %v2421
    %v2614 = vpack.c.b16 %v2426, %v2422
    %v2615 = vpack.c.b16 %v2427, %v2423
    %v2616 = vpack.c.b16 %v2428, %v2424
    %v2617 = vpack.c.b16 %v2433, %v2429
    %v2618 = vpack.c.b16 %v2434, %v2430
    %v2619 = vpack.c.b16 %v2435, %v2431
    %v2620 = vpack.c.b16 %v2436, %v2432
    %v2621 = vpack.c.b16 %v2441, %v2437
    %v2622 = vpack.c.b16 %v2442, %v2438
    %v2623 = vpack.c.b16 %v2443, %v2439
    %v2624 = vpack.c.b16 %v2444, %v2440
    %v2625 = vpack.c.b16 %v2449, %v2445
    %v2626 = vpack.c.b16 %v2450, %v2446
    %v2627 = vpack.c.b16 %v2451, %v2447
    %v2628 = vpack.c.b16 %v2452, %v2448
    %v2629 = vpack.c.b16 %v2457, %v2453
    %v2630 = vpack.c.b16 %v2458, %v2454
    %v2631 = vpack.c.b16 %v2459, %v2455
    %v2632 = vpack.c.b16 %v2460, %v2456
    %v2633 = vpack.c.b16 %v2465, %v2461
    %v2634 = vpack.c.b16 %v2466, %v2462
    %v2635 = vpack.c.b16 %v2467, %v2463
    %v2636 = vpack.c.b16 %v2468, %v2464
    %v2637 = vpack.c.b16 %v2473, %v2469
    %v2638 = vpack.c.b16 %v2474, %v2470
    %v2639 = vpack.c.b16 %v2475, %v2471
    %v2640 = vpack.c.b16 %v2476, %v2472
    %v2641 = vpack.c.b16 %v2481, %v2477
    %v2642 = vpack.c.b16 %v2482, %v2478
    %v2643 = vpack.c.b16 %v2483, %v2479
    %v2644 = vpack.c.b16 %v2484, %v2480
    %v2645 = vpack.c.b16 %v2489, %v2485
    %v2646 = vpack.c.b16 %v2490, %v2486
    %v2647 = vpack.c.b16 %v2491, %v2487
    %v2648 = vpack.c.b16 %v2492, %v2488
    %v2649 = vpack.c.b16 %v2497, %v2493
    %v2650 = vpack.c.b16 %v2498, %v2494
    %v2651 = vpack.c.b16 %v2499, %v2495
    %v2652 = vpack.c.b16 %v2500, %v2496
    %v2653 = vpack.c.b16 %v2505, %v2501
    %v2654 = vpack.c.b16 %v2506, %v2502
    %v2655 = vpack.c.b16 %v2507, %v2503
    %v2656 = vpack.c.b16 %v2508, %v2504
    %v2657 = vpack.c.b16 %v2513, %v2509
    %v2658 = vpack.c.b16 %v2514, %v2510
    %v2659 = vpack.c.b16 %v2515, %v2511
    %v2660 = vpack.c.b16 %v2516, %v2512
    %v2661 = vpack.c.b16 %v2521, %v2517
    %v2662 = vpack.c.b16 %v2522, %v2518
    %v2663 = vpack.c.b16 %v2523, %v2519
    %v2664 = vpack.c.b16 %v2524, %v2520
    %v2665 = vpack.c.b16 %v2529, %v2525
    %v2666 = vpack.c.b16 %v2530, %v2526
    %v2667 = vpack.c.b16 %v2531, %v2527
    %v2668 = vpack.c.b16 %v2532, %v2528
    %v2669 = vpack.c.b16 %v2537, %v2533
    %v2670 = vpack.c.b16 %v2538, %v2534
    %v2671 = vpack.c.b16 %v2539, %v2535
    %v2672 = vpack.c.b16 %v2540, %v2536
    %v2673 = vpack.c.b16 %v2545, %v2541
    %v2674 = vpack.c.b16 %v2546, %v2542
    %v2675 = vpack.c.b16 %v2547, %v2543
    %v2676 = vpack.c.b16 %v2548, %v2544
    %2805 = vmatprep.subr.bf16.mxu0 %v2550
    %2806 = vmatpush1.bf16.msra.mxu0 %v2549
    %2807 = vmatprep.subr.bf16.mxu0 %v2554
    %2808 = vmatpush1.bf16.msra.mxu0 %v2553
    %2809 = vmatprep.subr.bf16.mxu0 %v2558
    %2810 = vmatpush1.bf16.msra.mxu0 %v2557
    %2811 = vmatprep.subr.bf16.mxu0 %v2562
    %2812 = vmatpush1.bf16.msra.mxu0 %v2561
    %2813 = vmatprep.subr.bf16.mxu0 %v2566
    %2814 = vmatpush1.bf16.msra.mxu0 %v2565
    %2815 = vmatprep.subr.bf16.mxu0 %v2570
    %2816 = vmatpush1.bf16.msra.mxu0 %v2569
    %2817 = vmatprep.subr.bf16.mxu0 %v2574
    %2818 = vmatpush1.bf16.msra.mxu0 %v2573
    %2819 = vmatprep.subr.bf16.mxu0 %v2578
    %2820 = vmatpush1.bf16.msra.mxu0 %v2577
    %2821 = vmatprep.subr.bf16.mxu0 %v2582
    %2822 = vmatpush1.bf16.msra.mxu0 %v2581
    %2823 = vmatprep.subr.bf16.mxu0 %v2586
    %2824 = vmatpush1.bf16.msra.mxu0 %v2585
    %2825 = vmatprep.subr.bf16.mxu0 %v2590
    %2826 = vmatpush1.bf16.msra.mxu0 %v2589
    %2827 = vmatprep.subr.bf16.mxu0 %v2594
    %2828 = vmatpush1.bf16.msra.mxu0 %v2593
    %2829 = vmatprep.subr.bf16.mxu0 %v2598
    %2830 = vmatpush1.bf16.msra.mxu0 %v2597
    %2831 = vmatprep.subr.bf16.mxu0 %v2602
    %2832 = vmatpush1.bf16.msra.mxu0 %v2601
    %2833 = vmatprep.subr.bf16.mxu0 %v2606
    %2834 = vmatpush1.bf16.msra.mxu0 %v2605
    %2835 = vmatprep.subr.bf16.mxu0 %v2610
    %2836 = vmatpush1.bf16.msra.mxu0 %v2609
    %2837 = vmatprep.mubr.bf16.mxu0 %v2010
    %2838 = vmatmul.mubr.bf16.gmra.mrb[0].mxu0 %v2009
    %v2839 = vpop.f32.mrb[0].mxu0
    %v2840 = vadd.f32 %v2148, %v2839
    %v2841 = vpop.f32.mrb[0].mxu0
    %v2842 = vadd.f32 %v2152, %v2841
    %v2843 = vpop.f32.mrb[0].mxu0
    %v2844 = vpop.f32.mrb[0].mxu0
    %2845 = vdwg.mxu0
    %2846 = vmatprep.subr.bf16.mxu0 %v2614
    %2847 = vmatpush1.bf16.msra.mxu0 %v2613
    %2848 = vmatprep.subr.bf16.mxu0 %v2618
    %2849 = vmatpush1.bf16.msra.mxu0 %v2617
    %2850 = vmatprep.subr.bf16.mxu0 %v2622
    %2851 = vmatpush1.bf16.msra.mxu0 %v2621
    %2852 = vmatprep.subr.bf16.mxu0 %v2626
    %2853 = vmatpush1.bf16.msra.mxu0 %v2625
    %2854 = vmatprep.subr.bf16.mxu0 %v2630
    %2855 = vmatpush1.bf16.msra.mxu0 %v2629
    %2856 = vmatprep.subr.bf16.mxu0 %v2634
    %2857 = vmatpush1.bf16.msra.mxu0 %v2633
    %2858 = vmatprep.subr.bf16.mxu0 %v2638
    %2859 = vmatpush1.bf16.msra.mxu0 %v2637
    %2860 = vmatprep.subr.bf16.mxu0 %v2642
    %2861 = vmatpush1.bf16.msra.mxu0 %v2641
    %2862 = vmatprep.subr.bf16.mxu0 %v2646
    %2863 = vmatpush1.bf16.msra.mxu0 %v2645
    %2864 = vmatprep.subr.bf16.mxu0 %v2650
    %2865 = vmatpush1.bf16.msra.mxu0 %v2649
    %2866 = vmatprep.subr.bf16.mxu0 %v2654
    %2867 = vmatpush1.bf16.msra.mxu0 %v2653
    %2868 = vmatprep.subr.bf16.mxu0 %v2658
    %2869 = vmatpush1.bf16.msra.mxu0 %v2657
    %2870 = vmatprep.subr.bf16.mxu0 %v2662
    %2871 = vmatpush1.bf16.msra.mxu0 %v2661
    %2872 = vmatprep.subr.bf16.mxu0 %v2666
    %2873 = vmatpush1.bf16.msra.mxu0 %v2665
    %2874 = vmatprep.subr.bf16.mxu0 %v2670
    %2875 = vmatpush1.bf16.msra.mxu0 %v2669
    %2876 = vmatprep.subr.bf16.mxu0 %v2674
    %2877 = vmatpush1.bf16.msra.mxu0 %v2673
    %2878 = vmatprep.mubr.bf16.mxu0 %v2012
    %2879 = vmatmul.mubr.bf16.gmra.mrb[0].mxu0 %v2011
    %v2880 = vpop.f32.mrb[0].mxu0
    %v2881 = vadd.f32 %v2840, %v2880
    %v2882 = vpop.f32.mrb[0].mxu0
    %v2883 = vadd.f32 %v2842, %v2882
    %v2884 = vpop.f32.mrb[0].mxu0
    %v2885 = vpop.f32.mrb[0].mxu0
    %2886 = vdwg.mxu0
    %2887 = vmatprep.subr.bf16.mxu0 %v2552
    %2888 = vmatpush1.bf16.msra.mxu0 %v2551
    %2889 = vmatprep.subr.bf16.mxu0 %v2556
    %2890 = vmatpush1.bf16.msra.mxu0 %v2555
    %2891 = vmatprep.subr.bf16.mxu0 %v2560
    %2892 = vmatpush1.bf16.msra.mxu0 %v2559
    %2893 = vmatprep.subr.bf16.mxu0 %v2564
    %2894 = vmatpush1.bf16.msra.mxu0 %v2563
    %2895 = vmatprep.subr.bf16.mxu0 %v2568
    %2896 = vmatpush1.bf16.msra.mxu0 %v2567
    %2897 = vmatprep.subr.bf16.mxu0 %v2572
    %2898 = vmatpush1.bf16.msra.mxu0 %v2571
    %2899 = vmatprep.subr.bf16.mxu0 %v2576
    %2900 = vmatpush1.bf16.msra.mxu0 %v2575
    %2901 = vmatprep.subr.bf16.mxu0 %v2580
    %2902 = vmatpush1.bf16.msra.mxu0 %v2579
    %2903 = vmatprep.subr.bf16.mxu0 %v2584
    %2904 = vmatpush1.bf16.msra.mxu0 %v2583
    %2905 = vmatprep.subr.bf16.mxu0 %v2588
    %2906 = vmatpush1.bf16.msra.mxu0 %v2587
    %2907 = vmatprep.subr.bf16.mxu0 %v2592
    %2908 = vmatpush1.bf16.msra.mxu0 %v2591
    %2909 = vmatprep.subr.bf16.mxu0 %v2596
    %2910 = vmatpush1.bf16.msra.mxu0 %v2595
    %2911 = vmatprep.subr.bf16.mxu0 %v2600
    %2912 = vmatpush1.bf16.msra.mxu0 %v2599
    %2913 = vmatprep.subr.bf16.mxu0 %v2604
    %2914 = vmatpush1.bf16.msra.mxu0 %v2603
    %2915 = vmatprep.subr.bf16.mxu0 %v2608
    %2916 = vmatpush1.bf16.msra.mxu0 %v2607
    %2917 = vmatprep.subr.bf16.mxu0 %v2612
    %2918 = vmatpush1.bf16.msra.mxu0 %v2611
    %2919 = vmatprep.mubr.bf16.mxu0 %v2010
    %2920 = vmatmul.mubr.bf16.gmra.mrb[0].mxu0 %v2009
    %v2921 = vpop.f32.mrb[0].mxu0
    %v2922 = vadd.f32 %v2156, %v2921
    %v2923 = vpop.f32.mrb[0].mxu0
    %v2924 = vadd.f32 %v2160, %v2923
    %v2925 = vpop.f32.mrb[0].mxu0
    %v2926 = vpop.f32.mrb[0].mxu0
    %2927 = vdwg.mxu0
    %2928 = vmatprep.subr.bf16.mxu0 %v2616
    %2929 = vmatpush1.bf16.msra.mxu0 %v2615
    %2930 = vmatprep.subr.bf16.mxu0 %v2620
    %2931 = vmatpush1.bf16.msra.mxu0 %v2619
    %2932 = vmatprep.subr.bf16.mxu0 %v2624
    %2933 = vmatpush1.bf16.msra.mxu0 %v2623
    %2934 = vmatprep.subr.bf16.mxu0 %v2628
    %2935 = vmatpush1.bf16.msra.mxu0 %v2627
    %2936 = vmatprep.subr.bf16.mxu0 %v2632
    %2937 = vmatpush1.bf16.msra.mxu0 %v2631
    %2938 = vmatprep.subr.bf16.mxu0 %v2636
    %2939 = vmatpush1.bf16.msra.mxu0 %v2635
    %2940 = vmatprep.subr.bf16.mxu0 %v2640
    %2941 = vmatpush1.bf16.msra.mxu0 %v2639
    %2942 = vmatprep.subr.bf16.mxu0 %v2644
    %2943 = vmatpush1.bf16.msra.mxu0 %v2643
    %2944 = vmatprep.subr.bf16.mxu0 %v2648
    %2945 = vmatpush1.bf16.msra.mxu0 %v2647
    %2946 = vmatprep.subr.bf16.mxu0 %v2652
    %2947 = vmatpush1.bf16.msra.mxu0 %v2651
    %2948 = vmatprep.subr.bf16.mxu0 %v2656
    %2949 = vmatpush1.bf16.msra.mxu0 %v2655
    %2950 = vmatprep.subr.bf16.mxu0 %v2660
    %2951 = vmatpush1.bf16.msra.mxu0 %v2659
    %2952 = vmatprep.subr.bf16.mxu0 %v2664
    %2953 = vmatpush1.bf16.msra.mxu0 %v2663
    %2954 = vmatprep.subr.bf16.mxu0 %v2668
    %2955 = vmatpush1.bf16.msra.mxu0 %v2667
    %2956 = vmatprep.subr.bf16.mxu0 %v2672
    %2957 = vmatpush1.bf16.msra.mxu0 %v2671
    %2958 = vmatprep.subr.bf16.mxu0 %v2676
    %2959 = vmatpush1.bf16.msra.mxu0 %v2675
    %2960 = vmatprep.mubr.bf16.mxu0 %v2012
    %2961 = vmatmul.mubr.bf16.gmra.mrb[0].mxu0 %v2011
    %v2962 = vpop.f32.mrb[0].mxu0
    %v2963 = vadd.f32 %v2922, %v2962
    %v2964 = vpop.f32.mrb[0].mxu0
    %v2965 = vadd.f32 %v2924, %v2964
    %v2966 = vpop.f32.mrb[0].mxu0
    %v2967 = vpop.f32.mrb[0].mxu0
    %2968 = vdwg.mxu0
    %v2969 = vmul.f32 %v2881, 0.2
    %v2970 = vmul.f32 %v2883, 0.2
    %v2971 = vmul.f32 %v2963, 0.2
    %v2972 = vmul.f32 %v2965, 0.2
    %v2973 = vmax.f32 %v2881, %v2969
    %v2974 = vmax.f32 %v2883, %v2970
    %v2975 = vmax.f32 %v2963, %v2971
    %v2976 = vmax.f32 %v2965, %v2972
    %v2977 = vpack.c.bf16 %v2973, %v2973
    %v2978 = vpack.c.bf16 %v2974, %v2974
    %v2979 = vpack.c.bf16 %v2975, %v2975
    %v2980 = vpack.c.bf16 %v2976, %v2976
    %s2981 = scalar_lea.vmem [#allocation5], 3072
    %v2982 = vld [vmem:[%s2981] sm:$0xff]
    %v2983 = vld [vmem:[%s2981 + $0x8] sm:$0xff]
    %v2984 = vld [vmem:[%s2981 + $0x10] sm:$0xff]
    %v2985 = vld [vmem:[%s2981 + $0x18] sm:$0xff]
    %v2986 = vld [vmem:[%s2981 + $0x20] sm:$0xff]
    %v2987 = vld [vmem:[%s2981 + $0x28] sm:$0xff]
    %v2988 = vld [vmem:[%s2981 + $0x30] sm:$0xff]
    %v2989 = vld [vmem:[%s2981 + $0x38] sm:$0xff]
    %v2990 = vld [vmem:[%s2981 + $0x40] sm:$0xff]
    %v2991 = vld [vmem:[%s2981 + $0x48] sm:$0xff]
    %v2992 = vld [vmem:[%s2981 + $0x50] sm:$0xff]
    %v2993 = vld [vmem:[%s2981 + $0x58] sm:$0xff]
    %v2994 = vld [vmem:[%s2981 + $0x60] sm:$0xff]
    %v2995 = vld [vmem:[%s2981 + $0x68] sm:$0xff]
    %v2996 = vld [vmem:[%s2981 + $0x70] sm:$0xff]
    %v2997 = vld [vmem:[%s2981 + $0x78] sm:$0xff]
    %v2998 = vld [vmem:[%s2981 + $0x80] sm:$0xff]
    %v2999 = vld [vmem:[%s2981 + $0x88] sm:$0xff]
    %v3000 = vld [vmem:[%s2981 + $0x90] sm:$0xff]
    %v3001 = vld [vmem:[%s2981 + $0x98] sm:$0xff]
    %v3002 = vld [vmem:[%s2981 + $0xa0] sm:$0xff]
    %v3003 = vld [vmem:[%s2981 + $0xa8] sm:$0xff]
    %v3004 = vld [vmem:[%s2981 + $0xb0] sm:$0xff]
    %v3005 = vld [vmem:[%s2981 + $0xb8] sm:$0xff]
    %v3006 = vld [vmem:[%s2981 + $0xc0] sm:$0xff]
    %v3007 = vld [vmem:[%s2981 + $0xc8] sm:$0xff]
    %v3008 = vld [vmem:[%s2981 + $0xd0] sm:$0xff]
    %v3009 = vld [vmem:[%s2981 + $0xd8] sm:$0xff]
    %v3010 = vld [vmem:[%s2981 + $0xe0] sm:$0xff]
    %v3011 = vld [vmem:[%s2981 + $0xe8] sm:$0xff]
    %v3012 = vld [vmem:[%s2981 + $0xf0] sm:$0xff]
    %v3013 = vld [vmem:[%s2981 + $0xf8] sm:$0xff]
    %v3014 = vld [vmem:[%s2981 + $0x100] sm:$0xff]
    %v3015 = vld [vmem:[%s2981 + $0x108] sm:$0xff]
    %v3016 = vld [vmem:[%s2981 + $0x110] sm:$0xff]
    %v3017 = vld [vmem:[%s2981 + $0x118] sm:$0xff]
    %v3018 = vld [vmem:[%s2981 + $0x120] sm:$0xff]
    %v3019 = vld [vmem:[%s2981 + $0x128] sm:$0xff]
    %v3020 = vld [vmem:[%s2981 + $0x130] sm:$0xff]
    %v3021 = vld [vmem:[%s2981 + $0x138] sm:$0xff]
    %v3022 = vld [vmem:[%s2981 + $0x140] sm:$0xff]
    %v3023 = vld [vmem:[%s2981 + $0x148] sm:$0xff]
    %v3024 = vld [vmem:[%s2981 + $0x150] sm:$0xff]
    %v3025 = vld [vmem:[%s2981 + $0x158] sm:$0xff]
    %v3026 = vld [vmem:[%s2981 + $0x160] sm:$0xff]
    %v3027 = vld [vmem:[%s2981 + $0x168] sm:$0xff]
    %v3028 = vld [vmem:[%s2981 + $0x170] sm:$0xff]
    %v3029 = vld [vmem:[%s2981 + $0x178] sm:$0xff]
    %v3030 = vld [vmem:[%s2981 + $0x180] sm:$0xff]
    %v3031 = vld [vmem:[%s2981 + $0x188] sm:$0xff]
    %v3032 = vld [vmem:[%s2981 + $0x190] sm:$0xff]
    %v3033 = vld [vmem:[%s2981 + $0x198] sm:$0xff]
    %v3034 = vld [vmem:[%s2981 + $0x1a0] sm:$0xff]
    %v3035 = vld [vmem:[%s2981 + $0x1a8] sm:$0xff]
    %v3036 = vld [vmem:[%s2981 + $0x1b0] sm:$0xff]
    %v3037 = vld [vmem:[%s2981 + $0x1b8] sm:$0xff]
    %v3038 = vld [vmem:[%s2981 + $0x1c0] sm:$0xff]
    %v3039 = vld [vmem:[%s2981 + $0x1c8] sm:$0xff]
    %v3040 = vld [vmem:[%s2981 + $0x1d0] sm:$0xff]
    %v3041 = vld [vmem:[%s2981 + $0x1d8] sm:$0xff]
    %v3042 = vld [vmem:[%s2981 + $0x1e0] sm:$0xff]
    %v3043 = vld [vmem:[%s2981 + $0x1e8] sm:$0xff]
    %v3044 = vld [vmem:[%s2981 + $0x1f0] sm:$0xff]
    %v3045 = vld [vmem:[%s2981 + $0x1f8] sm:$0xff]
    %v3046 = vld [vmem:[%s2981 + $0x200] sm:$0xff]
    %v3047 = vld [vmem:[%s2981 + $0x208] sm:$0xff]
    %v3048 = vld [vmem:[%s2981 + $0x210] sm:$0xff]
    %v3049 = vld [vmem:[%s2981 + $0x218] sm:$0xff]
    %v3050 = vld [vmem:[%s2981 + $0x220] sm:$0xff]
    %v3051 = vld [vmem:[%s2981 + $0x228] sm:$0xff]
    %v3052 = vld [vmem:[%s2981 + $0x230] sm:$0xff]
    %v3053 = vld [vmem:[%s2981 + $0x238] sm:$0xff]
    %v3054 = vld [vmem:[%s2981 + $0x240] sm:$0xff]
    %v3055 = vld [vmem:[%s2981 + $0x248] sm:$0xff]
    %v3056 = vld [vmem:[%s2981 + $0x250] sm:$0xff]
    %v3057 = vld [vmem:[%s2981 + $0x258] sm:$0xff]
    %v3058 = vld [vmem:[%s2981 + $0x260] sm:$0xff]
    %v3059 = vld [vmem:[%s2981 + $0x268] sm:$0xff]
    %v3060 = vld [vmem:[%s2981 + $0x270] sm:$0xff]
    %v3061 = vld [vmem:[%s2981 + $0x278] sm:$0xff]
    %v3062 = vld [vmem:[%s2981 + $0x280] sm:$0xff]
    %v3063 = vld [vmem:[%s2981 + $0x288] sm:$0xff]
    %v3064 = vld [vmem:[%s2981 + $0x290] sm:$0xff]
    %v3065 = vld [vmem:[%s2981 + $0x298] sm:$0xff]
    %v3066 = vld [vmem:[%s2981 + $0x2a0] sm:$0xff]
    %v3067 = vld [vmem:[%s2981 + $0x2a8] sm:$0xff]
    %v3068 = vld [vmem:[%s2981 + $0x2b0] sm:$0xff]
    %v3069 = vld [vmem:[%s2981 + $0x2b8] sm:$0xff]
    %v3070 = vld [vmem:[%s2981 + $0x2c0] sm:$0xff]
    %v3071 = vld [vmem:[%s2981 + $0x2c8] sm:$0xff]
    %v3072 = vld [vmem:[%s2981 + $0x2d0] sm:$0xff]
    %v3073 = vld [vmem:[%s2981 + $0x2d8] sm:$0xff]
    %v3074 = vld [vmem:[%s2981 + $0x2e0] sm:$0xff]
    %v3075 = vld [vmem:[%s2981 + $0x2e8] sm:$0xff]
    %v3076 = vld [vmem:[%s2981 + $0x2f0] sm:$0xff]
    %v3077 = vld [vmem:[%s2981 + $0x2f8] sm:$0xff]
    %v3078 = vld [vmem:[%s2981 + $0x300] sm:$0xff]
    %v3079 = vld [vmem:[%s2981 + $0x308] sm:$0xff]
    %v3080 = vld [vmem:[%s2981 + $0x310] sm:$0xff]
    %v3081 = vld [vmem:[%s2981 + $0x318] sm:$0xff]
    %v3082 = vld [vmem:[%s2981 + $0x320] sm:$0xff]
    %v3083 = vld [vmem:[%s2981 + $0x328] sm:$0xff]
    %v3084 = vld [vmem:[%s2981 + $0x330] sm:$0xff]
    %v3085 = vld [vmem:[%s2981 + $0x338] sm:$0xff]
    %v3086 = vld [vmem:[%s2981 + $0x340] sm:$0xff]
    %v3087 = vld [vmem:[%s2981 + $0x348] sm:$0xff]
    %v3088 = vld [vmem:[%s2981 + $0x350] sm:$0xff]
    %v3089 = vld [vmem:[%s2981 + $0x358] sm:$0xff]
    %v3090 = vld [vmem:[%s2981 + $0x360] sm:$0xff]
    %v3091 = vld [vmem:[%s2981 + $0x368] sm:$0xff]
    %v3092 = vld [vmem:[%s2981 + $0x370] sm:$0xff]
    %v3093 = vld [vmem:[%s2981 + $0x378] sm:$0xff]
    %v3094 = vld [vmem:[%s2981 + $0x380] sm:$0xff]
    %v3095 = vld [vmem:[%s2981 + $0x388] sm:$0xff]
    %v3096 = vld [vmem:[%s2981 + $0x390] sm:$0xff]
    %v3097 = vld [vmem:[%s2981 + $0x398] sm:$0xff]
    %v3098 = vld [vmem:[%s2981 + $0x3a0] sm:$0xff]
    %v3099 = vld [vmem:[%s2981 + $0x3a8] sm:$0xff]
    %v3100 = vld [vmem:[%s2981 + $0x3b0] sm:$0xff]
    %v3101 = vld [vmem:[%s2981 + $0x3b8] sm:$0xff]
    %v3102 = vld [vmem:[%s2981 + $0x3c0] sm:$0xff]
    %v3103 = vld [vmem:[%s2981 + $0x3c8] sm:$0xff]
    %v3104 = vld [vmem:[%s2981 + $0x3d0] sm:$0xff]
    %v3105 = vld [vmem:[%s2981 + $0x3d8] sm:$0xff]
    %v3106 = vld [vmem:[%s2981 + $0x3e0] sm:$0xff]
    %v3107 = vld [vmem:[%s2981 + $0x3e8] sm:$0xff]
    %v3108 = vld [vmem:[%s2981 + $0x3f0] sm:$0xff]
    %v3109 = vld [vmem:[%s2981 + $0x3f8] sm:$0xff]
    %s3110 = scalar_lea.vmem [#allocation7], 12
    %v3111 = vld [vmem:[%s3110] sm:$0xf]
    %v3113 = vlaneseq
    %v3114 = vshrl.u32 %v3113, 7
    %v3115 = vsub.s32 0, %v3114
    %v3116 = vrot.slane %v3111, %v3115
    %v3117 = vlaneseq
    %v3118 = vshrl.u32 %v3117, 7
    %v3119 = vsub.s32 1, %v3118
    %v3120 = vrot.slane %v3111, %v3119
    %v3121 = vlaneseq
    %v3122 = vshrl.u32 %v3121, 7
    %v3123 = vsub.s32 2, %v3122
    %v3124 = vrot.slane %v3111, %v3123
    %v3125 = vlaneseq
    %v3126 = vshrl.u32 %v3125, 7
    %v3127 = vsub.s32 3, %v3126
    %v3128 = vrot.slane %v3111, %v3127
    %v3261 = vunpack.c.l.b16 %v2982
    %v3262 = vunpack.c.h.b16 %v2982
    %v3263 = vunpack.c.l.b16 %v2983
    %v3264 = vunpack.c.h.b16 %v2983
    %v3265 = vunpack.c.l.b16 %v2984
    %v3266 = vunpack.c.h.b16 %v2984
    %v3267 = vunpack.c.l.b16 %v2985
    %v3268 = vunpack.c.h.b16 %v2985
    %v3269 = vunpack.c.l.b16 %v2986
    %v3270 = vunpack.c.h.b16 %v2986
    %v3271 = vunpack.c.l.b16 %v2987
    %v3272 = vunpack.c.h.b16 %v2987
    %v3273 = vunpack.c.l.b16 %v2988
    %v3274 = vunpack.c.h.b16 %v2988
    %v3275 = vunpack.c.l.b16 %v2989
    %v3276 = vunpack.c.h.b16 %v2989
    %v3277 = vunpack.c.l.b16 %v2990
    %v3278 = vunpack.c.h.b16 %v2990
    %v3279 = vunpack.c.l.b16 %v2991
    %v3280 = vunpack.c.h.b16 %v2991
    %v3281 = vunpack.c.l.b16 %v2992
    %v3282 = vunpack.c.h.b16 %v2992
    %v3283 = vunpack.c.l.b16 %v2993
    %v3284 = vunpack.c.h.b16 %v2993
    %v3285 = vunpack.c.l.b16 %v2994
    %v3286 = vunpack.c.h.b16 %v2994
    %v3287 = vunpack.c.l.b16 %v2995
    %v3288 = vunpack.c.h.b16 %v2995
    %v3289 = vunpack.c.l.b16 %v2996
    %v3290 = vunpack.c.h.b16 %v2996
    %v3291 = vunpack.c.l.b16 %v2997
    %v3292 = vunpack.c.h.b16 %v2997
    %v3293 = vunpack.c.l.b16 %v2998
    %v3294 = vunpack.c.h.b16 %v2998
    %v3295 = vunpack.c.l.b16 %v2999
    %v3296 = vunpack.c.h.b16 %v2999
    %v3297 = vunpack.c.l.b16 %v3000
    %v3298 = vunpack.c.h.b16 %v3000
    %v3299 = vunpack.c.l.b16 %v3001
    %v3300 = vunpack.c.h.b16 %v3001
    %v3301 = vunpack.c.l.b16 %v3002
    %v3302 = vunpack.c.h.b16 %v3002
    %v3303 = vunpack.c.l.b16 %v3003
    %v3304 = vunpack.c.h.b16 %v3003
    %v3305 = vunpack.c.l.b16 %v3004
    %v3306 = vunpack.c.h.b16 %v3004
    %v3307 = vunpack.c.l.b16 %v3005
    %v3308 = vunpack.c.h.b16 %v3005
    %v3309 = vunpack.c.l.b16 %v3006
    %v3310 = vunpack.c.h.b16 %v3006
    %v3311 = vunpack.c.l.b16 %v3007
    %v3312 = vunpack.c.h.b16 %v3007
    %v3313 = vunpack.c.l.b16 %v3008
    %v3314 = vunpack.c.h.b16 %v3008
    %v3315 = vunpack.c.l.b16 %v3009
    %v3316 = vunpack.c.h.b16 %v3009
    %v3317 = vunpack.c.l.b16 %v3010
    %v3318 = vunpack.c.h.b16 %v3010
    %v3319 = vunpack.c.l.b16 %v3011
    %v3320 = vunpack.c.h.b16 %v3011
    %v3321 = vunpack.c.l.b16 %v3012
    %v3322 = vunpack.c.h.b16 %v3012
    %v3323 = vunpack.c.l.b16 %v3013
    %v3324 = vunpack.c.h.b16 %v3013
    %v3325 = vunpack.c.l.b16 %v3014
    %v3326 = vunpack.c.h.b16 %v3014
    %v3327 = vunpack.c.l.b16 %v3015
    %v3328 = vunpack.c.h.b16 %v3015
    %v3329 = vunpack.c.l.b16 %v3016
    %v3330 = vunpack.c.h.b16 %v3016
    %v3331 = vunpack.c.l.b16 %v3017
    %v3332 = vunpack.c.h.b16 %v3017
    %v3333 = vunpack.c.l.b16 %v3018
    %v3334 = vunpack.c.h.b16 %v3018
    %v3335 = vunpack.c.l.b16 %v3019
    %v3336 = vunpack.c.h.b16 %v3019
    %v3337 = vunpack.c.l.b16 %v3020
    %v3338 = vunpack.c.h.b16 %v3020
    %v3339 = vunpack.c.l.b16 %v3021
    %v3340 = vunpack.c.h.b16 %v3021
    %v3341 = vunpack.c.l.b16 %v3022
    %v3342 = vunpack.c.h.b16 %v3022
    %v3343 = vunpack.c.l.b16 %v3023
    %v3344 = vunpack.c.h.b16 %v3023
    %v3345 = vunpack.c.l.b16 %v3024
    %v3346 = vunpack.c.h.b16 %v3024
    %v3347 = vunpack.c.l.b16 %v3025
    %v3348 = vunpack.c.h.b16 %v3025
    %v3349 = vunpack.c.l.b16 %v3026
    %v3350 = vunpack.c.h.b16 %v3026
    %v3351 = vunpack.c.l.b16 %v3027
    %v3352 = vunpack.c.h.b16 %v3027
    %v3353 = vunpack.c.l.b16 %v3028
    %v3354 = vunpack.c.h.b16 %v3028
    %v3355 = vunpack.c.l.b16 %v3029
    %v3356 = vunpack.c.h.b16 %v3029
    %v3357 = vunpack.c.l.b16 %v3030
    %v3358 = vunpack.c.h.b16 %v3030
    %v3359 = vunpack.c.l.b16 %v3031
    %v3360 = vunpack.c.h.b16 %v3031
    %v3361 = vunpack.c.l.b16 %v3032
    %v3362 = vunpack.c.h.b16 %v3032
    %v3363 = vunpack.c.l.b16 %v3033
    %v3364 = vunpack.c.h.b16 %v3033
    %v3365 = vunpack.c.l.b16 %v3034
    %v3366 = vunpack.c.h.b16 %v3034
    %v3367 = vunpack.c.l.b16 %v3035
    %v3368 = vunpack.c.h.b16 %v3035
    %v3369 = vunpack.c.l.b16 %v3036
    %v3370 = vunpack.c.h.b16 %v3036
    %v3371 = vunpack.c.l.b16 %v3037
    %v3372 = vunpack.c.h.b16 %v3037
    %v3373 = vunpack.c.l.b16 %v3038
    %v3374 = vunpack.c.h.b16 %v3038
    %v3375 = vunpack.c.l.b16 %v3039
    %v3376 = vunpack.c.h.b16 %v3039
    %v3377 = vunpack.c.l.b16 %v3040
    %v3378 = vunpack.c.h.b16 %v3040
    %v3379 = vunpack.c.l.b16 %v3041
    %v3380 = vunpack.c.h.b16 %v3041
    %v3381 = vunpack.c.l.b16 %v3042
    %v3382 = vunpack.c.h.b16 %v3042
    %v3383 = vunpack.c.l.b16 %v3043
    %v3384 = vunpack.c.h.b16 %v3043
    %v3385 = vunpack.c.l.b16 %v3044
    %v3386 = vunpack.c.h.b16 %v3044
    %v3387 = vunpack.c.l.b16 %v3045
    %v3388 = vunpack.c.h.b16 %v3045
    %v3389 = vunpack.c.l.b16 %v3046
    %v3390 = vunpack.c.h.b16 %v3046
    %v3391 = vunpack.c.l.b16 %v3047
    %v3392 = vunpack.c.h.b16 %v3047
    %v3393 = vunpack.c.l.b16 %v3048
    %v3394 = vunpack.c.h.b16 %v3048
    %v3395 = vunpack.c.l.b16 %v3049
    %v3396 = vunpack.c.h.b16 %v3049
    %v3397 = vunpack.c.l.b16 %v3050
    %v3398 = vunpack.c.h.b16 %v3050
    %v3399 = vunpack.c.l.b16 %v3051
    %v3400 = vunpack.c.h.b16 %v3051
    %v3401 = vunpack.c.l.b16 %v3052
    %v3402 = vunpack.c.h.b16 %v3052
    %v3403 = vunpack.c.l.b16 %v3053
    %v3404 = vunpack.c.h.b16 %v3053
    %v3405 = vunpack.c.l.b16 %v3054
    %v3406 = vunpack.c.h.b16 %v3054
    %v3407 = vunpack.c.l.b16 %v3055
    %v3408 = vunpack.c.h.b16 %v3055
    %v3409 = vunpack.c.l.b16 %v3056
    %v3410 = vunpack.c.h.b16 %v3056
    %v3411 = vunpack.c.l.b16 %v3057
    %v3412 = vunpack.c.h.b16 %v3057
    %v3413 = vunpack.c.l.b16 %v3058
    %v3414 = vunpack.c.h.b16 %v3058
    %v3415 = vunpack.c.l.b16 %v3059
    %v3416 = vunpack.c.h.b16 %v3059
    %v3417 = vunpack.c.l.b16 %v3060
    %v3418 = vunpack.c.h.b16 %v3060
    %v3419 = vunpack.c.l.b16 %v3061
    %v3420 = vunpack.c.h.b16 %v3061
    %v3421 = vunpack.c.l.b16 %v3062
    %v3422 = vunpack.c.h.b16 %v3062
    %v3423 = vunpack.c.l.b16 %v3063
    %v3424 = vunpack.c.h.b16 %v3063
    %v3425 = vunpack.c.l.b16 %v3064
    %v3426 = vunpack.c.h.b16 %v3064
    %v3427 = vunpack.c.l.b16 %v3065
    %v3428 = vunpack.c.h.b16 %v3065
    %v3429 = vunpack.c.l.b16 %v3066
    %v3430 = vunpack.c.h.b16 %v3066
    %v3431 = vunpack.c.l.b16 %v3067
    %v3432 = vunpack.c.h.b16 %v3067
    %v3433 = vunpack.c.l.b16 %v3068
    %v3434 = vunpack.c.h.b16 %v3068
    %v3435 = vunpack.c.l.b16 %v3069
    %v3436 = vunpack.c.h.b16 %v3069
    %v3437 = vunpack.c.l.b16 %v3070
    %v3438 = vunpack.c.h.b16 %v3070
    %v3439 = vunpack.c.l.b16 %v3071
    %v3440 = vunpack.c.h.b16 %v3071
    %v3441 = vunpack.c.l.b16 %v3072
    %v3442 = vunpack.c.h.b16 %v3072
    %v3443 = vunpack.c.l.b16 %v3073
    %v3444 = vunpack.c.h.b16 %v3073
    %v3445 = vunpack.c.l.b16 %v3074
    %v3446 = vunpack.c.h.b16 %v3074
    %v3447 = vunpack.c.l.b16 %v3075
    %v3448 = vunpack.c.h.b16 %v3075
    %v3449 = vunpack.c.l.b16 %v3076
    %v3450 = vunpack.c.h.b16 %v3076
    %v3451 = vunpack.c.l.b16 %v3077
    %v3452 = vunpack.c.h.b16 %v3077
    %v3453 = vunpack.c.l.b16 %v3078
    %v3454 = vunpack.c.h.b16 %v3078
    %v3455 = vunpack.c.l.b16 %v3079
    %v3456 = vunpack.c.h.b16 %v3079
    %v3457 = vunpack.c.l.b16 %v3080
    %v3458 = vunpack.c.h.b16 %v3080
    %v3459 = vunpack.c.l.b16 %v3081
    %v3460 = vunpack.c.h.b16 %v3081
    %v3461 = vunpack.c.l.b16 %v3082
    %v3462 = vunpack.c.h.b16 %v3082
    %v3463 = vunpack.c.l.b16 %v3083
    %v3464 = vunpack.c.h.b16 %v3083
    %v3465 = vunpack.c.l.b16 %v3084
    %v3466 = vunpack.c.h.b16 %v3084
    %v3467 = vunpack.c.l.b16 %v3085
    %v3468 = vunpack.c.h.b16 %v3085
    %v3469 = vunpack.c.l.b16 %v3086
    %v3470 = vunpack.c.h.b16 %v3086
    %v3471 = vunpack.c.l.b16 %v3087
    %v3472 = vunpack.c.h.b16 %v3087
    %v3473 = vunpack.c.l.b16 %v3088
    %v3474 = vunpack.c.h.b16 %v3088
    %v3475 = vunpack.c.l.b16 %v3089
    %v3476 = vunpack.c.h.b16 %v3089
    %v3477 = vunpack.c.l.b16 %v3090
    %v3478 = vunpack.c.h.b16 %v3090
    %v3479 = vunpack.c.l.b16 %v3091
    %v3480 = vunpack.c.h.b16 %v3091
    %v3481 = vunpack.c.l.b16 %v3092
    %v3482 = vunpack.c.h.b16 %v3092
    %v3483 = vunpack.c.l.b16 %v3093
    %v3484 = vunpack.c.h.b16 %v3093
    %v3485 = vunpack.c.l.b16 %v3094
    %v3486 = vunpack.c.h.b16 %v3094
    %v3487 = vunpack.c.l.b16 %v3095
    %v3488 = vunpack.c.h.b16 %v3095
    %v3489 = vunpack.c.l.b16 %v3096
    %v3490 = vunpack.c.h.b16 %v3096
    %v3491 = vunpack.c.l.b16 %v3097
    %v3492 = vunpack.c.h.b16 %v3097
    %v3493 = vunpack.c.l.b16 %v3098
    %v3494 = vunpack.c.h.b16 %v3098
    %v3495 = vunpack.c.l.b16 %v3099
    %v3496 = vunpack.c.h.b16 %v3099
    %v3497 = vunpack.c.l.b16 %v3100
    %v3498 = vunpack.c.h.b16 %v3100
    %v3499 = vunpack.c.l.b16 %v3101
    %v3500 = vunpack.c.h.b16 %v3101
    %v3501 = vunpack.c.l.b16 %v3102
    %v3502 = vunpack.c.h.b16 %v3102
    %v3503 = vunpack.c.l.b16 %v3103
    %v3504 = vunpack.c.h.b16 %v3103
    %v3505 = vunpack.c.l.b16 %v3104
    %v3506 = vunpack.c.h.b16 %v3104
    %v3507 = vunpack.c.l.b16 %v3105
    %v3508 = vunpack.c.h.b16 %v3105
    %v3509 = vunpack.c.l.b16 %v3106
    %v3510 = vunpack.c.h.b16 %v3106
    %v3511 = vunpack.c.l.b16 %v3107
    %v3512 = vunpack.c.h.b16 %v3107
    %v3513 = vunpack.c.l.b16 %v3108
    %v3514 = vunpack.c.h.b16 %v3108
    %v3515 = vunpack.c.l.b16 %v3109
    %v3516 = vunpack.c.h.b16 %v3109
    %v3517 = vpack.c.b16 %v3265, %v3261
    %v3518 = vpack.c.b16 %v3266, %v3262
    %v3519 = vpack.c.b16 %v3267, %v3263
    %v3520 = vpack.c.b16 %v3268, %v3264
    %v3521 = vpack.c.b16 %v3273, %v3269
    %v3522 = vpack.c.b16 %v3274, %v3270
    %v3523 = vpack.c.b16 %v3275, %v3271
    %v3524 = vpack.c.b16 %v3276, %v3272
    %v3525 = vpack.c.b16 %v3281, %v3277
    %v3526 = vpack.c.b16 %v3282, %v3278
    %v3527 = vpack.c.b16 %v3283, %v3279
    %v3528 = vpack.c.b16 %v3284, %v3280
    %v3529 = vpack.c.b16 %v3289, %v3285
    %v3530 = vpack.c.b16 %v3290, %v3286
    %v3531 = vpack.c.b16 %v3291, %v3287
    %v3532 = vpack.c.b16 %v3292, %v3288
    %v3533 = vpack.c.b16 %v3297, %v3293
    %v3534 = vpack.c.b16 %v3298, %v3294
    %v3535 = vpack.c.b16 %v3299, %v3295
    %v3536 = vpack.c.b16 %v3300, %v3296
    %v3537 = vpack.c.b16 %v3305, %v3301
    %v3538 = vpack.c.b16 %v3306, %v3302
    %v3539 = vpack.c.b16 %v3307, %v3303
    %v3540 = vpack.c.b16 %v3308, %v3304
    %v3541 = vpack.c.b16 %v3313, %v3309
    %v3542 = vpack.c.b16 %v3314, %v3310
    %v3543 = vpack.c.b16 %v3315, %v3311
    %v3544 = vpack.c.b16 %v3316, %v3312
    %v3545 = vpack.c.b16 %v3321, %v3317
    %v3546 = vpack.c.b16 %v3322, %v3318
    %v3547 = vpack.c.b16 %v3323, %v3319
    %v3548 = vpack.c.b16 %v3324, %v3320
    %v3549 = vpack.c.b16 %v3329, %v3325
    %v3550 = vpack.c.b16 %v3330, %v3326
    %v3551 = vpack.c.b16 %v3331, %v3327
    %v3552 = vpack.c.b16 %v3332, %v3328
    %v3553 = vpack.c.b16 %v3337, %v3333
    %v3554 = vpack.c.b16 %v3338, %v3334
    %v3555 = vpack.c.b16 %v3339, %v3335
    %v3556 = vpack.c.b16 %v3340, %v3336
    %v3557 = vpack.c.b16 %v3345, %v3341
    %v3558 = vpack.c.b16 %v3346, %v3342
    %v3559 = vpack.c.b16 %v3347, %v3343
    %v3560 = vpack.c.b16 %v3348, %v3344
    %v3561 = vpack.c.b16 %v3353, %v3349
    %v3562 = vpack.c.b16 %v3354, %v3350
    %v3563 = vpack.c.b16 %v3355, %v3351
    %v3564 = vpack.c.b16 %v3356, %v3352
    %v3565 = vpack.c.b16 %v3361, %v3357
    %v3566 = vpack.c.b16 %v3362, %v3358
    %v3567 = vpack.c.b16 %v3363, %v3359
    %v3568 = vpack.c.b16 %v3364, %v3360
    %v3569 = vpack.c.b16 %v3369, %v3365
    %v3570 = vpack.c.b16 %v3370, %v3366
    %v3571 = vpack.c.b16 %v3371, %v3367
    %v3572 = vpack.c.b16 %v3372, %v3368
    %v3573 = vpack.c.b16 %v3377, %v3373
    %v3574 = vpack.c.b16 %v3378, %v3374
    %v3575 = vpack.c.b16 %v3379, %v3375
    %v3576 = vpack.c.b16 %v3380, %v3376
    %v3577 = vpack.c.b16 %v3385, %v3381
    %v3578 = vpack.c.b16 %v3386, %v3382
    %v3579 = vpack.c.b16 %v3387, %v3383
    %v3580 = vpack.c.b16 %v3388, %v3384
    %v3581 = vpack.c.b16 %v3393, %v3389
    %v3582 = vpack.c.b16 %v3394, %v3390
    %v3583 = vpack.c.b16 %v3395, %v3391
    %v3584 = vpack.c.b16 %v3396, %v3392
    %v3585 = vpack.c.b16 %v3401, %v3397
    %v3586 = vpack.c.b16 %v3402, %v3398
    %v3587 = vpack.c.b16 %v3403, %v3399
    %v3588 = vpack.c.b16 %v3404, %v3400
    %v3589 = vpack.c.b16 %v3409, %v3405
    %v3590 = vpack.c.b16 %v3410, %v3406
    %v3591 = vpack.c.b16 %v3411, %v3407
    %v3592 = vpack.c.b16 %v3412, %v3408
    %v3593 = vpack.c.b16 %v3417, %v3413
    %v3594 = vpack.c.b16 %v3418, %v3414
    %v3595 = vpack.c.b16 %v3419, %v3415
    %v3596 = vpack.c.b16 %v3420, %v3416
    %v3597 = vpack.c.b16 %v3425, %v3421
    %v3598 = vpack.c.b16 %v3426, %v3422
    %v3599 = vpack.c.b16 %v3427, %v3423
    %v3600 = vpack.c.b16 %v3428, %v3424
    %v3601 = vpack.c.b16 %v3433, %v3429
    %v3602 = vpack.c.b16 %v3434, %v3430
    %v3603 = vpack.c.b16 %v3435, %v3431
    %v3604 = vpack.c.b16 %v3436, %v3432
    %v3605 = vpack.c.b16 %v3441, %v3437
    %v3606 = vpack.c.b16 %v3442, %v3438
    %v3607 = vpack.c.b16 %v3443, %v3439
    %v3608 = vpack.c.b16 %v3444, %v3440
    %v3609 = vpack.c.b16 %v3449, %v3445
    %v3610 = vpack.c.b16 %v3450, %v3446
    %v3611 = vpack.c.b16 %v3451, %v3447
    %v3612 = vpack.c.b16 %v3452, %v3448
    %v3613 = vpack.c.b16 %v3457, %v3453
    %v3614 = vpack.c.b16 %v3458, %v3454
    %v3615 = vpack.c.b16 %v3459, %v3455
    %v3616 = vpack.c.b16 %v3460, %v3456
    %v3617 = vpack.c.b16 %v3465, %v3461
    %v3618 = vpack.c.b16 %v3466, %v3462
    %v3619 = vpack.c.b16 %v3467, %v3463
    %v3620 = vpack.c.b16 %v3468, %v3464
    %v3621 = vpack.c.b16 %v3473, %v3469
    %v3622 = vpack.c.b16 %v3474, %v3470
    %v3623 = vpack.c.b16 %v3475, %v3471
    %v3624 = vpack.c.b16 %v3476, %v3472
    %v3625 = vpack.c.b16 %v3481, %v3477
    %v3626 = vpack.c.b16 %v3482, %v3478
    %v3627 = vpack.c.b16 %v3483, %v3479
    %v3628 = vpack.c.b16 %v3484, %v3480
    %v3629 = vpack.c.b16 %v3489, %v3485
    %v3630 = vpack.c.b16 %v3490, %v3486
    %v3631 = vpack.c.b16 %v3491, %v3487
    %v3632 = vpack.c.b16 %v3492, %v3488
    %v3633 = vpack.c.b16 %v3497, %v3493
    %v3634 = vpack.c.b16 %v3498, %v3494
    %v3635 = vpack.c.b16 %v3499, %v3495
    %v3636 = vpack.c.b16 %v3500, %v3496
    %v3637 = vpack.c.b16 %v3505, %v3501
    %v3638 = vpack.c.b16 %v3506, %v3502
    %v3639 = vpack.c.b16 %v3507, %v3503
    %v3640 = vpack.c.b16 %v3508, %v3504
    %v3641 = vpack.c.b16 %v3513, %v3509
    %v3642 = vpack.c.b16 %v3514, %v3510
    %v3643 = vpack.c.b16 %v3515, %v3511
    %v3644 = vpack.c.b16 %v3516, %v3512
    %3773 = vmatprep.subr.bf16.mxu0 %v3518
    %3774 = vmatpush1.bf16.msra.mxu0 %v3517
    %3775 = vmatprep.subr.bf16.mxu0 %v3522
    %3776 = vmatpush1.bf16.msra.mxu0 %v3521
    %3777 = vmatprep.subr.bf16.mxu0 %v3526
    %3778 = vmatpush1.bf16.msra.mxu0 %v3525
    %3779 = vmatprep.subr.bf16.mxu0 %v3530
    %3780 = vmatpush1.bf16.msra.mxu0 %v3529
    %3781 = vmatprep.subr.bf16.mxu0 %v3534
    %3782 = vmatpush1.bf16.msra.mxu0 %v3533
    %3783 = vmatprep.subr.bf16.mxu0 %v3538
    %3784 = vmatpush1.bf16.msra.mxu0 %v3537
    %3785 = vmatprep.subr.bf16.mxu0 %v3542
    %3786 = vmatpush1.bf16.msra.mxu0 %v3541
    %3787 = vmatprep.subr.bf16.mxu0 %v3546
    %3788 = vmatpush1.bf16.msra.mxu0 %v3545
    %3789 = vmatprep.subr.bf16.mxu0 %v3550
    %3790 = vmatpush1.bf16.msra.mxu0 %v3549
    %3791 = vmatprep.subr.bf16.mxu0 %v3554
    %3792 = vmatpush1.bf16.msra.mxu0 %v3553
    %3793 = vmatprep.subr.bf16.mxu0 %v3558
    %3794 = vmatpush1.bf16.msra.mxu0 %v3557
    %3795 = vmatprep.subr.bf16.mxu0 %v3562
    %3796 = vmatpush1.bf16.msra.mxu0 %v3561
    %3797 = vmatprep.subr.bf16.mxu0 %v3566
    %3798 = vmatpush1.bf16.msra.mxu0 %v3565
    %3799 = vmatprep.subr.bf16.mxu0 %v3570
    %3800 = vmatpush1.bf16.msra.mxu0 %v3569
    %3801 = vmatprep.subr.bf16.mxu0 %v3574
    %3802 = vmatpush1.bf16.msra.mxu0 %v3573
    %3803 = vmatprep.subr.bf16.mxu0 %v3578
    %3804 = vmatpush1.bf16.msra.mxu0 %v3577
    %3805 = vmatprep.mubr.bf16.mxu0 %v2978
    %3806 = vmatmul.mubr.bf16.gmra.mrb[0].mxu0 %v2977
    %v3807 = vpop.f32.mrb[0].mxu0
    %v3808 = vadd.f32 %v3116, %v3807
    %v3809 = vpop.f32.mrb[0].mxu0
    %v3810 = vadd.f32 %v3120, %v3809
    %v3811 = vpop.f32.mrb[0].mxu0
    %v3812 = vpop.f32.mrb[0].mxu0
    %3813 = vdwg.mxu0
    %3814 = vmatprep.subr.bf16.mxu0 %v3582
    %3815 = vmatpush1.bf16.msra.mxu0 %v3581
    %3816 = vmatprep.subr.bf16.mxu0 %v3586
    %3817 = vmatpush1.bf16.msra.mxu0 %v3585
    %3818 = vmatprep.subr.bf16.mxu0 %v3590
    %3819 = vmatpush1.bf16.msra.mxu0 %v3589
    %3820 = vmatprep.subr.bf16.mxu0 %v3594
    %3821 = vmatpush1.bf16.msra.mxu0 %v3593
    %3822 = vmatprep.subr.bf16.mxu0 %v3598
    %3823 = vmatpush1.bf16.msra.mxu0 %v3597
    %3824 = vmatprep.subr.bf16.mxu0 %v3602
    %3825 = vmatpush1.bf16.msra.mxu0 %v3601
    %3826 = vmatprep.subr.bf16.mxu0 %v3606
    %3827 = vmatpush1.bf16.msra.mxu0 %v3605
    %3828 = vmatprep.subr.bf16.mxu0 %v3610
    %3829 = vmatpush1.bf16.msra.mxu0 %v3609
    %3830 = vmatprep.subr.bf16.mxu0 %v3614
    %3831 = vmatpush1.bf16.msra.mxu0 %v3613
    %3832 = vmatprep.subr.bf16.mxu0 %v3618
    %3833 = vmatpush1.bf16.msra.mxu0 %v3617
    %3834 = vmatprep.subr.bf16.mxu0 %v3622
    %3835 = vmatpush1.bf16.msra.mxu0 %v3621
    %3836 = vmatprep.subr.bf16.mxu0 %v3626
    %3837 = vmatpush1.bf16.msra.mxu0 %v3625
    %3838 = vmatprep.subr.bf16.mxu0 %v3630
    %3839 = vmatpush1.bf16.msra.mxu0 %v3629
    %3840 = vmatprep.subr.bf16.mxu0 %v3634
    %3841 = vmatpush1.bf16.msra.mxu0 %v3633
    %3842 = vmatprep.subr.bf16.mxu0 %v3638
    %3843 = vmatpush1.bf16.msra.mxu0 %v3637
    %3844 = vmatprep.subr.bf16.mxu0 %v3642
    %3845 = vmatpush1.bf16.msra.mxu0 %v3641
    %3846 = vmatprep.mubr.bf16.mxu0 %v2980
    %3847 = vmatmul.mubr.bf16.gmra.mrb[0].mxu0 %v2979
    %v3848 = vpop.f32.mrb[0].mxu0
    %v3849 = vadd.f32 %v3808, %v3848
    %v3850 = vpop.f32.mrb[0].mxu0
    %v3851 = vadd.f32 %v3810, %v3850
    %v3852 = vpop.f32.mrb[0].mxu0
    %v3853 = vpop.f32.mrb[0].mxu0
    %3854 = vdwg.mxu0
    %3855 = vmatprep.subr.bf16.mxu0 %v3520
    %3856 = vmatpush1.bf16.msra.mxu0 %v3519
    %3857 = vmatprep.subr.bf16.mxu0 %v3524
    %3858 = vmatpush1.bf16.msra.mxu0 %v3523
    %3859 = vmatprep.subr.bf16.mxu0 %v3528
    %3860 = vmatpush1.bf16.msra.mxu0 %v3527
    %3861 = vmatprep.subr.bf16.mxu0 %v3532
    %3862 = vmatpush1.bf16.msra.mxu0 %v3531
    %3863 = vmatprep.subr.bf16.mxu0 %v3536
    %3864 = vmatpush1.bf16.msra.mxu0 %v3535
    %3865 = vmatprep.subr.bf16.mxu0 %v3540
    %3866 = vmatpush1.bf16.msra.mxu0 %v3539
    %3867 = vmatprep.subr.bf16.mxu0 %v3544
    %3868 = vmatpush1.bf16.msra.mxu0 %v3543
    %3869 = vmatprep.subr.bf16.mxu0 %v3548
    %3870 = vmatpush1.bf16.msra.mxu0 %v3547
    %3871 = vmatprep.subr.bf16.mxu0 %v3552
    %3872 = vmatpush1.bf16.msra.mxu0 %v3551
    %3873 = vmatprep.subr.bf16.mxu0 %v3556
    %3874 = vmatpush1.bf16.msra.mxu0 %v3555
    %3875 = vmatprep.subr.bf16.mxu0 %v3560
    %3876 = vmatpush1.bf16.msra.mxu0 %v3559
    %3877 = vmatprep.subr.bf16.mxu0 %v3564
    %3878 = vmatpush1.bf16.msra.mxu0 %v3563
    %3879 = vmatprep.subr.bf16.mxu0 %v3568
    %3880 = vmatpush1.bf16.msra.mxu0 %v3567
    %3881 = vmatprep.subr.bf16.mxu0 %v3572
    %3882 = vmatpush1.bf16.msra.mxu0 %v3571
    %3883 = vmatprep.subr.bf16.mxu0 %v3576
    %3884 = vmatpush1.bf16.msra.mxu0 %v3575
    %3885 = vmatprep.subr.bf16.mxu0 %v3580
    %3886 = vmatpush1.bf16.msra.mxu0 %v3579
    %3887 = vmatprep.mubr.bf16.mxu0 %v2978
    %3888 = vmatmul.mubr.bf16.gmra.mrb[0].mxu0 %v2977
    %v3889 = vpop.f32.mrb[0].mxu0
    %v3890 = vadd.f32 %v3124, %v3889
    %v3891 = vpop.f32.mrb[0].mxu0
    %v3892 = vadd.f32 %v3128, %v3891
    %v3893 = vpop.f32.mrb[0].mxu0
    %v3894 = vpop.f32.mrb[0].mxu0
    %3895 = vdwg.mxu0
    %3896 = vmatprep.subr.bf16.mxu0 %v3584
    %3897 = vmatpush1.bf16.msra.mxu0 %v3583
    %3898 = vmatprep.subr.bf16.mxu0 %v3588
    %3899 = vmatpush1.bf16.msra.mxu0 %v3587
    %3900 = vmatprep.subr.bf16.mxu0 %v3592
    %3901 = vmatpush1.bf16.msra.mxu0 %v3591
    %3902 = vmatprep.subr.bf16.mxu0 %v3596
    %3903 = vmatpush1.bf16.msra.mxu0 %v3595
    %3904 = vmatprep.subr.bf16.mxu0 %v3600
    %3905 = vmatpush1.bf16.msra.mxu0 %v3599
    %3906 = vmatprep.subr.bf16.mxu0 %v3604
    %3907 = vmatpush1.bf16.msra.mxu0 %v3603
    %3908 = vmatprep.subr.bf16.mxu0 %v3608
    %3909 = vmatpush1.bf16.msra.mxu0 %v3607
    %3910 = vmatprep.subr.bf16.mxu0 %v3612
    %3911 = vmatpush1.bf16.msra.mxu0 %v3611
    %3912 = vmatprep.subr.bf16.mxu0 %v3616
    %3913 = vmatpush1.bf16.msra.mxu0 %v3615
    %3914 = vmatprep.subr.bf16.mxu0 %v3620
    %3915 = vmatpush1.bf16.msra.mxu0 %v3619
    %3916 = vmatprep.subr.bf16.mxu0 %v3624
    %3917 = vmatpush1.bf16.msra.mxu0 %v3623
    %3918 = vmatprep.subr.bf16.mxu0 %v3628
    %3919 = vmatpush1.bf16.msra.mxu0 %v3627
    %3920 = vmatprep.subr.bf16.mxu0 %v3632
    %3921 = vmatpush1.bf16.msra.mxu0 %v3631
    %3922 = vmatprep.subr.bf16.mxu0 %v3636
    %3923 = vmatpush1.bf16.msra.mxu0 %v3635
    %3924 = vmatprep.subr.bf16.mxu0 %v3640
    %3925 = vmatpush1.bf16.msra.mxu0 %v3639
    %3926 = vmatprep.subr.bf16.mxu0 %v3644
    %3927 = vmatpush1.bf16.msra.mxu0 %v3643
    %3928 = vmatprep.mubr.bf16.mxu0 %v2980
    %3929 = vmatmul.mubr.bf16.gmra.mrb[0].mxu0 %v2979
    %v3930 = vpop.f32.mrb[0].mxu0
    %v3931 = vadd.f32 %v3890, %v3930
    %v3932 = vpop.f32.mrb[0].mxu0
    %v3933 = vadd.f32 %v3892, %v3932
    %v3934 = vpop.f32.mrb[0].mxu0
    %v3935 = vpop.f32.mrb[0].mxu0
    %3936 = vdwg.mxu0
    %v3937 = vmul.f32 %v3849, 0.2
    %v3938 = vmul.f32 %v3851, 0.2
    %v3939 = vmul.f32 %v3931, 0.2
    %v3940 = vmul.f32 %v3933, 0.2
    %v3941 = vmax.f32 %v3849, %v3937
    %v3942 = vmax.f32 %v3851, %v3938
    %v3943 = vmax.f32 %v3931, %v3939
    %v3944 = vmax.f32 %v3933, %v3940
    %v3945 = vmul.f32 %v3941, 1.4142135
    %v3946 = vmul.f32 %v3942, 1.4142135
    %v3947 = vmul.f32 %v3943, 1.4142135
    %v3948 = vmul.f32 %v3944, 1.4142135
    %3949 = vst [vmem:[#allocation8] sm:$0xff] %v3945
    %3950 = vst [vmem:[#allocation8 + $0x8] sm:$0xff] %v3946
    %3951 = vst [vmem:[#allocation8 + $0x10] sm:$0xff] %v3947
    %3952 = vst [vmem:[#allocation8 + $0x18] sm:$0xff] %v3948
    // Predicated region
    $region26: #{tpu_custom_call.1} parent=1 // pred_check
      _
    $region27: #{tpu_custom_call.1} parent=1 // pred_check_branch
      %3954 = sbr.rel (0) target = $region29
    $region28: #{tpu_custom_call.1} parent=1 // pred_region
      %s3956 = ssub.s32 512, 512
      %3957 = vsyncadd [#allocation4], %s3956
      %s3959 = sshll.u32 [#allocation8], 4
      %s3960 = int_to_ptr.vmem [resolvable:$true] %s3959
      %3962 = dma.vmem_to_hbm [thread:$0]  %s3960, 512, %s3, [#allocation4]
    $region29: #{tpu_custom_call.1} parent=1 // pred_fallthru
      _
    // Predicated region
    $region30: #{tpu_custom_call.1} parent=1 // pred_check
      _
    $region31: #{tpu_custom_call.1} parent=1 // pred_check_branch
      %3964 = sbr.rel (0) target = $region33
    $region32: #{tpu_custom_call.1} parent=1 // pred_region
      %3965 = dma.done [#allocation4], 512
    $region33: #{tpu_custom_call.1} parent=1 // pred_fallthru
      _
    %3966 = vsyncpa [#allocation3], 1
    %3967 = vsyncpa [#allocation6], 1
    %3968 = vsyncpa [#allocation4], 1

</llo_original>
